<compile_context>
chip_gen: v7x
topology: tpu7x:2x2x1
jax: 0.10.0
libtpu: 0.0.40
codegen_flags: <defaults>
</compile_context>

<pallas_src>
import functools
import math

import numpy as np
import jax
import jax.numpy as jnp
from jax.experimental import pallas as pl
from jax.experimental.pallas import tpu as pltpu


_BIG = 1.0e30          # "+infinity" stand-in that stays finite in f32 math
_LANES = 128           # TPU vreg lane width
_SUBLANES = 8          # TPU vreg sublane count


def _round_up(x, m):
    return ((x + m - 1) // m) * m


def _vmem_capacity_bytes():
    """Per-core VMEM capacity; conservative default if the query fails."""
    try:
        return int(pltpu.get_tpu_info().vmem_capacity_bytes)
    except Exception:
        return 64 * 1024 * 1024        # v7x-sized (smallest) budget


def _dwsa_kernel(a_ref, bint_ref, out_ref, c_scr, d_scr, *,
                 N, N_pad, P, tile_la, L_a, threshold, gamma, unroll,
                 mask_tail):
    f32 = jnp.float32
    t = pl.program_id(1)

    thr = jnp.asarray(threshold, f32)
    gam = jnp.asarray(gamma, f32)
    inv_g = jnp.asarray(1.0 / gamma, f32)
    big = jnp.asarray(_BIG, f32)
    neg_big = jnp.asarray(-_BIG, f32)

    # Hoisted lane-index helpers (broadcast_in_dim is not CSE'd by JAX).
    col_c = jax.lax.broadcasted_iota(jnp.int32, (tile_la, N_pad), 1)
    valid_c = col_c < N
    is_even_c = (col_c % 2) == 0
    col_d = jax.lax.broadcasted_iota(jnp.int32, (P, N_pad), 1)
    is_even_d = (col_d % 2) == 0

    # ---- cost tile: one (tile_la, D) @ (D, N_pad) MXU matmul per packed pair
    # bint_ref[p] holds b_p[j] in column 2j+1 (pre-interleaved & pre-transposed
    # in the wrapper), even / padded columns are zero.
    for p in range(P):                                   # static, unrolled
        a_p = a_ref[p].astype(f32)                       # (tile_la, D)
        b_p = bint_ref[p].astype(f32)                    # (D, N_pad)
        raw = jax.lax.dot_general(a_p, b_p, (((1,), (0,)), ((), ())),
                                  preferred_element_type=f32)
        # odd col 2j+1 -> 1 - <a_i, b_j>, even col -> threshold, pad -> -BIG
        X = jnp.where(valid_c, jnp.where(is_even_c, thr, 1.0 - raw), neg_big)
        mx = jnp.max(X, axis=-1, keepdims=True)
        ex = jnp.exp(X - mx)
        # EUP reciprocal instead of a VALU divide (approx=True is a further
        # option once tolerance at gamma=0.01 is validated).
        C = ex * pl.reciprocal(jnp.sum(ex, axis=-1, keepdims=True))
        # padded lanes become "+inf" costs so they never win a softmin
        c_scr[p, :, :] = jnp.where(valid_c, C, big)

    # ---- prefix soft-min scan over lanes, all P pairs in the sublanes ------
    n_scan = max(1, int(math.ceil(math.log2(max(N, 2)))))

    def prefix_softmin(d_prev):                          # (P, N_pad)
        m_run = d_prev                                   # running prefix min
        s_run = jnp.ones_like(d_prev)                    # running sum exp(-(d-m)/g)
        shift = 1
        for _ in range(n_scan):
            m_sh = pltpu.roll(m_run, shift, axis=1)
            s_sh = pltpu.roll(s_run, shift, axis=1)
            ok = col_d >= shift
            m_sh = jnp.where(ok, m_sh, big)
            s_sh = jnp.where(ok, s_sh, 0.0)
            m_new = jnp.minimum(m_run, m_sh)
            m_max = jnp.maximum(m_run, m_sh)
            # single EUP exp per step: the winning side's factor is exp(0)=1
            e = jnp.exp((m_new - m_max) * inv_g)
            s_run = jnp.where(m_run <= m_sh,
                              s_run + s_sh * e,
                              s_run * e + s_sh)
            m_run = m_new
            shift *= 2
        # odd columns exclude column j itself -> use the prefix ending at j-1
        m_ex = pltpu.roll(m_run, 1, axis=1)
        s_ex = pltpu.roll(s_run, 1, axis=1)
        m_f = jnp.where(is_even_d, m_run, m_ex)
        s_f = jnp.where(is_even_d, s_run, s_ex)
        return m_f - gam * jnp.log(s_f)

    def cost_row(i):
        # Gather row i of every packed pair into one (P, N_pad) tile
        # (P single-sublane loads + concat; hidden under the serial scan).
        rows = [c_scr[p, pl.ds(i, 1), :] for p in range(P)]
        return jnp.concatenate(rows, axis=0) if P > 1 else rows[0]

    def dp_step(i, d):
        d_new = prefix_softmin(d) + cost_row(i)
        if mask_tail:
            # rows beyond the true L_a (tile padding) leave the DP unchanged
            d_new = jnp.where(t * tile_la + i < L_a, d_new, d)
        return d_new

    # ---- DP recursion across rows; DP rows carried in d_scr across tiles ---
    @pl.when(t == 0)
    def _():
        d_scr[...] = jax.lax.fori_loop(1, tile_la, dp_step, cost_row(0),
                                       unroll=unroll)

    @pl.when(t > 0)
    def _():
        d_scr[...] = jax.lax.fori_loop(0, tile_la, dp_step, d_scr[...],
                                       unroll=unroll)

    # ---- finalize: soft-min over the last DP row of each packed pair -------
    @pl.when(t == pl.num_programs(1) - 1)
    def _():
        d_last = d_scr[...]
        rmin = jnp.min(d_last, axis=-1, keepdims=True)              # (P, 1)
        rsum = jnp.sum(jnp.exp((rmin - d_last) * inv_g),
                       axis=-1, keepdims=True)
        out_ref[...] = (rmin - gam * jnp.log(rsum)) * jnp.asarray(1.0 / L_a, f32)


def dwsa_loss_batched(centers_a, centers_b, *, alpha=0.01, threshold=2.0,
                      max_tile_la=None, pack=None):
    """Pallas forward of DWSA_Loss for a batch of (a, b) pairs.

    centers_a: (B, L_a, D), centers_b: (B, L_b, D)  ->  (B,) losses.
    Matches the PyTorch module defaults: center_norm=False, sim='cos',
    softmax='row', threshold=2, alpha=0.01.
    """
    B, L_a, D = centers_a.shape
    Bb, L_b, Db = centers_b.shape
    assert B == Bb and D == Db
    N = 2 * L_b + 1
    N_pad = _round_up(N, _LANES)

    # ---- sublane packing of independent pairs (up to 8 per grid step) ------
    if pack is None:
        # fill the 8 vreg sublanes, but keep >= 2 steps on the "parallel"
        # batch axis when B >= 2 so both v7x TensorCores get work
        pack = max(1, min(_SUBLANES, (B + 1) // 2))
    P = int(pack)
    G = -(-B // P)
    B_pad = G * P

    # ---- generation-aware VMEM budget -> tile_la and vmem limit ------------
    vmem_cap = _vmem_capacity_bytes()
    vmem_limit = int(max(32 * 2**20, min(vmem_cap - 8 * 2**20, 100 * 2**20)))
    budget = int(vmem_limit * 0.6)
    fixed = 4 * (2 * P * D * N_pad + P * N_pad)        # b_int dbl-buf + d_scr
    per_row = 4 * (2 * P * D + P * N_pad + 4 * N_pad)  # a dbl-buf + c_scr + temps
    t_max = max(8, (budget - fixed) // per_row)
    if max_tile_la is not None:
        t_max = max(8, min(t_max, int(max_tile_la)))
    t_max = int(min(t_max, 2048))

    if L_a <= t_max:
        tile_la, num_tiles, L_a_pad = L_a, 1, L_a
    else:
        tile_la = max(8, (t_max // 8) * 8)
        num_tiles = -(-L_a // tile_la)
        L_a_pad = num_tiles * tile_la
    mask_tail = (L_a_pad != L_a)

    f32 = jnp.float32
    # pad batch to a multiple of P and L_a to a multiple of the tile
    a = jnp.zeros((B_pad, L_a_pad, D), f32)
    a = a.at[:B, :L_a, :].set(centers_a.astype(f32))
    # b interleaved into the odd columns of a (D, N_pad) RHS:
    #   C[:, 2j+1] = 1 - a @ b[j] comes out of one plain (tile_la,D)@(D,N_pad)
    #   matmul with no in-kernel transpose; even / padded columns stay zero.
    b_int = jnp.zeros((B_pad, D, N_pad), f32)
    b_int = b_int.at[:B, :, 1:2 * L_b:2].set(
        jnp.swapaxes(centers_b.astype(f32), 1, 2))

    # modest unroll: only the cost-row loads overlap (the m/s chain is serial)
    # and vreg pressure grows ~P x after sublane packing.
    if tile_la <= 16:
        unroll = True
    elif N_pad > _LANES:
        unroll = 2
    else:
        unroll = 4

    kern = functools.partial(
        _dwsa_kernel, N=N, N_pad=N_pad, P=P, tile_la=tile_la, L_a=L_a,
        threshold=float(threshold), gamma=float(alpha), unroll=unroll,
        mask_tail=mask_tail)

    out = pl.pallas_call(
        kern,
        out_shape=jax.ShapeDtypeStruct((G, P, 1), f32),
        grid=(G, num_tiles),
        in_specs=[
            pl.BlockSpec((P, tile_la, D), lambda g, t: (g, t, 0)),
            # TODO(synk): pipeline_mode=pl.Buffered(1) for b_int (its block
            #             index is constant over t) would save one VMEM buffer.
            pl.BlockSpec((P, D, N_pad), lambda g, t: (g, 0, 0)),
        ],
        out_specs=pl.BlockSpec((None, P, 1), lambda g, t: (g, 0, 0)),
        scratch_shapes=[
            pltpu.VMEM((P, tile_la, N_pad), jnp.float32),  # per-tile cost rows
            pltpu.VMEM((P, N_pad), jnp.float32),           # carried DP rows
        ],
        compiler_params=pltpu.CompilerParams(
            dimension_semantics=("parallel", "arbitrary"),
            vmem_limit_bytes=vmem_limit),
    )(a, b_int)
    return out.reshape(B_pad)[:B]


def dwsa_loss(centers_a, centers_b, *, alpha=0.01, threshold=2.0):
    """Single-pair wrapper matching DWSA_Loss.forward(centers_a, centers_b)."""
    return dwsa_loss_batched(centers_a[None], centers_b[None],
                             alpha=alpha, threshold=threshold)[0]


def _dwsa_reference(a, b, alpha=0.01, threshold=2.0):
    """Pure numpy mirror of the PyTorch module's forward (default config)."""
    a = np.asarray(a, np.float32)
    b = np.asarray(b, np.float32)
    matching = 1.0 - a @ b.T
    L_a, L_b = matching.shape
    X = np.concatenate([matching, np.full_like(matching, threshold)], axis=0)
    X = X.T.reshape(2 * L_b, L_a).T
    X = np.concatenate(
        [np.full((L_a, 1), threshold, np.float32), X], axis=1)
    m = X.max(-1, keepdims=True)
    e = np.exp(X - m)
    C = e / e.sum(-1, keepdims=True)
    gamma = np.float32(alpha)
    M, Ncols = C.shape
    D = np.ones((M, Ncols), np.float32) * 100
    D[0, :] = C[0, :]
    for i in range(1, M):
        for j in range(Ncols):
            last_row = D[i - 1, :j + 1] if j % 2 == 0 else D[i - 1, :j]
            rmin = last_row.min()
            rsum = np.exp(-(last_row - rmin) / gamma).sum()
            D[i, j] = -gamma * np.log(rsum) + rmin + C[i, j]
    last_row = D[-1, :]
    rmin = last_row.min()
    rsum = np.exp(-(last_row - rmin) / gamma).sum()
    softmin = -gamma * np.log(rsum) + rmin
    return np.float32(softmin / L_a)


if __name__ == "__main__":
    key = jax.random.PRNGKey(0)
    keys = jax.random.split(key, 6)

    def _check(tag, ca, cb, losses):
        ca_np, cb_np, ls = np.asarray(ca), np.asarray(cb), np.asarray(losses)
        for i in range(ca_np.shape[0]):
            ref = _dwsa_reference(ca_np[i], cb_np[i], alpha=0.01, threshold=2.0)
            if not np.allclose(ls[i], ref, rtol=1e-3, atol=1e-3):
                print("WARNING: mismatch (%s, pair %d): %f vs %f"
                      % (tag, i, float(ls[i]), float(ref)))

    # --- test 1: small batch (unpacked P=1 path), single L_a tile -----------
    B, L_a, L_b, D = 2, 8, 8, 32
    ca = jax.random.normal(keys[0], (B, L_a, D), dtype=jnp.float32)
    cb = jax.random.normal(keys[1], (B, L_b, D), dtype=jnp.float32)
    losses = jax.block_until_ready(
        dwsa_loss_batched(ca, cb, alpha=0.01, threshold=2.0))
    _check("test1", ca, cb, losses)

    # --- test 2: 16 pairs -> 8 pairs packed into the vreg sublanes per step -
    B2 = 16
    ca2 = jax.random.normal(keys[2], (B2, L_a, D), dtype=jnp.float32)
    cb2 = jax.random.normal(keys[3], (B2, L_b, D), dtype=jnp.float32)
    losses2 = jax.block_until_ready(
        dwsa_loss_batched(ca2, cb2, alpha=0.01, threshold=2.0))
    _check("test2", ca2, cb2, losses2)

    # --- test 3: multi-tile L_a with tail masking + odd batch (pair padding)
    B3, L_a3 = 3, 20
    ca3 = jax.random.normal(keys[4], (B3, L_a3, D), dtype=jnp.float32)
    cb3 = jax.random.normal(keys[5], (B3, L_b, D), dtype=jnp.float32)
    losses3 = jax.block_until_ready(
        dwsa_loss_batched(ca3, cb3, alpha=0.01, threshold=2.0, max_tile_la=8))
    _check("test3", ca3, cb3, losses3)

    print("KERNEL_OK")
</pallas_src>

<mosaic_0001>
module attributes {stable_mosaic.version = 11 : i64} {
  func.func @_dwsa_kernel(%arg0: i32, %arg1: i32, %arg2: memref<1x8x32xf32, #tpu.memory_space<vmem>>, %arg3: memref<1x32x128xf32, #tpu.memory_space<vmem>>, %arg4: memref<1x1x1xf32, #tpu.memory_space<vmem>>, %arg5: memref<1x8x128xf32, #tpu.memory_space<vmem>>, %arg6: memref<1x128xf32, #tpu.memory_space<vmem>>) attributes {dimension_semantics = [#tpu.dimension_semantics<parallel>, #tpu.dimension_semantics<arbitrary>], iteration_bounds = array<i64: 2, 1>, scalar_prefetch = 0 : i64, scratch_operands = 2 : i64, tpu.core_type = #tpu.core_type<tc>, window_params = [{transform_indices = @transform_0, window_bounds = array<i64: 1, 8, 32>}, {transform_indices = @transform_1, window_bounds = array<i64: 1, 32, 128>}, {transform_indices = @transform_2, window_bounds = array<i64: 1, 1, 1>}]} {
    %0 = tpu.iota {dimensions = array<i32: 1>} : vector<8x128xi32>
    %c17_i32 = arith.constant 17 : i32
    %1 = vector.broadcast %c17_i32 : i32 to vector<8x128xi32>
    %2 = arith.cmpi slt, %0, %1 : vector<8x128xi32>
    %c2_i32 = arith.constant 2 : i32
    %c0_i32 = arith.constant 0 : i32
    %3 = arith.cmpi eq, %c2_i32, %c0_i32 : i32
    %c1_i32 = arith.constant 1 : i32
    %4 = arith.select %3, %c1_i32, %c2_i32 : i32
    %5 = vector.broadcast %4 : i32 to vector<8x128xi32>
    %6 = arith.remsi %0, %5 : vector<8x128xi32>
    %c0_i32_0 = arith.constant 0 : i32
    %7 = vector.broadcast %c0_i32_0 : i32 to vector<8x128xi32>
    %8 = arith.cmpi ne, %6, %7 : vector<8x128xi32>
    %c0_i32_1 = arith.constant 0 : i32
    %9 = vector.broadcast %c0_i32_1 : i32 to vector<8x128xi32>
    %10 = arith.cmpi slt, %6, %9 : vector<8x128xi32>
    %c0_i32_2 = arith.constant 0 : i32
    %11 = arith.cmpi slt, %4, %c0_i32_2 : i32
    %12 = vector.broadcast %11 : i1 to vector<8x128xi1>
    %13 = vector.broadcast %12 : vector<8x128xi1> to vector<8x128xi1>
    %14 = arith.xori %10, %13 : vector<8x128xi1>
    %15 = arith.andi %14, %8 : vector<8x128xi1>
    %16 = vector.broadcast %4 : i32 to vector<8x128xi32>
    %17 = arith.addi %6, %16 : vector<8x128xi32>
    %18 = arith.select %15, %17, %6 : vector<8x128xi1>, vector<8x128xi32>
    %c0_i32_3 = arith.constant 0 : i32
    %19 = vector.broadcast %c0_i32_3 : i32 to vector<8x128xi32>
    %20 = arith.cmpi eq, %18, %19 : vector<8x128xi32>
    %21 = tpu.iota {dimensions = array<i32: 1>} : vector<1x128xi32>
    %c2_i32_4 = arith.constant 2 : i32
    %c0_i32_5 = arith.constant 0 : i32
    %22 = arith.cmpi eq, %c2_i32_4, %c0_i32_5 : i32
    %c1_i32_6 = arith.constant 1 : i32
    %23 = arith.select %22, %c1_i32_6, %c2_i32_4 : i32
    %24 = vector.broadcast %23 : i32 to vector<1x128xi32>
    %25 = arith.remsi %21, %24 : vector<1x128xi32>
    %c0_i32_7 = arith.constant 0 : i32
    %26 = vector.broadcast %c0_i32_7 : i32 to vector<1x128xi32>
    %27 = arith.cmpi ne, %25, %26 : vector<1x128xi32>
    %c0_i32_8 = arith.constant 0 : i32
    %28 = vector.broadcast %c0_i32_8 : i32 to vector<1x128xi32>
    %29 = arith.cmpi slt, %25, %28 : vector<1x128xi32>
    %c0_i32_9 = arith.constant 0 : i32
    %30 = arith.cmpi slt, %23, %c0_i32_9 : i32
    %31 = vector.broadcast %30 : i1 to vector<1x128xi1>
    %32 = vector.broadcast %31 : vector<1x128xi1> to vector<1x128xi1>
    %33 = arith.xori %29, %32 : vector<1x128xi1>
    %34 = arith.andi %33, %27 : vector<1x128xi1>
    %35 = vector.broadcast %23 : i32 to vector<1x128xi32>
    %36 = arith.addi %25, %35 : vector<1x128xi32>
    %37 = arith.select %34, %36, %25 : vector<1x128xi1>, vector<1x128xi32>
    %c0_i32_10 = arith.constant 0 : i32
    %38 = vector.broadcast %c0_i32_10 : i32 to vector<1x128xi32>
    %39 = arith.cmpi eq, %37, %38 : vector<1x128xi32>
    %c0 = arith.constant 0 : index
    %c0_11 = arith.constant 0 : index
    %c0_12 = arith.constant 0 : index
    %40 = vector.load %arg2[%c0, %c0_11, %c0_12] : memref<1x8x32xf32, #tpu.memory_space<vmem>>, vector<1x8x32xf32>
    %41 = vector.shape_cast %40 : vector<1x8x32xf32> to vector<8x32xf32>
    %c0_13 = arith.constant 0 : index
    %c0_14 = arith.constant 0 : index
    %c0_15 = arith.constant 0 : index
    %42 = vector.load %arg3[%c0_13, %c0_14, %c0_15] : memref<1x32x128xf32, #tpu.memory_space<vmem>>, vector<1x32x128xf32>
    %43 = vector.shape_cast %42 : vector<1x32x128xf32> to vector<32x128xf32>
    %cst = arith.constant dense<0.000000e+00> : vector<8x128xf32>
    %44 = tpu.matmul %41, %43, %cst {dimension_numbers = #tpu.dot_dimension_numbers<[1], [0], [0], [1], [0, 0, 1, 1], [], []>} : vector<8x32xf32>, vector<32x128xf32>, vector<8x128xf32> -> vector<8x128xf32>
    %cst_16 = arith.constant 1.000000e+00 : f32
    %45 = vector.broadcast %cst_16 : f32 to vector<8x128xf32>
    %46 = arith.subf %45, %44 : vector<8x128xf32>
    %cst_17 = arith.constant 2.000000e+00 : f32
    %47 = vector.broadcast %cst_17 : f32 to vector<8x128xf32>
    %48 = arith.select %20, %47, %46 : vector<8x128xi1>, vector<8x128xf32>
    %cst_18 = arith.constant -1.000000e+30 : f32
    %49 = vector.broadcast %cst_18 : f32 to vector<8x128xf32>
    %50 = arith.select %2, %48, %49 : vector<8x128xi1>, vector<8x128xf32>
    %cst_19 = arith.constant dense<0xFF800000> : vector<8xf32>
    %51 = vector.multi_reduction <maximumf>, %50, %cst_19 [1] : vector<8x128xf32> to vector<8xf32>
    %52 = vector.shape_cast %51 : vector<8xf32> to vector<8x1xf32>
    %53 = vector.broadcast %52 : vector<8x1xf32> to vector<8x128xf32>
    %54 = arith.subf %50, %53 : vector<8x128xf32>
    %55 = math.exp %54 : vector<8x128xf32>
    %cst_20 = arith.constant dense<0.000000e+00> : vector<8xf32>
    %56 = vector.multi_reduction <add>, %55, %cst_20 [1] : vector<8x128xf32> to vector<8xf32>
    %57 = vector.shape_cast %56 : vector<8xf32> to vector<8x1xf32>
    %58 = tpu.reciprocal %57 : vector<8x1xf32> -> vector<8x1xf32>
    %59 = vector.broadcast %58 : vector<8x1xf32> to vector<8x128xf32>
    %60 = arith.mulf %55, %59 : vector<8x128xf32>
    %cst_21 = arith.constant 1.000000e+30 : f32
    %61 = vector.broadcast %cst_21 : f32 to vector<8x128xf32>
    %62 = arith.select %2, %60, %61 : vector<8x128xi1>, vector<8x128xf32>
    %c0_22 = arith.constant 0 : index
    %c0_23 = arith.constant 0 : index
    %c0_24 = arith.constant 0 : index
    %63 = vector.load %arg5[%c0_22, %c0_23, %c0_24] : memref<1x8x128xf32, #tpu.memory_space<vmem>>, vector<1x8x128xf32>
    %64 = vector.shape_cast %63 : vector<1x8x128xf32> to vector<8x128xf32>
    %65 = vector.shape_cast %62 : vector<8x128xf32> to vector<1x8x128xf32>
    tpu.vector_store %arg5[%c0_22, %c0_23, %c0_24], %65 {strides = array<i32>} : memref<1x8x128xf32, #tpu.memory_space<vmem>>, vector<1x8x128xf32>,
    %c0_i32_25 = arith.constant 0 : i32
    %66 = arith.cmpi eq, %arg1, %c0_i32_25 : i32
    %67 = arith.extui %66 : i1 to i32
    %cst_26 = arith.constant 1.000000e+30 : f32
    %cst_27 = arith.constant 1.000000e+02 : f32
    %cst_28 = arith.constant 0.00999999977 : f32
    %c0_i32_29 = arith.constant 0 : i32
    %68 = arith.cmpi ne, %67, %c0_i32_29 : i32
    scf.if %68 {
      %c0_39 = arith.constant 0 : index
      %c0_40 = arith.constant 0 : index
      %c0_41 = arith.constant 0 : index
      %75 = vector.load %arg5[%c0_39, %c0_40, %c0_41] : memref<1x8x128xf32, #tpu.memory_space<vmem>>, vector<1x1x128xf32>
      %76 = vector.shape_cast %75 : vector<1x1x128xf32> to vector<1x128xf32>
      %c1_i32_42 = arith.constant 1 : i32
      %cst_43 = arith.constant 1.000000e+00 : f32
      %77 = vector.broadcast %cst_43 : f32 to vector<1x128xf32>
      %c1_i32_44 = arith.constant 1 : i32
      %78 = tpu.dynamic_rotate %76 by %c1_i32_44 dim 1 : vector<1x128xf32>, i32 -> vector<1x128xf32>
      %c1_i32_45 = arith.constant 1 : i32
      %79 = tpu.dynamic_rotate %77 by %c1_i32_45 dim 1 : vector<1x128xf32>, i32 -> vector<1x128xf32>
      %c1_i32_46 = arith.constant 1 : i32
      %80 = vector.broadcast %c1_i32_46 : i32 to vector<1x128xi32>
      %81 = arith.cmpi sge, %21, %80 : vector<1x128xi32>
      %82 = vector.broadcast %cst_26 : f32 to vector<1x128xf32>
      %83 = arith.select %81, %78, %82 : vector<1x128xi1>, vector<1x128xf32>
      %cst_47 = arith.constant 0.000000e+00 : f32
      %84 = vector.broadcast %cst_47 : f32 to vector<1x128xf32>
      %85 = arith.select %81, %79, %84 : vector<1x128xi1>, vector<1x128xf32>
      %86 = arith.minimumf %76, %83 : vector<1x128xf32>
      %87 = arith.maximumf %76, %83 : vector<1x128xf32>
      %88 = arith.subf %86, %87 : vector<1x128xf32>
      %89 = vector.broadcast %cst_27 : f32 to vector<1x128xf32>
      %90 = arith.mulf %88, %89 : vector<1x128xf32>
      %91 = math.exp %90 : vector<1x128xf32>
      %92 = arith.cmpf ole, %76, %83 : vector<1x128xf32>
      %93 = arith.mulf %85, %91 : vector<1x128xf32>
      %94 = arith.addf %77, %93 : vector<1x128xf32>
      %95 = arith.mulf %77, %91 : vector<1x128xf32>
      %96 = arith.addf %95, %85 : vector<1x128xf32>
      %97 = arith.select %92, %94, %96 : vector<1x128xi1>, vector<1x128xf32>
      %c2_i32_48 = arith.constant 2 : i32
      %98 = tpu.dynamic_rotate %86 by %c2_i32_48 dim 1 : vector<1x128xf32>, i32 -> vector<1x128xf32>
      %c2_i32_49 = arith.constant 2 : i32
      %99 = tpu.dynamic_rotate %97 by %c2_i32_49 dim 1 : vector<1x128xf32>, i32 -> vector<1x128xf32>
      %c2_i32_50 = arith.constant 2 : i32
      %100 = vector.broadcast %c2_i32_50 : i32 to vector<1x128xi32>
      %101 = arith.cmpi sge, %21, %100 : vector<1x128xi32>
      %102 = vector.broadcast %cst_26 : f32 to vector<1x128xf32>
      %103 = arith.select %101, %98, %102 : vector<1x128xi1>, vector<1x128xf32>
      %cst_51 = arith.constant 0.000000e+00 : f32
      %104 = vector.broadcast %cst_51 : f32 to vector<1x128xf32>
      %105 = arith.select %101, %99, %104 : vector<1x128xi1>, vector<1x128xf32>
      %106 = arith.minimumf %86, %103 : vector<1x128xf32>
      %107 = arith.maximumf %86, %103 : vector<1x128xf32>
      %108 = arith.subf %106, %107 : vector<1x128xf32>
      %109 = vector.broadcast %cst_27 : f32 to vector<1x128xf32>
      %110 = arith.mulf %108, %109 : vector<1x128xf32>
      %111 = math.exp %110 : vector<1x128xf32>
      %112 = arith.cmpf ole, %86, %103 : vector<1x128xf32>
      %113 = arith.mulf %105, %111 : vector<1x128xf32>
      %114 = arith.addf %97, %113 : vector<1x128xf32>
      %115 = arith.mulf %97, %111 : vector<1x128xf32>
      %116 = arith.addf %115, %105 : vector<1x128xf32>
      %117 = arith.select %112, %114, %116 : vector<1x128xi1>, vector<1x128xf32>
      %c4_i32 = arith.constant 4 : i32
      %118 = tpu.dynamic_rotate %106 by %c4_i32 dim 1 : vector<1x128xf32>, i32 -> vector<1x128xf32>
      %c4_i32_52 = arith.constant 4 : i32
      %119 = tpu.dynamic_rotate %117 by %c4_i32_52 dim 1 : vector<1x128xf32>, i32 -> vector<1x128xf32>
      %c4_i32_53 = arith.constant 4 : i32
      %120 = vector.broadcast %c4_i32_53 : i32 to vector<1x128xi32>
      %121 = arith.cmpi sge, %21, %120 : vector<1x128xi32>
      %122 = vector.broadcast %cst_26 : f32 to vector<1x128xf32>
      %123 = arith.select %121, %118, %122 : vector<1x128xi1>, vector<1x128xf32>
      %cst_54 = arith.constant 0.000000e+00 : f32
      %124 = vector.broadcast %cst_54 : f32 to vector<1x128xf32>
      %125 = arith.select %121, %119, %124 : vector<1x128xi1>, vector<1x128xf32>
      %126 = arith.minimumf %106, %123 : vector<1x128xf32>
      %127 = arith.maximumf %106, %123 : vector<1x128xf32>
      %128 = arith.subf %126, %127 : vector<1x128xf32>
      %129 = vector.broadcast %cst_27 : f32 to vector<1x128xf32>
      %130 = arith.mulf %128, %129 : vector<1x128xf32>
      %131 = math.exp %130 : vector<1x128xf32>
      %132 = arith.cmpf ole, %106, %123 : vector<1x128xf32>
      %133 = arith.mulf %125, %131 : vector<1x128xf32>
      %134 = arith.addf %117, %133 : vector<1x128xf32>
      %135 = arith.mulf %117, %131 : vector<1x128xf32>
      %136 = arith.addf %135, %125 : vector<1x128xf32>
      %137 = arith.select %132, %134, %136 : vector<1x128xi1>, vector<1x128xf32>
      %c8_i32 = arith.constant 8 : i32
      %138 = tpu.dynamic_rotate %126 by %c8_i32 dim 1 : vector<1x128xf32>, i32 -> vector<1x128xf32>
      %c8_i32_55 = arith.constant 8 : i32
      %139 = tpu.dynamic_rotate %137 by %c8_i32_55 dim 1 : vector<1x128xf32>, i32 -> vector<1x128xf32>
      %c8_i32_56 = arith.constant 8 : i32
      %140 = vector.broadcast %c8_i32_56 : i32 to vector<1x128xi32>
      %141 = arith.cmpi sge, %21, %140 : vector<1x128xi32>
      %142 = vector.broadcast %cst_26 : f32 to vector<1x128xf32>
      %143 = arith.select %141, %138, %142 : vector<1x128xi1>, vector<1x128xf32>
      %cst_57 = arith.constant 0.000000e+00 : f32
      %144 = vector.broadcast %cst_57 : f32 to vector<1x128xf32>
      %145 = arith.select %141, %139, %144 : vector<1x128xi1>, vector<1x128xf32>
      %146 = arith.minimumf %126, %143 : vector<1x128xf32>
      %147 = arith.maximumf %126, %143 : vector<1x128xf32>
      %148 = arith.subf %146, %147 : vector<1x128xf32>
      %149 = vector.broadcast %cst_27 : f32 to vector<1x128xf32>
      %150 = arith.mulf %148, %149 : vector<1x128xf32>
      %151 = math.exp %150 : vector<1x128xf32>
      %152 = arith.cmpf ole, %126, %143 : vector<1x128xf32>
      %153 = arith.mulf %145, %151 : vector<1x128xf32>
      %154 = arith.addf %137, %153 : vector<1x128xf32>
      %155 = arith.mulf %137, %151 : vector<1x128xf32>
      %156 = arith.addf %155, %145 : vector<1x128xf32>
      %157 = arith.select %152, %154, %156 : vector<1x128xi1>, vector<1x128xf32>
      %c16_i32 = arith.constant 16 : i32
      %158 = tpu.dynamic_rotate %146 by %c16_i32 dim 1 : vector<1x128xf32>, i32 -> vector<1x128xf32>
      %c16_i32_58 = arith.constant 16 : i32
      %159 = tpu.dynamic_rotate %157 by %c16_i32_58 dim 1 : vector<1x128xf32>, i32 -> vector<1x128xf32>
      %c16_i32_59 = arith.constant 16 : i32
      %160 = vector.broadcast %c16_i32_59 : i32 to vector<1x128xi32>
      %161 = arith.cmpi sge, %21, %160 : vector<1x128xi32>
      %162 = vector.broadcast %cst_26 : f32 to vector<1x128xf32>
      %163 = arith.select %161, %158, %162 : vector<1x128xi1>, vector<1x128xf32>
      %cst_60 = arith.constant 0.000000e+00 : f32
      %164 = vector.broadcast %cst_60 : f32 to vector<1x128xf32>
      %165 = arith.select %161, %159, %164 : vector<1x128xi1>, vector<1x128xf32>
      %166 = arith.minimumf %146, %163 : vector<1x128xf32>
      %167 = arith.maximumf %146, %163 : vector<1x128xf32>
      %168 = arith.subf %166, %167 : vector<1x128xf32>
      %169 = vector.broadcast %cst_27 : f32 to vector<1x128xf32>
      %170 = arith.mulf %168, %169 : vector<1x128xf32>
      %171 = math.exp %170 : vector<1x128xf32>
      %172 = arith.cmpf ole, %146, %163 : vector<1x128xf32>
      %173 = arith.mulf %165, %171 : vector<1x128xf32>
      %174 = arith.addf %157, %173 : vector<1x128xf32>
      %175 = arith.mulf %157, %171 : vector<1x128xf32>
      %176 = arith.addf %175, %165 : vector<1x128xf32>
      %177 = arith.select %172, %174, %176 : vector<1x128xi1>, vector<1x128xf32>
      %c1_i32_61 = arith.constant 1 : i32
      %178 = tpu.dynamic_rotate %166 by %c1_i32_61 dim 1 : vector<1x128xf32>, i32 -> vector<1x128xf32>
      %c1_i32_62 = arith.constant 1 : i32
      %179 = tpu.dynamic_rotate %177 by %c1_i32_62 dim 1 : vector<1x128xf32>, i32 -> vector<1x128xf32>
      %180 = arith.select %39, %166, %178 : vector<1x128xi1>, vector<1x128xf32>
      %181 = arith.select %39, %177, %179 : vector<1x128xi1>, vector<1x128xf32>
      %182 = math.log %181 : vector<1x128xf32>
      %183 = vector.broadcast %cst_28 : f32 to vector<1x128xf32>
      %184 = arith.mulf %183, %182 : vector<1x128xf32>
      %185 = arith.subf %180, %184 : vector<1x128xf32>
      %c0_63 = arith.constant 0 : index
      %186 = arith.index_cast %c1_i32_42 : i32 to index
      %c0_64 = arith.constant 0 : index
      %187 = vector.load %arg5[%c0_63, %186, %c0_64] : memref<1x8x128xf32, #tpu.memory_space<vmem>>, vector<1x1x128xf32>
      %188 = vector.shape_cast %187 : vector<1x1x128xf32> to vector<1x128xf32>
      %189 = arith.addf %185, %188 : vector<1x128xf32>
      %c2_i32_65 = arith.constant 2 : i32
      %cst_66 = arith.constant 1.000000e+00 : f32
      %190 = vector.broadcast %cst_66 : f32 to vector<1x128xf32>
      %c1_i32_67 = arith.constant 1 : i32
      %191 = tpu.dynamic_rotate %189 by %c1_i32_67 dim 1 : vector<1x128xf32>, i32 -> vector<1x128xf32>
      %c1_i32_68 = arith.constant 1 : i32
      %192 = tpu.dynamic_rotate %190 by %c1_i32_68 dim 1 : vector<1x128xf32>, i32 -> vector<1x128xf32>
      %c1_i32_69 = arith.constant 1 : i32
      %193 = vector.broadcast %c1_i32_69 : i32 to vector<1x128xi32>
      %194 = arith.cmpi sge, %21, %193 : vector<1x128xi32>
      %195 = vector.broadcast %cst_26 : f32 to vector<1x128xf32>
      %196 = arith.select %194, %191, %195 : vector<1x128xi1>, vector<1x128xf32>
      %cst_70 = arith.constant 0.000000e+00 : f32
      %197 = vector.broadcast %cst_70 : f32 to vector<1x128xf32>
      %198 = arith.select %194, %192, %197 : vector<1x128xi1>, vector<1x128xf32>
      %199 = arith.minimumf %189, %196 : vector<1x128xf32>
      %200 = arith.maximumf %189, %196 : vector<1x128xf32>
      %201 = arith.subf %199, %200 : vector<1x128xf32>
      %202 = vector.broadcast %cst_27 : f32 to vector<1x128xf32>
      %203 = arith.mulf %201, %202 : vector<1x128xf32>
      %204 = math.exp %203 : vector<1x128xf32>
      %205 = arith.cmpf ole, %189, %196 : vector<1x128xf32>
      %206 = arith.mulf %198, %204 : vector<1x128xf32>
      %207 = arith.addf %190, %206 : vector<1x128xf32>
      %208 = arith.mulf %190, %204 : vector<1x128xf32>
      %209 = arith.addf %208, %198 : vector<1x128xf32>
      %210 = arith.select %205, %207, %209 : vector<1x128xi1>, vector<1x128xf32>
      %c2_i32_71 = arith.constant 2 : i32
      %211 = tpu.dynamic_rotate %199 by %c2_i32_71 dim 1 : vector<1x128xf32>, i32 -> vector<1x128xf32>
      %c2_i32_72 = arith.constant 2 : i32
      %212 = tpu.dynamic_rotate %210 by %c2_i32_72 dim 1 : vector<1x128xf32>, i32 -> vector<1x128xf32>
      %c2_i32_73 = arith.constant 2 : i32
      %213 = vector.broadcast %c2_i32_73 : i32 to vector<1x128xi32>
      %214 = arith.cmpi sge, %21, %213 : vector<1x128xi32>
      %215 = vector.broadcast %cst_26 : f32 to vector<1x128xf32>
      %216 = arith.select %214, %211, %215 : vector<1x128xi1>, vector<1x128xf32>
      %cst_74 = arith.constant 0.000000e+00 : f32
      %217 = vector.broadcast %cst_74 : f32 to vector<1x128xf32>
      %218 = arith.select %214, %212, %217 : vector<1x128xi1>, vector<1x128xf32>
      %219 = arith.minimumf %199, %216 : vector<1x128xf32>
      %220 = arith.maximumf %199, %216 : vector<1x128xf32>
      %221 = arith.subf %219, %220 : vector<1x128xf32>
      %222 = vector.broadcast %cst_27 : f32 to vector<1x128xf32>
      %223 = arith.mulf %221, %222 : vector<1x128xf32>
      %224 = math.exp %223 : vector<1x128xf32>
      %225 = arith.cmpf ole, %199, %216 : vector<1x128xf32>
      %226 = arith.mulf %218, %224 : vector<1x128xf32>
      %227 = arith.addf %210, %226 : vector<1x128xf32>
      %228 = arith.mulf %210, %224 : vector<1x128xf32>
      %229 = arith.addf %228, %218 : vector<1x128xf32>
      %230 = arith.select %225, %227, %229 : vector<1x128xi1>, vector<1x128xf32>
      %c4_i32_75 = arith.constant 4 : i32
      %231 = tpu.dynamic_rotate %219 by %c4_i32_75 dim 1 : vector<1x128xf32>, i32 -> vector<1x128xf32>
      %c4_i32_76 = arith.constant 4 : i32
      %232 = tpu.dynamic_rotate %230 by %c4_i32_76 dim 1 : vector<1x128xf32>, i32 -> vector<1x128xf32>
      %c4_i32_77 = arith.constant 4 : i32
      %233 = vector.broadcast %c4_i32_77 : i32 to vector<1x128xi32>
      %234 = arith.cmpi sge, %21, %233 : vector<1x128xi32>
      %235 = vector.broadcast %cst_26 : f32 to vector<1x128xf32>
      %236 = arith.select %234, %231, %235 : vector<1x128xi1>, vector<1x128xf32>
      %cst_78 = arith.constant 0.000000e+00 : f32
      %237 = vector.broadcast %cst_78 : f32 to vector<1x128xf32>
      %238 = arith.select %234, %232, %237 : vector<1x128xi1>, vector<1x128xf32>
      %239 = arith.minimumf %219, %236 : vector<1x128xf32>
      %240 = arith.maximumf %219, %236 : vector<1x128xf32>
      %241 = arith.subf %239, %240 : vector<1x128xf32>
      %242 = vector.broadcast %cst_27 : f32 to vector<1x128xf32>
      %243 = arith.mulf %241, %242 : vector<1x128xf32>
      %244 = math.exp %243 : vector<1x128xf32>
      %245 = arith.cmpf ole, %219, %236 : vector<1x128xf32>
      %246 = arith.mulf %238, %244 : vector<1x128xf32>
      %247 = arith.addf %230, %246 : vector<1x128xf32>
      %248 = arith.mulf %230, %244 : vector<1x128xf32>
      %249 = arith.addf %248, %238 : vector<1x128xf32>
      %250 = arith.select %245, %247, %249 : vector<1x128xi1>, vector<1x128xf32>
      %c8_i32_79 = arith.constant 8 : i32
      %251 = tpu.dynamic_rotate %239 by %c8_i32_79 dim 1 : vector<1x128xf32>, i32 -> vector<1x128xf32>
      %c8_i32_80 = arith.constant 8 : i32
      %252 = tpu.dynamic_rotate %250 by %c8_i32_80 dim 1 : vector<1x128xf32>, i32 -> vector<1x128xf32>
      %c8_i32_81 = arith.constant 8 : i32
      %253 = vector.broadcast %c8_i32_81 : i32 to vector<1x128xi32>
      %254 = arith.cmpi sge, %21, %253 : vector<1x128xi32>
      %255 = vector.broadcast %cst_26 : f32 to vector<1x128xf32>
      %256 = arith.select %254, %251, %255 : vector<1x128xi1>, vector<1x128xf32>
      %cst_82 = arith.constant 0.000000e+00 : f32
      %257 = vector.broadcast %cst_82 : f32 to vector<1x128xf32>
      %258 = arith.select %254, %252, %257 : vector<1x128xi1>, vector<1x128xf32>
      %259 = arith.minimumf %239, %256 : vector<1x128xf32>
      %260 = arith.maximumf %239, %256 : vector<1x128xf32>
      %261 = arith.subf %259, %260 : vector<1x128xf32>
      %262 = vector.broadcast %cst_27 : f32 to vector<1x128xf32>
      %263 = arith.mulf %261, %262 : vector<1x128xf32>
      %264 = math.exp %263 : vector<1x128xf32>
      %265 = arith.cmpf ole, %239, %256 : vector<1x128xf32>
      %266 = arith.mulf %258, %264 : vector<1x128xf32>
      %267 = arith.addf %250, %266 : vector<1x128xf32>
      %268 = arith.mulf %250, %264 : vector<1x128xf32>
      %269 = arith.addf %268, %258 : vector<1x128xf32>
      %270 = arith.select %265, %267, %269 : vector<1x128xi1>, vector<1x128xf32>
      %c16_i32_83 = arith.constant 16 : i32
      %271 = tpu.dynamic_rotate %259 by %c16_i32_83 dim 1 : vector<1x128xf32>, i32 -> vector<1x128xf32>
      %c16_i32_84 = arith.constant 16 : i32
      %272 = tpu.dynamic_rotate %270 by %c16_i32_84 dim 1 : vector<1x128xf32>, i32 -> vector<1x128xf32>
      %c16_i32_85 = arith.constant 16 : i32
      %273 = vector.broadcast %c16_i32_85 : i32 to vector<1x128xi32>
      %274 = arith.cmpi sge, %21, %273 : vector<1x128xi32>
      %275 = vector.broadcast %cst_26 : f32 to vector<1x128xf32>
      %276 = arith.select %274, %271, %275 : vector<1x128xi1>, vector<1x128xf32>
      %cst_86 = arith.constant 0.000000e+00 : f32
      %277 = vector.broadcast %cst_86 : f32 to vector<1x128xf32>
      %278 = arith.select %274, %272, %277 : vector<1x128xi1>, vector<1x128xf32>
      %279 = arith.minimumf %259, %276 : vector<1x128xf32>
      %280 = arith.maximumf %259, %276 : vector<1x128xf32>
      %281 = arith.subf %279, %280 : vector<1x128xf32>
      %282 = vector.broadcast %cst_27 : f32 to vector<1x128xf32>
      %283 = arith.mulf %281, %282 : vector<1x128xf32>
      %284 = math.exp %283 : vector<1x128xf32>
      %285 = arith.cmpf ole, %259, %276 : vector<1x128xf32>
      %286 = arith.mulf %278, %284 : vector<1x128xf32>
      %287 = arith.addf %270, %286 : vector<1x128xf32>
      %288 = arith.mulf %270, %284 : vector<1x128xf32>
      %289 = arith.addf %288, %278 : vector<1x128xf32>
      %290 = arith.select %285, %287, %289 : vector<1x128xi1>, vector<1x128xf32>
      %c1_i32_87 = arith.constant 1 : i32
      %291 = tpu.dynamic_rotate %279 by %c1_i32_87 dim 1 : vector<1x128xf32>, i32 -> vector<1x128xf32>
      %c1_i32_88 = arith.constant 1 : i32
      %292 = tpu.dynamic_rotate %290 by %c1_i32_88 dim 1 : vector<1x128xf32>, i32 -> vector<1x128xf32>
      %293 = arith.select %39, %279, %291 : vector<1x128xi1>, vector<1x128xf32>
      %294 = arith.select %39, %290, %292 : vector<1x128xi1>, vector<1x128xf32>
      %295 = math.log %294 : vector<1x128xf32>
      %296 = vector.broadcast %cst_28 : f32 to vector<1x128xf32>
      %297 = arith.mulf %296, %295 : vector<1x128xf32>
      %298 = arith.subf %293, %297 : vector<1x128xf32>
      %c0_89 = arith.constant 0 : index
      %299 = arith.index_cast %c2_i32_65 : i32 to index
      %c0_90 = arith.constant 0 : index
      %300 = vector.load %arg5[%c0_89, %299, %c0_90] : memref<1x8x128xf32, #tpu.memory_space<vmem>>, vector<1x1x128xf32>
      %301 = vector.shape_cast %300 : vector<1x1x128xf32> to vector<1x128xf32>
      %302 = arith.addf %298, %301 : vector<1x128xf32>
      %c3_i32 = arith.constant 3 : i32
      %cst_91 = arith.constant 1.000000e+00 : f32
      %303 = vector.broadcast %cst_91 : f32 to vector<1x128xf32>
      %c1_i32_92 = arith.constant 1 : i32
      %304 = tpu.dynamic_rotate %302 by %c1_i32_92 dim 1 : vector<1x128xf32>, i32 -> vector<1x128xf32>
      %c1_i32_93 = arith.constant 1 : i32
      %305 = tpu.dynamic_rotate %303 by %c1_i32_93 dim 1 : vector<1x128xf32>, i32 -> vector<1x128xf32>
      %c1_i32_94 = arith.constant 1 : i32
      %306 = vector.broadcast %c1_i32_94 : i32 to vector<1x128xi32>
      %307 = arith.cmpi sge, %21, %306 : vector<1x128xi32>
      %308 = vector.broadcast %cst_26 : f32 to vector<1x128xf32>
      %309 = arith.select %307, %304, %308 : vector<1x128xi1>, vector<1x128xf32>
      %cst_95 = arith.constant 0.000000e+00 : f32
      %310 = vector.broadcast %cst_95 : f32 to vector<1x128xf32>
      %311 = arith.select %307, %305, %310 : vector<1x128xi1>, vector<1x128xf32>
      %312 = arith.minimumf %302, %309 : vector<1x128xf32>
      %313 = arith.maximumf %302, %309 : vector<1x128xf32>
      %314 = arith.subf %312, %313 : vector<1x128xf32>
      %315 = vector.broadcast %cst_27 : f32 to vector<1x128xf32>
      %316 = arith.mulf %314, %315 : vector<1x128xf32>
      %317 = math.exp %316 : vector<1x128xf32>
      %318 = arith.cmpf ole, %302, %309 : vector<1x128xf32>
      %319 = arith.mulf %311, %317 : vector<1x128xf32>
      %320 = arith.addf %303, %319 : vector<1x128xf32>
      %321 = arith.mulf %303, %317 : vector<1x128xf32>
      %322 = arith.addf %321, %311 : vector<1x128xf32>
      %323 = arith.select %318, %320, %322 : vector<1x128xi1>, vector<1x128xf32>
      %c2_i32_96 = arith.constant 2 : i32
      %324 = tpu.dynamic_rotate %312 by %c2_i32_96 dim 1 : vector<1x128xf32>, i32 -> vector<1x128xf32>
      %c2_i32_97 = arith.constant 2 : i32
      %325 = tpu.dynamic_rotate %323 by %c2_i32_97 dim 1 : vector<1x128xf32>, i32 -> vector<1x128xf32>
      %c2_i32_98 = arith.constant 2 : i32
      %326 = vector.broadcast %c2_i32_98 : i32 to vector<1x128xi32>
      %327 = arith.cmpi sge, %21, %326 : vector<1x128xi32>
      %328 = vector.broadcast %cst_26 : f32 to vector<1x128xf32>
      %329 = arith.select %327, %324, %328 : vector<1x128xi1>, vector<1x128xf32>
      %cst_99 = arith.constant 0.000000e+00 : f32
      %330 = vector.broadcast %cst_99 : f32 to vector<1x128xf32>
      %331 = arith.select %327, %325, %330 : vector<1x128xi1>, vector<1x128xf32>
      %332 = arith.minimumf %312, %329 : vector<1x128xf32>
      %333 = arith.maximumf %312, %329 : vector<1x128xf32>
      %334 = arith.subf %332, %333 : vector<1x128xf32>
      %335 = vector.broadcast %cst_27 : f32 to vector<1x128xf32>
      %336 = arith.mulf %334, %335 : vector<1x128xf32>
      %337 = math.exp %336 : vector<1x128xf32>
      %338 = arith.cmpf ole, %312, %329 : vector<1x128xf32>
      %339 = arith.mulf %331, %337 : vector<1x128xf32>
      %340 = arith.addf %323, %339 : vector<1x128xf32>
      %341 = arith.mulf %323, %337 : vector<1x128xf32>
      %342 = arith.addf %341, %331 : vector<1x128xf32>
      %343 = arith.select %338, %340, %342 : vector<1x128xi1>, vector<1x128xf32>
      %c4_i32_100 = arith.constant 4 : i32
      %344 = tpu.dynamic_rotate %332 by %c4_i32_100 dim 1 : vector<1x128xf32>, i32 -> vector<1x128xf32>
      %c4_i32_101 = arith.constant 4 : i32
      %345 = tpu.dynamic_rotate %343 by %c4_i32_101 dim 1 : vector<1x128xf32>, i32 -> vector<1x128xf32>
      %c4_i32_102 = arith.constant 4 : i32
      %346 = vector.broadcast %c4_i32_102 : i32 to vector<1x128xi32>
      %347 = arith.cmpi sge, %21, %346 : vector<1x128xi32>
      %348 = vector.broadcast %cst_26 : f32 to vector<1x128xf32>
      %349 = arith.select %347, %344, %348 : vector<1x128xi1>, vector<1x128xf32>
      %cst_103 = arith.constant 0.000000e+00 : f32
      %350 = vector.broadcast %cst_103 : f32 to vector<1x128xf32>
      %351 = arith.select %347, %345, %350 : vector<1x128xi1>, vector<1x128xf32>
      %352 = arith.minimumf %332, %349 : vector<1x128xf32>
      %353 = arith.maximumf %332, %349 : vector<1x128xf32>
      %354 = arith.subf %352, %353 : vector<1x128xf32>
      %355 = vector.broadcast %cst_27 : f32 to vector<1x128xf32>
      %356 = arith.mulf %354, %355 : vector<1x128xf32>
      %357 = math.exp %356 : vector<1x128xf32>
      %358 = arith.cmpf ole, %332, %349 : vector<1x128xf32>
      %359 = arith.mulf %351, %357 : vector<1x128xf32>
      %360 = arith.addf %343, %359 : vector<1x128xf32>
      %361 = arith.mulf %343, %357 : vector<1x128xf32>
      %362 = arith.addf %361, %351 : vector<1x128xf32>
      %363 = arith.select %358, %360, %362 : vector<1x128xi1>, vector<1x128xf32>
      %c8_i32_104 = arith.constant 8 : i32
      %364 = tpu.dynamic_rotate %352 by %c8_i32_104 dim 1 : vector<1x128xf32>, i32 -> vector<1x128xf32>
      %c8_i32_105 = arith.constant 8 : i32
      %365 = tpu.dynamic_rotate %363 by %c8_i32_105 dim 1 : vector<1x128xf32>, i32 -> vector<1x128xf32>
      %c8_i32_106 = arith.constant 8 : i32
      %366 = vector.broadcast %c8_i32_106 : i32 to vector<1x128xi32>
      %367 = arith.cmpi sge, %21, %366 : vector<1x128xi32>
      %368 = vector.broadcast %cst_26 : f32 to vector<1x128xf32>
      %369 = arith.select %367, %364, %368 : vector<1x128xi1>, vector<1x128xf32>
      %cst_107 = arith.constant 0.000000e+00 : f32
      %370 = vector.broadcast %cst_107 : f32 to vector<1x128xf32>
      %371 = arith.select %367, %365, %370 : vector<1x128xi1>, vector<1x128xf32>
      %372 = arith.minimumf %352, %369 : vector<1x128xf32>
      %373 = arith.maximumf %352, %369 : vector<1x128xf32>
      %374 = arith.subf %372, %373 : vector<1x128xf32>
      %375 = vector.broadcast %cst_27 : f32 to vector<1x128xf32>
      %376 = arith.mulf %374, %375 : vector<1x128xf32>
      %377 = math.exp %376 : vector<1x128xf32>
      %378 = arith.cmpf ole, %352, %369 : vector<1x128xf32>
      %379 = arith.mulf %371, %377 : vector<1x128xf32>
      %380 = arith.addf %363, %379 : vector<1x128xf32>
      %381 = arith.mulf %363, %377 : vector<1x128xf32>
      %382 = arith.addf %381, %371 : vector<1x128xf32>
      %383 = arith.select %378, %380, %382 : vector<1x128xi1>, vector<1x128xf32>
      %c16_i32_108 = arith.constant 16 : i32
      %384 = tpu.dynamic_rotate %372 by %c16_i32_108 dim 1 : vector<1x128xf32>, i32 -> vector<1x128xf32>
      %c16_i32_109 = arith.constant 16 : i32
      %385 = tpu.dynamic_rotate %383 by %c16_i32_109 dim 1 : vector<1x128xf32>, i32 -> vector<1x128xf32>
      %c16_i32_110 = arith.constant 16 : i32
      %386 = vector.broadcast %c16_i32_110 : i32 to vector<1x128xi32>
      %387 = arith.cmpi sge, %21, %386 : vector<1x128xi32>
      %388 = vector.broadcast %cst_26 : f32 to vector<1x128xf32>
      %389 = arith.select %387, %384, %388 : vector<1x128xi1>, vector<1x128xf32>
      %cst_111 = arith.constant 0.000000e+00 : f32
      %390 = vector.broadcast %cst_111 : f32 to vector<1x128xf32>
      %391 = arith.select %387, %385, %390 : vector<1x128xi1>, vector<1x128xf32>
      %392 = arith.minimumf %372, %389 : vector<1x128xf32>
      %393 = arith.maximumf %372, %389 : vector<1x128xf32>
      %394 = arith.subf %392, %393 : vector<1x128xf32>
      %395 = vector.broadcast %cst_27 : f32 to vector<1x128xf32>
      %396 = arith.mulf %394, %395 : vector<1x128xf32>
      %397 = math.exp %396 : vector<1x128xf32>
      %398 = arith.cmpf ole, %372, %389 : vector<1x128xf32>
      %399 = arith.mulf %391, %397 : vector<1x128xf32>
      %400 = arith.addf %383, %399 : vector<1x128xf32>
      %401 = arith.mulf %383, %397 : vector<1x128xf32>
      %402 = arith.addf %401, %391 : vector<1x128xf32>
      %403 = arith.select %398, %400, %402 : vector<1x128xi1>, vector<1x128xf32>
      %c1_i32_112 = arith.constant 1 : i32
      %404 = tpu.dynamic_rotate %392 by %c1_i32_112 dim 1 : vector<1x128xf32>, i32 -> vector<1x128xf32>
      %c1_i32_113 = arith.constant 1 : i32
      %405 = tpu.dynamic_rotate %403 by %c1_i32_113 dim 1 : vector<1x128xf32>, i32 -> vector<1x128xf32>
      %406 = arith.select %39, %392, %404 : vector<1x128xi1>, vector<1x128xf32>
      %407 = arith.select %39, %403, %405 : vector<1x128xi1>, vector<1x128xf32>
      %408 = math.log %407 : vector<1x128xf32>
      %409 = vector.broadcast %cst_28 : f32 to vector<1x128xf32>
      %410 = arith.mulf %409, %408 : vector<1x128xf32>
      %411 = arith.subf %406, %410 : vector<1x128xf32>
      %c0_114 = arith.constant 0 : index
      %412 = arith.index_cast %c3_i32 : i32 to index
      %c0_115 = arith.constant 0 : index
      %413 = vector.load %arg5[%c0_114, %412, %c0_115] : memref<1x8x128xf32, #tpu.memory_space<vmem>>, vector<1x1x128xf32>
      %414 = vector.shape_cast %413 : vector<1x1x128xf32> to vector<1x128xf32>
      %415 = arith.addf %411, %414 : vector<1x128xf32>
      %c4_i32_116 = arith.constant 4 : i32
      %cst_117 = arith.constant 1.000000e+00 : f32
      %416 = vector.broadcast %cst_117 : f32 to vector<1x128xf32>
      %c1_i32_118 = arith.constant 1 : i32
      %417 = tpu.dynamic_rotate %415 by %c1_i32_118 dim 1 : vector<1x128xf32>, i32 -> vector<1x128xf32>
      %c1_i32_119 = arith.constant 1 : i32
      %418 = tpu.dynamic_rotate %416 by %c1_i32_119 dim 1 : vector<1x128xf32>, i32 -> vector<1x128xf32>
      %c1_i32_120 = arith.constant 1 : i32
      %419 = vector.broadcast %c1_i32_120 : i32 to vector<1x128xi32>
      %420 = arith.cmpi sge, %21, %419 : vector<1x128xi32>
      %421 = vector.broadcast %cst_26 : f32 to vector<1x128xf32>
      %422 = arith.select %420, %417, %421 : vector<1x128xi1>, vector<1x128xf32>
      %cst_121 = arith.constant 0.000000e+00 : f32
      %423 = vector.broadcast %cst_121 : f32 to vector<1x128xf32>
      %424 = arith.select %420, %418, %423 : vector<1x128xi1>, vector<1x128xf32>
      %425 = arith.minimumf %415, %422 : vector<1x128xf32>
      %426 = arith.maximumf %415, %422 : vector<1x128xf32>
      %427 = arith.subf %425, %426 : vector<1x128xf32>
      %428 = vector.broadcast %cst_27 : f32 to vector<1x128xf32>
      %429 = arith.mulf %427, %428 : vector<1x128xf32>
      %430 = math.exp %429 : vector<1x128xf32>
      %431 = arith.cmpf ole, %415, %422 : vector<1x128xf32>
      %432 = arith.mulf %424, %430 : vector<1x128xf32>
      %433 = arith.addf %416, %432 : vector<1x128xf32>
      %434 = arith.mulf %416, %430 : vector<1x128xf32>
      %435 = arith.addf %434, %424 : vector<1x128xf32>
      %436 = arith.select %431, %433, %435 : vector<1x128xi1>, vector<1x128xf32>
      %c2_i32_122 = arith.constant 2 : i32
      %437 = tpu.dynamic_rotate %425 by %c2_i32_122 dim 1 : vector<1x128xf32>, i32 -> vector<1x128xf32>
      %c2_i32_123 = arith.constant 2 : i32
      %438 = tpu.dynamic_rotate %436 by %c2_i32_123 dim 1 : vector<1x128xf32>, i32 -> vector<1x128xf32>
      %c2_i32_124 = arith.constant 2 : i32
      %439 = vector.broadcast %c2_i32_124 : i32 to vector<1x128xi32>
      %440 = arith.cmpi sge, %21, %439 : vector<1x128xi32>
      %441 = vector.broadcast %cst_26 : f32 to vector<1x128xf32>
      %442 = arith.select %440, %437, %441 : vector<1x128xi1>, vector<1x128xf32>
      %cst_125 = arith.constant 0.000000e+00 : f32
      %443 = vector.broadcast %cst_125 : f32 to vector<1x128xf32>
      %444 = arith.select %440, %438, %443 : vector<1x128xi1>, vector<1x128xf32>
      %445 = arith.minimumf %425, %442 : vector<1x128xf32>
      %446 = arith.maximumf %425, %442 : vector<1x128xf32>
      %447 = arith.subf %445, %446 : vector<1x128xf32>
      %448 = vector.broadcast %cst_27 : f32 to vector<1x128xf32>
      %449 = arith.mulf %447, %448 : vector<1x128xf32>
      %450 = math.exp %449 : vector<1x128xf32>
      %451 = arith.cmpf ole, %425, %442 : vector<1x128xf32>
      %452 = arith.mulf %444, %450 : vector<1x128xf32>
      %453 = arith.addf %436, %452 : vector<1x128xf32>
      %454 = arith.mulf %436, %450 : vector<1x128xf32>
      %455 = arith.addf %454, %444 : vector<1x128xf32>
      %456 = arith.select %451, %453, %455 : vector<1x128xi1>, vector<1x128xf32>
      %c4_i32_126 = arith.constant 4 : i32
      %457 = tpu.dynamic_rotate %445 by %c4_i32_126 dim 1 : vector<1x128xf32>, i32 -> vector<1x128xf32>
      %c4_i32_127 = arith.constant 4 : i32
      %458 = tpu.dynamic_rotate %456 by %c4_i32_127 dim 1 : vector<1x128xf32>, i32 -> vector<1x128xf32>
      %c4_i32_128 = arith.constant 4 : i32
      %459 = vector.broadcast %c4_i32_128 : i32 to vector<1x128xi32>
      %460 = arith.cmpi sge, %21, %459 : vector<1x128xi32>
      %461 = vector.broadcast %cst_26 : f32 to vector<1x128xf32>
      %462 = arith.select %460, %457, %461 : vector<1x128xi1>, vector<1x128xf32>
      %cst_129 = arith.constant 0.000000e+00 : f32
      %463 = vector.broadcast %cst_129 : f32 to vector<1x128xf32>
      %464 = arith.select %460, %458, %463 : vector<1x128xi1>, vector<1x128xf32>
      %465 = arith.minimumf %445, %462 : vector<1x128xf32>
      %466 = arith.maximumf %445, %462 : vector<1x128xf32>
      %467 = arith.subf %465, %466 : vector<1x128xf32>
      %468 = vector.broadcast %cst_27 : f32 to vector<1x128xf32>
      %469 = arith.mulf %467, %468 : vector<1x128xf32>
      %470 = math.exp %469 : vector<1x128xf32>
      %471 = arith.cmpf ole, %445, %462 : vector<1x128xf32>
      %472 = arith.mulf %464, %470 : vector<1x128xf32>
      %473 = arith.addf %456, %472 : vector<1x128xf32>
      %474 = arith.mulf %456, %470 : vector<1x128xf32>
      %475 = arith.addf %474, %464 : vector<1x128xf32>
      %476 = arith.select %471, %473, %475 : vector<1x128xi1>, vector<1x128xf32>
      %c8_i32_130 = arith.constant 8 : i32
      %477 = tpu.dynamic_rotate %465 by %c8_i32_130 dim 1 : vector<1x128xf32>, i32 -> vector<1x128xf32>
      %c8_i32_131 = arith.constant 8 : i32
      %478 = tpu.dynamic_rotate %476 by %c8_i32_131 dim 1 : vector<1x128xf32>, i32 -> vector<1x128xf32>
      %c8_i32_132 = arith.constant 8 : i32
      %479 = vector.broadcast %c8_i32_132 : i32 to vector<1x128xi32>
      %480 = arith.cmpi sge, %21, %479 : vector<1x128xi32>
      %481 = vector.broadcast %cst_26 : f32 to vector<1x128xf32>
      %482 = arith.select %480, %477, %481 : vector<1x128xi1>, vector<1x128xf32>
      %cst_133 = arith.constant 0.000000e+00 : f32
      %483 = vector.broadcast %cst_133 : f32 to vector<1x128xf32>
      %484 = arith.select %480, %478, %483 : vector<1x128xi1>, vector<1x128xf32>
      %485 = arith.minimumf %465, %482 : vector<1x128xf32>
      %486 = arith.maximumf %465, %482 : vector<1x128xf32>
      %487 = arith.subf %485, %486 : vector<1x128xf32>
      %488 = vector.broadcast %cst_27 : f32 to vector<1x128xf32>
      %489 = arith.mulf %487, %488 : vector<1x128xf32>
      %490 = math.exp %489 : vector<1x128xf32>
      %491 = arith.cmpf ole, %465, %482 : vector<1x128xf32>
      %492 = arith.mulf %484, %490 : vector<1x128xf32>
      %493 = arith.addf %476, %492 : vector<1x128xf32>
      %494 = arith.mulf %476, %490 : vector<1x128xf32>
      %495 = arith.addf %494, %484 : vector<1x128xf32>
      %496 = arith.select %491, %493, %495 : vector<1x128xi1>, vector<1x128xf32>
      %c16_i32_134 = arith.constant 16 : i32
      %497 = tpu.dynamic_rotate %485 by %c16_i32_134 dim 1 : vector<1x128xf32>, i32 -> vector<1x128xf32>
      %c16_i32_135 = arith.constant 16 : i32
      %498 = tpu.dynamic_rotate %496 by %c16_i32_135 dim 1 : vector<1x128xf32>, i32 -> vector<1x128xf32>
      %c16_i32_136 = arith.constant 16 : i32
      %499 = vector.broadcast %c16_i32_136 : i32 to vector<1x128xi32>
      %500 = arith.cmpi sge, %21, %499 : vector<1x128xi32>
      %501 = vector.broadcast %cst_26 : f32 to vector<1x128xf32>
      %502 = arith.select %500, %497, %501 : vector<1x128xi1>, vector<1x128xf32>
      %cst_137 = arith.constant 0.000000e+00 : f32
      %503 = vector.broadcast %cst_137 : f32 to vector<1x128xf32>
      %504 = arith.select %500, %498, %503 : vector<1x128xi1>, vector<1x128xf32>
      %505 = arith.minimumf %485, %502 : vector<1x128xf32>
      %506 = arith.maximumf %485, %502 : vector<1x128xf32>
      %507 = arith.subf %505, %506 : vector<1x128xf32>
      %508 = vector.broadcast %cst_27 : f32 to vector<1x128xf32>
      %509 = arith.mulf %507, %508 : vector<1x128xf32>
      %510 = math.exp %509 : vector<1x128xf32>
      %511 = arith.cmpf ole, %485, %502 : vector<1x128xf32>
      %512 = arith.mulf %504, %510 : vector<1x128xf32>
      %513 = arith.addf %496, %512 : vector<1x128xf32>
      %514 = arith.mulf %496, %510 : vector<1x128xf32>
      %515 = arith.addf %514, %504 : vector<1x128xf32>
      %516 = arith.select %511, %513, %515 : vector<1x128xi1>, vector<1x128xf32>
      %c1_i32_138 = arith.constant 1 : i32
      %517 = tpu.dynamic_rotate %505 by %c1_i32_138 dim 1 : vector<1x128xf32>, i32 -> vector<1x128xf32>
      %c1_i32_139 = arith.constant 1 : i32
      %518 = tpu.dynamic_rotate %516 by %c1_i32_139 dim 1 : vector<1x128xf32>, i32 -> vector<1x128xf32>
      %519 = arith.select %39, %505, %517 : vector<1x128xi1>, vector<1x128xf32>
      %520 = arith.select %39, %516, %518 : vector<1x128xi1>, vector<1x128xf32>
      %521 = math.log %520 : vector<1x128xf32>
      %522 = vector.broadcast %cst_28 : f32 to vector<1x128xf32>
      %523 = arith.mulf %522, %521 : vector<1x128xf32>
      %524 = arith.subf %519, %523 : vector<1x128xf32>
      %c0_140 = arith.constant 0 : index
      %525 = arith.index_cast %c4_i32_116 : i32 to index
      %c0_141 = arith.constant 0 : index
      %526 = vector.load %arg5[%c0_140, %525, %c0_141] : memref<1x8x128xf32, #tpu.memory_space<vmem>>, vector<1x1x128xf32>
      %527 = vector.shape_cast %526 : vector<1x1x128xf32> to vector<1x128xf32>
      %528 = arith.addf %524, %527 : vector<1x128xf32>
      %c5_i32 = arith.constant 5 : i32
      %cst_142 = arith.constant 1.000000e+00 : f32
      %529 = vector.broadcast %cst_142 : f32 to vector<1x128xf32>
      %c1_i32_143 = arith.constant 1 : i32
      %530 = tpu.dynamic_rotate %528 by %c1_i32_143 dim 1 : vector<1x128xf32>, i32 -> vector<1x128xf32>
      %c1_i32_144 = arith.constant 1 : i32
      %531 = tpu.dynamic_rotate %529 by %c1_i32_144 dim 1 : vector<1x128xf32>, i32 -> vector<1x128xf32>
      %c1_i32_145 = arith.constant 1 : i32
      %532 = vector.broadcast %c1_i32_145 : i32 to vector<1x128xi32>
      %533 = arith.cmpi sge, %21, %532 : vector<1x128xi32>
      %534 = vector.broadcast %cst_26 : f32 to vector<1x128xf32>
      %535 = arith.select %533, %530, %534 : vector<1x128xi1>, vector<1x128xf32>
      %cst_146 = arith.constant 0.000000e+00 : f32
      %536 = vector.broadcast %cst_146 : f32 to vector<1x128xf32>
      %537 = arith.select %533, %531, %536 : vector<1x128xi1>, vector<1x128xf32>
      %538 = arith.minimumf %528, %535 : vector<1x128xf32>
      %539 = arith.maximumf %528, %535 : vector<1x128xf32>
      %540 = arith.subf %538, %539 : vector<1x128xf32>
      %541 = vector.broadcast %cst_27 : f32 to vector<1x128xf32>
      %542 = arith.mulf %540, %541 : vector<1x128xf32>
      %543 = math.exp %542 : vector<1x128xf32>
      %544 = arith.cmpf ole, %528, %535 : vector<1x128xf32>
      %545 = arith.mulf %537, %543 : vector<1x128xf32>
      %546 = arith.addf %529, %545 : vector<1x128xf32>
      %547 = arith.mulf %529, %543 : vector<1x128xf32>
      %548 = arith.addf %547, %537 : vector<1x128xf32>
      %549 = arith.select %544, %546, %548 : vector<1x128xi1>, vector<1x128xf32>
      %c2_i32_147 = arith.constant 2 : i32
      %550 = tpu.dynamic_rotate %538 by %c2_i32_147 dim 1 : vector<1x128xf32>, i32 -> vector<1x128xf32>
      %c2_i32_148 = arith.constant 2 : i32
      %551 = tpu.dynamic_rotate %549 by %c2_i32_148 dim 1 : vector<1x128xf32>, i32 -> vector<1x128xf32>
      %c2_i32_149 = arith.constant 2 : i32
      %552 = vector.broadcast %c2_i32_149 : i32 to vector<1x128xi32>
      %553 = arith.cmpi sge, %21, %552 : vector<1x128xi32>
      %554 = vector.broadcast %cst_26 : f32 to vector<1x128xf32>
      %555 = arith.select %553, %550, %554 : vector<1x128xi1>, vector<1x128xf32>
      %cst_150 = arith.constant 0.000000e+00 : f32
      %556 = vector.broadcast %cst_150 : f32 to vector<1x128xf32>
      %557 = arith.select %553, %551, %556 : vector<1x128xi1>, vector<1x128xf32>
      %558 = arith.minimumf %538, %555 : vector<1x128xf32>
      %559 = arith.maximumf %538, %555 : vector<1x128xf32>
      %560 = arith.subf %558, %559 : vector<1x128xf32>
      %561 = vector.broadcast %cst_27 : f32 to vector<1x128xf32>
      %562 = arith.mulf %560, %561 : vector<1x128xf32>
      %563 = math.exp %562 : vector<1x128xf32>
      %564 = arith.cmpf ole, %538, %555 : vector<1x128xf32>
      %565 = arith.mulf %557, %563 : vector<1x128xf32>
      %566 = arith.addf %549, %565 : vector<1x128xf32>
      %567 = arith.mulf %549, %563 : vector<1x128xf32>
      %568 = arith.addf %567, %557 : vector<1x128xf32>
      %569 = arith.select %564, %566, %568 : vector<1x128xi1>, vector<1x128xf32>
      %c4_i32_151 = arith.constant 4 : i32
      %570 = tpu.dynamic_rotate %558 by %c4_i32_151 dim 1 : vector<1x128xf32>, i32 -> vector<1x128xf32>
      %c4_i32_152 = arith.constant 4 : i32
      %571 = tpu.dynamic_rotate %569 by %c4_i32_152 dim 1 : vector<1x128xf32>, i32 -> vector<1x128xf32>
      %c4_i32_153 = arith.constant 4 : i32
      %572 = vector.broadcast %c4_i32_153 : i32 to vector<1x128xi32>
      %573 = arith.cmpi sge, %21, %572 : vector<1x128xi32>
      %574 = vector.broadcast %cst_26 : f32 to vector<1x128xf32>
      %575 = arith.select %573, %570, %574 : vector<1x128xi1>, vector<1x128xf32>
      %cst_154 = arith.constant 0.000000e+00 : f32
      %576 = vector.broadcast %cst_154 : f32 to vector<1x128xf32>
      %577 = arith.select %573, %571, %576 : vector<1x128xi1>, vector<1x128xf32>
      %578 = arith.minimumf %558, %575 : vector<1x128xf32>
      %579 = arith.maximumf %558, %575 : vector<1x128xf32>
      %580 = arith.subf %578, %579 : vector<1x128xf32>
      %581 = vector.broadcast %cst_27 : f32 to vector<1x128xf32>
      %582 = arith.mulf %580, %581 : vector<1x128xf32>
      %583 = math.exp %582 : vector<1x128xf32>
      %584 = arith.cmpf ole, %558, %575 : vector<1x128xf32>
      %585 = arith.mulf %577, %583 : vector<1x128xf32>
      %586 = arith.addf %569, %585 : vector<1x128xf32>
      %587 = arith.mulf %569, %583 : vector<1x128xf32>
      %588 = arith.addf %587, %577 : vector<1x128xf32>
      %589 = arith.select %584, %586, %588 : vector<1x128xi1>, vector<1x128xf32>
      %c8_i32_155 = arith.constant 8 : i32
      %590 = tpu.dynamic_rotate %578 by %c8_i32_155 dim 1 : vector<1x128xf32>, i32 -> vector<1x128xf32>
      %c8_i32_156 = arith.constant 8 : i32
      %591 = tpu.dynamic_rotate %589 by %c8_i32_156 dim 1 : vector<1x128xf32>, i32 -> vector<1x128xf32>
      %c8_i32_157 = arith.constant 8 : i32
      %592 = vector.broadcast %c8_i32_157 : i32 to vector<1x128xi32>
      %593 = arith.cmpi sge, %21, %592 : vector<1x128xi32>
      %594 = vector.broadcast %cst_26 : f32 to vector<1x128xf32>
      %595 = arith.select %593, %590, %594 : vector<1x128xi1>, vector<1x128xf32>
      %cst_158 = arith.constant 0.000000e+00 : f32
      %596 = vector.broadcast %cst_158 : f32 to vector<1x128xf32>
      %597 = arith.select %593, %591, %596 : vector<1x128xi1>, vector<1x128xf32>
      %598 = arith.minimumf %578, %595 : vector<1x128xf32>
      %599 = arith.maximumf %578, %595 : vector<1x128xf32>
      %600 = arith.subf %598, %599 : vector<1x128xf32>
      %601 = vector.broadcast %cst_27 : f32 to vector<1x128xf32>
      %602 = arith.mulf %600, %601 : vector<1x128xf32>
      %603 = math.exp %602 : vector<1x128xf32>
      %604 = arith.cmpf ole, %578, %595 : vector<1x128xf32>
      %605 = arith.mulf %597, %603 : vector<1x128xf32>
      %606 = arith.addf %589, %605 : vector<1x128xf32>
      %607 = arith.mulf %589, %603 : vector<1x128xf32>
      %608 = arith.addf %607, %597 : vector<1x128xf32>
      %609 = arith.select %604, %606, %608 : vector<1x128xi1>, vector<1x128xf32>
      %c16_i32_159 = arith.constant 16 : i32
      %610 = tpu.dynamic_rotate %598 by %c16_i32_159 dim 1 : vector<1x128xf32>, i32 -> vector<1x128xf32>
      %c16_i32_160 = arith.constant 16 : i32
      %611 = tpu.dynamic_rotate %609 by %c16_i32_160 dim 1 : vector<1x128xf32>, i32 -> vector<1x128xf32>
      %c16_i32_161 = arith.constant 16 : i32
      %612 = vector.broadcast %c16_i32_161 : i32 to vector<1x128xi32>
      %613 = arith.cmpi sge, %21, %612 : vector<1x128xi32>
      %614 = vector.broadcast %cst_26 : f32 to vector<1x128xf32>
      %615 = arith.select %613, %610, %614 : vector<1x128xi1>, vector<1x128xf32>
      %cst_162 = arith.constant 0.000000e+00 : f32
      %616 = vector.broadcast %cst_162 : f32 to vector<1x128xf32>
      %617 = arith.select %613, %611, %616 : vector<1x128xi1>, vector<1x128xf32>
      %618 = arith.minimumf %598, %615 : vector<1x128xf32>
      %619 = arith.maximumf %598, %615 : vector<1x128xf32>
      %620 = arith.subf %618, %619 : vector<1x128xf32>
      %621 = vector.broadcast %cst_27 : f32 to vector<1x128xf32>
      %622 = arith.mulf %620, %621 : vector<1x128xf32>
      %623 = math.exp %622 : vector<1x128xf32>
      %624 = arith.cmpf ole, %598, %615 : vector<1x128xf32>
      %625 = arith.mulf %617, %623 : vector<1x128xf32>
      %626 = arith.addf %609, %625 : vector<1x128xf32>
      %627 = arith.mulf %609, %623 : vector<1x128xf32>
      %628 = arith.addf %627, %617 : vector<1x128xf32>
      %629 = arith.select %624, %626, %628 : vector<1x128xi1>, vector<1x128xf32>
      %c1_i32_163 = arith.constant 1 : i32
      %630 = tpu.dynamic_rotate %618 by %c1_i32_163 dim 1 : vector<1x128xf32>, i32 -> vector<1x128xf32>
      %c1_i32_164 = arith.constant 1 : i32
      %631 = tpu.dynamic_rotate %629 by %c1_i32_164 dim 1 : vector<1x128xf32>, i32 -> vector<1x128xf32>
      %632 = arith.select %39, %618, %630 : vector<1x128xi1>, vector<1x128xf32>
      %633 = arith.select %39, %629, %631 : vector<1x128xi1>, vector<1x128xf32>
      %634 = math.log %633 : vector<1x128xf32>
      %635 = vector.broadcast %cst_28 : f32 to vector<1x128xf32>
      %636 = arith.mulf %635, %634 : vector<1x128xf32>
      %637 = arith.subf %632, %636 : vector<1x128xf32>
      %c0_165 = arith.constant 0 : index
      %638 = arith.index_cast %c5_i32 : i32 to index
      %c0_166 = arith.constant 0 : index
      %639 = vector.load %arg5[%c0_165, %638, %c0_166] : memref<1x8x128xf32, #tpu.memory_space<vmem>>, vector<1x1x128xf32>
      %640 = vector.shape_cast %639 : vector<1x1x128xf32> to vector<1x128xf32>
      %641 = arith.addf %637, %640 : vector<1x128xf32>
      %c6_i32 = arith.constant 6 : i32
      %cst_167 = arith.constant 1.000000e+00 : f32
      %642 = vector.broadcast %cst_167 : f32 to vector<1x128xf32>
      %c1_i32_168 = arith.constant 1 : i32
      %643 = tpu.dynamic_rotate %641 by %c1_i32_168 dim 1 : vector<1x128xf32>, i32 -> vector<1x128xf32>
      %c1_i32_169 = arith.constant 1 : i32
      %644 = tpu.dynamic_rotate %642 by %c1_i32_169 dim 1 : vector<1x128xf32>, i32 -> vector<1x128xf32>
      %c1_i32_170 = arith.constant 1 : i32
      %645 = vector.broadcast %c1_i32_170 : i32 to vector<1x128xi32>
      %646 = arith.cmpi sge, %21, %645 : vector<1x128xi32>
      %647 = vector.broadcast %cst_26 : f32 to vector<1x128xf32>
      %648 = arith.select %646, %643, %647 : vector<1x128xi1>, vector<1x128xf32>
      %cst_171 = arith.constant 0.000000e+00 : f32
      %649 = vector.broadcast %cst_171 : f32 to vector<1x128xf32>
      %650 = arith.select %646, %644, %649 : vector<1x128xi1>, vector<1x128xf32>
      %651 = arith.minimumf %641, %648 : vector<1x128xf32>
      %652 = arith.maximumf %641, %648 : vector<1x128xf32>
      %653 = arith.subf %651, %652 : vector<1x128xf32>
      %654 = vector.broadcast %cst_27 : f32 to vector<1x128xf32>
      %655 = arith.mulf %653, %654 : vector<1x128xf32>
      %656 = math.exp %655 : vector<1x128xf32>
      %657 = arith.cmpf ole, %641, %648 : vector<1x128xf32>
      %658 = arith.mulf %650, %656 : vector<1x128xf32>
      %659 = arith.addf %642, %658 : vector<1x128xf32>
      %660 = arith.mulf %642, %656 : vector<1x128xf32>
      %661 = arith.addf %660, %650 : vector<1x128xf32>
      %662 = arith.select %657, %659, %661 : vector<1x128xi1>, vector<1x128xf32>
      %c2_i32_172 = arith.constant 2 : i32
      %663 = tpu.dynamic_rotate %651 by %c2_i32_172 dim 1 : vector<1x128xf32>, i32 -> vector<1x128xf32>
      %c2_i32_173 = arith.constant 2 : i32
      %664 = tpu.dynamic_rotate %662 by %c2_i32_173 dim 1 : vector<1x128xf32>, i32 -> vector<1x128xf32>
      %c2_i32_174 = arith.constant 2 : i32
      %665 = vector.broadcast %c2_i32_174 : i32 to vector<1x128xi32>
      %666 = arith.cmpi sge, %21, %665 : vector<1x128xi32>
      %667 = vector.broadcast %cst_26 : f32 to vector<1x128xf32>
      %668 = arith.select %666, %663, %667 : vector<1x128xi1>, vector<1x128xf32>
      %cst_175 = arith.constant 0.000000e+00 : f32
      %669 = vector.broadcast %cst_175 : f32 to vector<1x128xf32>
      %670 = arith.select %666, %664, %669 : vector<1x128xi1>, vector<1x128xf32>
      %671 = arith.minimumf %651, %668 : vector<1x128xf32>
      %672 = arith.maximumf %651, %668 : vector<1x128xf32>
      %673 = arith.subf %671, %672 : vector<1x128xf32>
      %674 = vector.broadcast %cst_27 : f32 to vector<1x128xf32>
      %675 = arith.mulf %673, %674 : vector<1x128xf32>
      %676 = math.exp %675 : vector<1x128xf32>
      %677 = arith.cmpf ole, %651, %668 : vector<1x128xf32>
      %678 = arith.mulf %670, %676 : vector<1x128xf32>
      %679 = arith.addf %662, %678 : vector<1x128xf32>
      %680 = arith.mulf %662, %676 : vector<1x128xf32>
      %681 = arith.addf %680, %670 : vector<1x128xf32>
      %682 = arith.select %677, %679, %681 : vector<1x128xi1>, vector<1x128xf32>
      %c4_i32_176 = arith.constant 4 : i32
      %683 = tpu.dynamic_rotate %671 by %c4_i32_176 dim 1 : vector<1x128xf32>, i32 -> vector<1x128xf32>
      %c4_i32_177 = arith.constant 4 : i32
      %684 = tpu.dynamic_rotate %682 by %c4_i32_177 dim 1 : vector<1x128xf32>, i32 -> vector<1x128xf32>
      %c4_i32_178 = arith.constant 4 : i32
      %685 = vector.broadcast %c4_i32_178 : i32 to vector<1x128xi32>
      %686 = arith.cmpi sge, %21, %685 : vector<1x128xi32>
      %687 = vector.broadcast %cst_26 : f32 to vector<1x128xf32>
      %688 = arith.select %686, %683, %687 : vector<1x128xi1>, vector<1x128xf32>
      %cst_179 = arith.constant 0.000000e+00 : f32
      %689 = vector.broadcast %cst_179 : f32 to vector<1x128xf32>
      %690 = arith.select %686, %684, %689 : vector<1x128xi1>, vector<1x128xf32>
      %691 = arith.minimumf %671, %688 : vector<1x128xf32>
      %692 = arith.maximumf %671, %688 : vector<1x128xf32>
      %693 = arith.subf %691, %692 : vector<1x128xf32>
      %694 = vector.broadcast %cst_27 : f32 to vector<1x128xf32>
      %695 = arith.mulf %693, %694 : vector<1x128xf32>
      %696 = math.exp %695 : vector<1x128xf32>
      %697 = arith.cmpf ole, %671, %688 : vector<1x128xf32>
      %698 = arith.mulf %690, %696 : vector<1x128xf32>
      %699 = arith.addf %682, %698 : vector<1x128xf32>
      %700 = arith.mulf %682, %696 : vector<1x128xf32>
      %701 = arith.addf %700, %690 : vector<1x128xf32>
      %702 = arith.select %697, %699, %701 : vector<1x128xi1>, vector<1x128xf32>
      %c8_i32_180 = arith.constant 8 : i32
      %703 = tpu.dynamic_rotate %691 by %c8_i32_180 dim 1 : vector<1x128xf32>, i32 -> vector<1x128xf32>
      %c8_i32_181 = arith.constant 8 : i32
      %704 = tpu.dynamic_rotate %702 by %c8_i32_181 dim 1 : vector<1x128xf32>, i32 -> vector<1x128xf32>
      %c8_i32_182 = arith.constant 8 : i32
      %705 = vector.broadcast %c8_i32_182 : i32 to vector<1x128xi32>
      %706 = arith.cmpi sge, %21, %705 : vector<1x128xi32>
      %707 = vector.broadcast %cst_26 : f32 to vector<1x128xf32>
      %708 = arith.select %706, %703, %707 : vector<1x128xi1>, vector<1x128xf32>
      %cst_183 = arith.constant 0.000000e+00 : f32
      %709 = vector.broadcast %cst_183 : f32 to vector<1x128xf32>
      %710 = arith.select %706, %704, %709 : vector<1x128xi1>, vector<1x128xf32>
      %711 = arith.minimumf %691, %708 : vector<1x128xf32>
      %712 = arith.maximumf %691, %708 : vector<1x128xf32>
      %713 = arith.subf %711, %712 : vector<1x128xf32>
      %714 = vector.broadcast %cst_27 : f32 to vector<1x128xf32>
      %715 = arith.mulf %713, %714 : vector<1x128xf32>
      %716 = math.exp %715 : vector<1x128xf32>
      %717 = arith.cmpf ole, %691, %708 : vector<1x128xf32>
      %718 = arith.mulf %710, %716 : vector<1x128xf32>
      %719 = arith.addf %702, %718 : vector<1x128xf32>
      %720 = arith.mulf %702, %716 : vector<1x128xf32>
      %721 = arith.addf %720, %710 : vector<1x128xf32>
      %722 = arith.select %717, %719, %721 : vector<1x128xi1>, vector<1x128xf32>
      %c16_i32_184 = arith.constant 16 : i32
      %723 = tpu.dynamic_rotate %711 by %c16_i32_184 dim 1 : vector<1x128xf32>, i32 -> vector<1x128xf32>
      %c16_i32_185 = arith.constant 16 : i32
      %724 = tpu.dynamic_rotate %722 by %c16_i32_185 dim 1 : vector<1x128xf32>, i32 -> vector<1x128xf32>
      %c16_i32_186 = arith.constant 16 : i32
      %725 = vector.broadcast %c16_i32_186 : i32 to vector<1x128xi32>
      %726 = arith.cmpi sge, %21, %725 : vector<1x128xi32>
      %727 = vector.broadcast %cst_26 : f32 to vector<1x128xf32>
      %728 = arith.select %726, %723, %727 : vector<1x128xi1>, vector<1x128xf32>
      %cst_187 = arith.constant 0.000000e+00 : f32
      %729 = vector.broadcast %cst_187 : f32 to vector<1x128xf32>
      %730 = arith.select %726, %724, %729 : vector<1x128xi1>, vector<1x128xf32>
      %731 = arith.minimumf %711, %728 : vector<1x128xf32>
      %732 = arith.maximumf %711, %728 : vector<1x128xf32>
      %733 = arith.subf %731, %732 : vector<1x128xf32>
      %734 = vector.broadcast %cst_27 : f32 to vector<1x128xf32>
      %735 = arith.mulf %733, %734 : vector<1x128xf32>
      %736 = math.exp %735 : vector<1x128xf32>
      %737 = arith.cmpf ole, %711, %728 : vector<1x128xf32>
      %738 = arith.mulf %730, %736 : vector<1x128xf32>
      %739 = arith.addf %722, %738 : vector<1x128xf32>
      %740 = arith.mulf %722, %736 : vector<1x128xf32>
      %741 = arith.addf %740, %730 : vector<1x128xf32>
      %742 = arith.select %737, %739, %741 : vector<1x128xi1>, vector<1x128xf32>
      %c1_i32_188 = arith.constant 1 : i32
      %743 = tpu.dynamic_rotate %731 by %c1_i32_188 dim 1 : vector<1x128xf32>, i32 -> vector<1x128xf32>
      %c1_i32_189 = arith.constant 1 : i32
      %744 = tpu.dynamic_rotate %742 by %c1_i32_189 dim 1 : vector<1x128xf32>, i32 -> vector<1x128xf32>
      %745 = arith.select %39, %731, %743 : vector<1x128xi1>, vector<1x128xf32>
      %746 = arith.select %39, %742, %744 : vector<1x128xi1>, vector<1x128xf32>
      %747 = math.log %746 : vector<1x128xf32>
      %748 = vector.broadcast %cst_28 : f32 to vector<1x128xf32>
      %749 = arith.mulf %748, %747 : vector<1x128xf32>
      %750 = arith.subf %745, %749 : vector<1x128xf32>
      %c0_190 = arith.constant 0 : index
      %751 = arith.index_cast %c6_i32 : i32 to index
      %c0_191 = arith.constant 0 : index
      %752 = vector.load %arg5[%c0_190, %751, %c0_191] : memref<1x8x128xf32, #tpu.memory_space<vmem>>, vector<1x1x128xf32>
      %753 = vector.shape_cast %752 : vector<1x1x128xf32> to vector<1x128xf32>
      %754 = arith.addf %750, %753 : vector<1x128xf32>
      %c7_i32 = arith.constant 7 : i32
      %cst_192 = arith.constant 1.000000e+00 : f32
      %755 = vector.broadcast %cst_192 : f32 to vector<1x128xf32>
      %c1_i32_193 = arith.constant 1 : i32
      %756 = tpu.dynamic_rotate %754 by %c1_i32_193 dim 1 : vector<1x128xf32>, i32 -> vector<1x128xf32>
      %c1_i32_194 = arith.constant 1 : i32
      %757 = tpu.dynamic_rotate %755 by %c1_i32_194 dim 1 : vector<1x128xf32>, i32 -> vector<1x128xf32>
      %c1_i32_195 = arith.constant 1 : i32
      %758 = vector.broadcast %c1_i32_195 : i32 to vector<1x128xi32>
      %759 = arith.cmpi sge, %21, %758 : vector<1x128xi32>
      %760 = vector.broadcast %cst_26 : f32 to vector<1x128xf32>
      %761 = arith.select %759, %756, %760 : vector<1x128xi1>, vector<1x128xf32>
      %cst_196 = arith.constant 0.000000e+00 : f32
      %762 = vector.broadcast %cst_196 : f32 to vector<1x128xf32>
      %763 = arith.select %759, %757, %762 : vector<1x128xi1>, vector<1x128xf32>
      %764 = arith.minimumf %754, %761 : vector<1x128xf32>
      %765 = arith.maximumf %754, %761 : vector<1x128xf32>
      %766 = arith.subf %764, %765 : vector<1x128xf32>
      %767 = vector.broadcast %cst_27 : f32 to vector<1x128xf32>
      %768 = arith.mulf %766, %767 : vector<1x128xf32>
      %769 = math.exp %768 : vector<1x128xf32>
      %770 = arith.cmpf ole, %754, %761 : vector<1x128xf32>
      %771 = arith.mulf %763, %769 : vector<1x128xf32>
      %772 = arith.addf %755, %771 : vector<1x128xf32>
      %773 = arith.mulf %755, %769 : vector<1x128xf32>
      %774 = arith.addf %773, %763 : vector<1x128xf32>
      %775 = arith.select %770, %772, %774 : vector<1x128xi1>, vector<1x128xf32>
      %c2_i32_197 = arith.constant 2 : i32
      %776 = tpu.dynamic_rotate %764 by %c2_i32_197 dim 1 : vector<1x128xf32>, i32 -> vector<1x128xf32>
      %c2_i32_198 = arith.constant 2 : i32
      %777 = tpu.dynamic_rotate %775 by %c2_i32_198 dim 1 : vector<1x128xf32>, i32 -> vector<1x128xf32>
      %c2_i32_199 = arith.constant 2 : i32
      %778 = vector.broadcast %c2_i32_199 : i32 to vector<1x128xi32>
      %779 = arith.cmpi sge, %21, %778 : vector<1x128xi32>
      %780 = vector.broadcast %cst_26 : f32 to vector<1x128xf32>
      %781 = arith.select %779, %776, %780 : vector<1x128xi1>, vector<1x128xf32>
      %cst_200 = arith.constant 0.000000e+00 : f32
      %782 = vector.broadcast %cst_200 : f32 to vector<1x128xf32>
      %783 = arith.select %779, %777, %782 : vector<1x128xi1>, vector<1x128xf32>
      %784 = arith.minimumf %764, %781 : vector<1x128xf32>
      %785 = arith.maximumf %764, %781 : vector<1x128xf32>
      %786 = arith.subf %784, %785 : vector<1x128xf32>
      %787 = vector.broadcast %cst_27 : f32 to vector<1x128xf32>
      %788 = arith.mulf %786, %787 : vector<1x128xf32>
      %789 = math.exp %788 : vector<1x128xf32>
      %790 = arith.cmpf ole, %764, %781 : vector<1x128xf32>
      %791 = arith.mulf %783, %789 : vector<1x128xf32>
      %792 = arith.addf %775, %791 : vector<1x128xf32>
      %793 = arith.mulf %775, %789 : vector<1x128xf32>
      %794 = arith.addf %793, %783 : vector<1x128xf32>
      %795 = arith.select %790, %792, %794 : vector<1x128xi1>, vector<1x128xf32>
      %c4_i32_201 = arith.constant 4 : i32
      %796 = tpu.dynamic_rotate %784 by %c4_i32_201 dim 1 : vector<1x128xf32>, i32 -> vector<1x128xf32>
      %c4_i32_202 = arith.constant 4 : i32
      %797 = tpu.dynamic_rotate %795 by %c4_i32_202 dim 1 : vector<1x128xf32>, i32 -> vector<1x128xf32>
      %c4_i32_203 = arith.constant 4 : i32
      %798 = vector.broadcast %c4_i32_203 : i32 to vector<1x128xi32>
      %799 = arith.cmpi sge, %21, %798 : vector<1x128xi32>
      %800 = vector.broadcast %cst_26 : f32 to vector<1x128xf32>
      %801 = arith.select %799, %796, %800 : vector<1x128xi1>, vector<1x128xf32>
      %cst_204 = arith.constant 0.000000e+00 : f32
      %802 = vector.broadcast %cst_204 : f32 to vector<1x128xf32>
      %803 = arith.select %799, %797, %802 : vector<1x128xi1>, vector<1x128xf32>
      %804 = arith.minimumf %784, %801 : vector<1x128xf32>
      %805 = arith.maximumf %784, %801 : vector<1x128xf32>
      %806 = arith.subf %804, %805 : vector<1x128xf32>
      %807 = vector.broadcast %cst_27 : f32 to vector<1x128xf32>
      %808 = arith.mulf %806, %807 : vector<1x128xf32>
      %809 = math.exp %808 : vector<1x128xf32>
      %810 = arith.cmpf ole, %784, %801 : vector<1x128xf32>
      %811 = arith.mulf %803, %809 : vector<1x128xf32>
      %812 = arith.addf %795, %811 : vector<1x128xf32>
      %813 = arith.mulf %795, %809 : vector<1x128xf32>
      %814 = arith.addf %813, %803 : vector<1x128xf32>
      %815 = arith.select %810, %812, %814 : vector<1x128xi1>, vector<1x128xf32>
      %c8_i32_205 = arith.constant 8 : i32
      %816 = tpu.dynamic_rotate %804 by %c8_i32_205 dim 1 : vector<1x128xf32>, i32 -> vector<1x128xf32>
      %c8_i32_206 = arith.constant 8 : i32
      %817 = tpu.dynamic_rotate %815 by %c8_i32_206 dim 1 : vector<1x128xf32>, i32 -> vector<1x128xf32>
      %c8_i32_207 = arith.constant 8 : i32
      %818 = vector.broadcast %c8_i32_207 : i32 to vector<1x128xi32>
      %819 = arith.cmpi sge, %21, %818 : vector<1x128xi32>
      %820 = vector.broadcast %cst_26 : f32 to vector<1x128xf32>
      %821 = arith.select %819, %816, %820 : vector<1x128xi1>, vector<1x128xf32>
      %cst_208 = arith.constant 0.000000e+00 : f32
      %822 = vector.broadcast %cst_208 : f32 to vector<1x128xf32>
      %823 = arith.select %819, %817, %822 : vector<1x128xi1>, vector<1x128xf32>
      %824 = arith.minimumf %804, %821 : vector<1x128xf32>
      %825 = arith.maximumf %804, %821 : vector<1x128xf32>
      %826 = arith.subf %824, %825 : vector<1x128xf32>
      %827 = vector.broadcast %cst_27 : f32 to vector<1x128xf32>
      %828 = arith.mulf %826, %827 : vector<1x128xf32>
      %829 = math.exp %828 : vector<1x128xf32>
      %830 = arith.cmpf ole, %804, %821 : vector<1x128xf32>
      %831 = arith.mulf %823, %829 : vector<1x128xf32>
      %832 = arith.addf %815, %831 : vector<1x128xf32>
      %833 = arith.mulf %815, %829 : vector<1x128xf32>
      %834 = arith.addf %833, %823 : vector<1x128xf32>
      %835 = arith.select %830, %832, %834 : vector<1x128xi1>, vector<1x128xf32>
      %c16_i32_209 = arith.constant 16 : i32
      %836 = tpu.dynamic_rotate %824 by %c16_i32_209 dim 1 : vector<1x128xf32>, i32 -> vector<1x128xf32>
      %c16_i32_210 = arith.constant 16 : i32
      %837 = tpu.dynamic_rotate %835 by %c16_i32_210 dim 1 : vector<1x128xf32>, i32 -> vector<1x128xf32>
      %c16_i32_211 = arith.constant 16 : i32
      %838 = vector.broadcast %c16_i32_211 : i32 to vector<1x128xi32>
      %839 = arith.cmpi sge, %21, %838 : vector<1x128xi32>
      %840 = vector.broadcast %cst_26 : f32 to vector<1x128xf32>
      %841 = arith.select %839, %836, %840 : vector<1x128xi1>, vector<1x128xf32>
      %cst_212 = arith.constant 0.000000e+00 : f32
      %842 = vector.broadcast %cst_212 : f32 to vector<1x128xf32>
      %843 = arith.select %839, %837, %842 : vector<1x128xi1>, vector<1x128xf32>
      %844 = arith.minimumf %824, %841 : vector<1x128xf32>
      %845 = arith.maximumf %824, %841 : vector<1x128xf32>
      %846 = arith.subf %844, %845 : vector<1x128xf32>
      %847 = vector.broadcast %cst_27 : f32 to vector<1x128xf32>
      %848 = arith.mulf %846, %847 : vector<1x128xf32>
      %849 = math.exp %848 : vector<1x128xf32>
      %850 = arith.cmpf ole, %824, %841 : vector<1x128xf32>
      %851 = arith.mulf %843, %849 : vector<1x128xf32>
      %852 = arith.addf %835, %851 : vector<1x128xf32>
      %853 = arith.mulf %835, %849 : vector<1x128xf32>
      %854 = arith.addf %853, %843 : vector<1x128xf32>
      %855 = arith.select %850, %852, %854 : vector<1x128xi1>, vector<1x128xf32>
      %c1_i32_213 = arith.constant 1 : i32
      %856 = tpu.dynamic_rotate %844 by %c1_i32_213 dim 1 : vector<1x128xf32>, i32 -> vector<1x128xf32>
      %c1_i32_214 = arith.constant 1 : i32
      %857 = tpu.dynamic_rotate %855 by %c1_i32_214 dim 1 : vector<1x128xf32>, i32 -> vector<1x128xf32>
      %858 = arith.select %39, %844, %856 : vector<1x128xi1>, vector<1x128xf32>
      %859 = arith.select %39, %855, %857 : vector<1x128xi1>, vector<1x128xf32>
      %860 = math.log %859 : vector<1x128xf32>
      %861 = vector.broadcast %cst_28 : f32 to vector<1x128xf32>
      %862 = arith.mulf %861, %860 : vector<1x128xf32>
      %863 = arith.subf %858, %862 : vector<1x128xf32>
      %c0_215 = arith.constant 0 : index
      %864 = arith.index_cast %c7_i32 : i32 to index
      %c0_216 = arith.constant 0 : index
      %865 = vector.load %arg5[%c0_215, %864, %c0_216] : memref<1x8x128xf32, #tpu.memory_space<vmem>>, vector<1x1x128xf32>
      %866 = vector.shape_cast %865 : vector<1x1x128xf32> to vector<1x128xf32>
      %867 = arith.addf %863, %866 : vector<1x128xf32>
      %c7_i32_217 = arith.constant 7 : i32
      %c0_218 = arith.constant 0 : index
      %c0_219 = arith.constant 0 : index
      %868 = vector.load %arg6[%c0_218, %c0_219] : memref<1x128xf32, #tpu.memory_space<vmem>>, vector<1x128xf32>
      tpu.vector_store %arg6[%c0_218, %c0_219], %867 {strides = array<i32>} : memref<1x128xf32, #tpu.memory_space<vmem>>, vector<1x128xf32>,
    } else {
    }
    %c0_i32_30 = arith.constant 0 : i32
    %69 = arith.cmpi sgt, %arg1, %c0_i32_30 : i32
    %70 = arith.extui %69 : i1 to i32
    %cst_31 = arith.constant 1.000000e+30 : f32
    %cst_32 = arith.constant 1.000000e+02 : f32
    %cst_33 = arith.constant 0.00999999977 : f32
    %c0_i32_34 = arith.constant 0 : i32
    %71 = arith.cmpi ne, %70, %c0_i32_34 : i32
    scf.if %71 {
      %c0_39 = arith.constant 0 : index
      %c0_40 = arith.constant 0 : index
      %75 = vector.load %arg6[%c0_39, %c0_40] : memref<1x128xf32, #tpu.memory_space<vmem>>, vector<1x128xf32>
      %c0_i32_41 = arith.constant 0 : i32
      %cst_42 = arith.constant 1.000000e+00 : f32
      %76 = vector.broadcast %cst_42 : f32 to vector<1x128xf32>
      %c1_i32_43 = arith.constant 1 : i32
      %77 = tpu.dynamic_rotate %75 by %c1_i32_43 dim 1 : vector<1x128xf32>, i32 -> vector<1x128xf32>
      %c1_i32_44 = arith.constant 1 : i32
      %78 = tpu.dynamic_rotate %76 by %c1_i32_44 dim 1 : vector<1x128xf32>, i32 -> vector<1x128xf32>
      %c1_i32_45 = arith.constant 1 : i32
      %79 = vector.broadcast %c1_i32_45 : i32 to vector<1x128xi32>
      %80 = arith.cmpi sge, %21, %79 : vector<1x128xi32>
      %81 = vector.broadcast %cst_31 : f32 to vector<1x128xf32>
      %82 = arith.select %80, %77, %81 : vector<1x128xi1>, vector<1x128xf32>
      %cst_46 = arith.constant 0.000000e+00 : f32
      %83 = vector.broadcast %cst_46 : f32 to vector<1x128xf32>
      %84 = arith.select %80, %78, %83 : vector<1x128xi1>, vector<1x128xf32>
      %85 = arith.minimumf %75, %82 : vector<1x128xf32>
      %86 = arith.maximumf %75, %82 : vector<1x128xf32>
      %87 = arith.subf %85, %86 : vector<1x128xf32>
      %88 = vector.broadcast %cst_32 : f32 to vector<1x128xf32>
      %89 = arith.mulf %87, %88 : vector<1x128xf32>
      %90 = math.exp %89 : vector<1x128xf32>
      %91 = arith.cmpf ole, %75, %82 : vector<1x128xf32>
      %92 = arith.mulf %84, %90 : vector<1x128xf32>
      %93 = arith.addf %76, %92 : vector<1x128xf32>
      %94 = arith.mulf %76, %90 : vector<1x128xf32>
      %95 = arith.addf %94, %84 : vector<1x128xf32>
      %96 = arith.select %91, %93, %95 : vector<1x128xi1>, vector<1x128xf32>
      %c2_i32_47 = arith.constant 2 : i32
      %97 = tpu.dynamic_rotate %85 by %c2_i32_47 dim 1 : vector<1x128xf32>, i32 -> vector<1x128xf32>
      %c2_i32_48 = arith.constant 2 : i32
      %98 = tpu.dynamic_rotate %96 by %c2_i32_48 dim 1 : vector<1x128xf32>, i32 -> vector<1x128xf32>
      %c2_i32_49 = arith.constant 2 : i32
      %99 = vector.broadcast %c2_i32_49 : i32 to vector<1x128xi32>
      %100 = arith.cmpi sge, %21, %99 : vector<1x128xi32>
      %101 = vector.broadcast %cst_31 : f32 to vector<1x128xf32>
      %102 = arith.select %100, %97, %101 : vector<1x128xi1>, vector<1x128xf32>
      %cst_50 = arith.constant 0.000000e+00 : f32
      %103 = vector.broadcast %cst_50 : f32 to vector<1x128xf32>
      %104 = arith.select %100, %98, %103 : vector<1x128xi1>, vector<1x128xf32>
      %105 = arith.minimumf %85, %102 : vector<1x128xf32>
      %106 = arith.maximumf %85, %102 : vector<1x128xf32>
      %107 = arith.subf %105, %106 : vector<1x128xf32>
      %108 = vector.broadcast %cst_32 : f32 to vector<1x128xf32>
      %109 = arith.mulf %107, %108 : vector<1x128xf32>
      %110 = math.exp %109 : vector<1x128xf32>
      %111 = arith.cmpf ole, %85, %102 : vector<1x128xf32>
      %112 = arith.mulf %104, %110 : vector<1x128xf32>
      %113 = arith.addf %96, %112 : vector<1x128xf32>
      %114 = arith.mulf %96, %110 : vector<1x128xf32>
      %115 = arith.addf %114, %104 : vector<1x128xf32>
      %116 = arith.select %111, %113, %115 : vector<1x128xi1>, vector<1x128xf32>
      %c4_i32 = arith.constant 4 : i32
      %117 = tpu.dynamic_rotate %105 by %c4_i32 dim 1 : vector<1x128xf32>, i32 -> vector<1x128xf32>
      %c4_i32_51 = arith.constant 4 : i32
      %118 = tpu.dynamic_rotate %116 by %c4_i32_51 dim 1 : vector<1x128xf32>, i32 -> vector<1x128xf32>
      %c4_i32_52 = arith.constant 4 : i32
      %119 = vector.broadcast %c4_i32_52 : i32 to vector<1x128xi32>
      %120 = arith.cmpi sge, %21, %119 : vector<1x128xi32>
      %121 = vector.broadcast %cst_31 : f32 to vector<1x128xf32>
      %122 = arith.select %120, %117, %121 : vector<1x128xi1>, vector<1x128xf32>
      %cst_53 = arith.constant 0.000000e+00 : f32
      %123 = vector.broadcast %cst_53 : f32 to vector<1x128xf32>
      %124 = arith.select %120, %118, %123 : vector<1x128xi1>, vector<1x128xf32>
      %125 = arith.minimumf %105, %122 : vector<1x128xf32>
      %126 = arith.maximumf %105, %122 : vector<1x128xf32>
      %127 = arith.subf %125, %126 : vector<1x128xf32>
      %128 = vector.broadcast %cst_32 : f32 to vector<1x128xf32>
      %129 = arith.mulf %127, %128 : vector<1x128xf32>
      %130 = math.exp %129 : vector<1x128xf32>
      %131 = arith.cmpf ole, %105, %122 : vector<1x128xf32>
      %132 = arith.mulf %124, %130 : vector<1x128xf32>
      %133 = arith.addf %116, %132 : vector<1x128xf32>
      %134 = arith.mulf %116, %130 : vector<1x128xf32>
      %135 = arith.addf %134, %124 : vector<1x128xf32>
      %136 = arith.select %131, %133, %135 : vector<1x128xi1>, vector<1x128xf32>
      %c8_i32 = arith.constant 8 : i32
      %137 = tpu.dynamic_rotate %125 by %c8_i32 dim 1 : vector<1x128xf32>, i32 -> vector<1x128xf32>
      %c8_i32_54 = arith.constant 8 : i32
      %138 = tpu.dynamic_rotate %136 by %c8_i32_54 dim 1 : vector<1x128xf32>, i32 -> vector<1x128xf32>
      %c8_i32_55 = arith.constant 8 : i32
      %139 = vector.broadcast %c8_i32_55 : i32 to vector<1x128xi32>
      %140 = arith.cmpi sge, %21, %139 : vector<1x128xi32>
      %141 = vector.broadcast %cst_31 : f32 to vector<1x128xf32>
      %142 = arith.select %140, %137, %141 : vector<1x128xi1>, vector<1x128xf32>
      %cst_56 = arith.constant 0.000000e+00 : f32
      %143 = vector.broadcast %cst_56 : f32 to vector<1x128xf32>
      %144 = arith.select %140, %138, %143 : vector<1x128xi1>, vector<1x128xf32>
      %145 = arith.minimumf %125, %142 : vector<1x128xf32>
      %146 = arith.maximumf %125, %142 : vector<1x128xf32>
      %147 = arith.subf %145, %146 : vector<1x128xf32>
      %148 = vector.broadcast %cst_32 : f32 to vector<1x128xf32>
      %149 = arith.mulf %147, %148 : vector<1x128xf32>
      %150 = math.exp %149 : vector<1x128xf32>
      %151 = arith.cmpf ole, %125, %142 : vector<1x128xf32>
      %152 = arith.mulf %144, %150 : vector<1x128xf32>
      %153 = arith.addf %136, %152 : vector<1x128xf32>
      %154 = arith.mulf %136, %150 : vector<1x128xf32>
      %155 = arith.addf %154, %144 : vector<1x128xf32>
      %156 = arith.select %151, %153, %155 : vector<1x128xi1>, vector<1x128xf32>
      %c16_i32 = arith.constant 16 : i32
      %157 = tpu.dynamic_rotate %145 by %c16_i32 dim 1 : vector<1x128xf32>, i32 -> vector<1x128xf32>
      %c16_i32_57 = arith.constant 16 : i32
      %158 = tpu.dynamic_rotate %156 by %c16_i32_57 dim 1 : vector<1x128xf32>, i32 -> vector<1x128xf32>
      %c16_i32_58 = arith.constant 16 : i32
      %159 = vector.broadcast %c16_i32_58 : i32 to vector<1x128xi32>
      %160 = arith.cmpi sge, %21, %159 : vector<1x128xi32>
      %161 = vector.broadcast %cst_31 : f32 to vector<1x128xf32>
      %162 = arith.select %160, %157, %161 : vector<1x128xi1>, vector<1x128xf32>
      %cst_59 = arith.constant 0.000000e+00 : f32
      %163 = vector.broadcast %cst_59 : f32 to vector<1x128xf32>
      %164 = arith.select %160, %158, %163 : vector<1x128xi1>, vector<1x128xf32>
      %165 = arith.minimumf %145, %162 : vector<1x128xf32>
      %166 = arith.maximumf %145, %162 : vector<1x128xf32>
      %167 = arith.subf %165, %166 : vector<1x128xf32>
      %168 = vector.broadcast %cst_32 : f32 to vector<1x128xf32>
      %169 = arith.mulf %167, %168 : vector<1x128xf32>
      %170 = math.exp %169 : vector<1x128xf32>
      %171 = arith.cmpf ole, %145, %162 : vector<1x128xf32>
      %172 = arith.mulf %164, %170 : vector<1x128xf32>
      %173 = arith.addf %156, %172 : vector<1x128xf32>
      %174 = arith.mulf %156, %170 : vector<1x128xf32>
      %175 = arith.addf %174, %164 : vector<1x128xf32>
      %176 = arith.select %171, %173, %175 : vector<1x128xi1>, vector<1x128xf32>
      %c1_i32_60 = arith.constant 1 : i32
      %177 = tpu.dynamic_rotate %165 by %c1_i32_60 dim 1 : vector<1x128xf32>, i32 -> vector<1x128xf32>
      %c1_i32_61 = arith.constant 1 : i32
      %178 = tpu.dynamic_rotate %176 by %c1_i32_61 dim 1 : vector<1x128xf32>, i32 -> vector<1x128xf32>
      %179 = arith.select %39, %165, %177 : vector<1x128xi1>, vector<1x128xf32>
      %180 = arith.select %39, %176, %178 : vector<1x128xi1>, vector<1x128xf32>
      %181 = math.log %180 : vector<1x128xf32>
      %182 = vector.broadcast %cst_33 : f32 to vector<1x128xf32>
      %183 = arith.mulf %182, %181 : vector<1x128xf32>
      %184 = arith.subf %179, %183 : vector<1x128xf32>
      %c0_62 = arith.constant 0 : index
      %185 = arith.index_cast %c0_i32_41 : i32 to index
      %c0_63 = arith.constant 0 : index
      %186 = vector.load %arg5[%c0_62, %185, %c0_63] : memref<1x8x128xf32, #tpu.memory_space<vmem>>, vector<1x1x128xf32>
      %187 = vector.shape_cast %186 : vector<1x1x128xf32> to vector<1x128xf32>
      %188 = arith.addf %184, %187 : vector<1x128xf32>
      %c1_i32_64 = arith.constant 1 : i32
      %cst_65 = arith.constant 1.000000e+00 : f32
      %189 = vector.broadcast %cst_65 : f32 to vector<1x128xf32>
      %c1_i32_66 = arith.constant 1 : i32
      %190 = tpu.dynamic_rotate %188 by %c1_i32_66 dim 1 : vector<1x128xf32>, i32 -> vector<1x128xf32>
      %c1_i32_67 = arith.constant 1 : i32
      %191 = tpu.dynamic_rotate %189 by %c1_i32_67 dim 1 : vector<1x128xf32>, i32 -> vector<1x128xf32>
      %c1_i32_68 = arith.constant 1 : i32
      %192 = vector.broadcast %c1_i32_68 : i32 to vector<1x128xi32>
      %193 = arith.cmpi sge, %21, %192 : vector<1x128xi32>
      %194 = vector.broadcast %cst_31 : f32 to vector<1x128xf32>
      %195 = arith.select %193, %190, %194 : vector<1x128xi1>, vector<1x128xf32>
      %cst_69 = arith.constant 0.000000e+00 : f32
      %196 = vector.broadcast %cst_69 : f32 to vector<1x128xf32>
      %197 = arith.select %193, %191, %196 : vector<1x128xi1>, vector<1x128xf32>
      %198 = arith.minimumf %188, %195 : vector<1x128xf32>
      %199 = arith.maximumf %188, %195 : vector<1x128xf32>
      %200 = arith.subf %198, %199 : vector<1x128xf32>
      %201 = vector.broadcast %cst_32 : f32 to vector<1x128xf32>
      %202 = arith.mulf %200, %201 : vector<1x128xf32>
      %203 = math.exp %202 : vector<1x128xf32>
      %204 = arith.cmpf ole, %188, %195 : vector<1x128xf32>
      %205 = arith.mulf %197, %203 : vector<1x128xf32>
      %206 = arith.addf %189, %205 : vector<1x128xf32>
      %207 = arith.mulf %189, %203 : vector<1x128xf32>
      %208 = arith.addf %207, %197 : vector<1x128xf32>
      %209 = arith.select %204, %206, %208 : vector<1x128xi1>, vector<1x128xf32>
      %c2_i32_70 = arith.constant 2 : i32
      %210 = tpu.dynamic_rotate %198 by %c2_i32_70 dim 1 : vector<1x128xf32>, i32 -> vector<1x128xf32>
      %c2_i32_71 = arith.constant 2 : i32
      %211 = tpu.dynamic_rotate %209 by %c2_i32_71 dim 1 : vector<1x128xf32>, i32 -> vector<1x128xf32>
      %c2_i32_72 = arith.constant 2 : i32
      %212 = vector.broadcast %c2_i32_72 : i32 to vector<1x128xi32>
      %213 = arith.cmpi sge, %21, %212 : vector<1x128xi32>
      %214 = vector.broadcast %cst_31 : f32 to vector<1x128xf32>
      %215 = arith.select %213, %210, %214 : vector<1x128xi1>, vector<1x128xf32>
      %cst_73 = arith.constant 0.000000e+00 : f32
      %216 = vector.broadcast %cst_73 : f32 to vector<1x128xf32>
      %217 = arith.select %213, %211, %216 : vector<1x128xi1>, vector<1x128xf32>
      %218 = arith.minimumf %198, %215 : vector<1x128xf32>
      %219 = arith.maximumf %198, %215 : vector<1x128xf32>
      %220 = arith.subf %218, %219 : vector<1x128xf32>
      %221 = vector.broadcast %cst_32 : f32 to vector<1x128xf32>
      %222 = arith.mulf %220, %221 : vector<1x128xf32>
      %223 = math.exp %222 : vector<1x128xf32>
      %224 = arith.cmpf ole, %198, %215 : vector<1x128xf32>
      %225 = arith.mulf %217, %223 : vector<1x128xf32>
      %226 = arith.addf %209, %225 : vector<1x128xf32>
      %227 = arith.mulf %209, %223 : vector<1x128xf32>
      %228 = arith.addf %227, %217 : vector<1x128xf32>
      %229 = arith.select %224, %226, %228 : vector<1x128xi1>, vector<1x128xf32>
      %c4_i32_74 = arith.constant 4 : i32
      %230 = tpu.dynamic_rotate %218 by %c4_i32_74 dim 1 : vector<1x128xf32>, i32 -> vector<1x128xf32>
      %c4_i32_75 = arith.constant 4 : i32
      %231 = tpu.dynamic_rotate %229 by %c4_i32_75 dim 1 : vector<1x128xf32>, i32 -> vector<1x128xf32>
      %c4_i32_76 = arith.constant 4 : i32
      %232 = vector.broadcast %c4_i32_76 : i32 to vector<1x128xi32>
      %233 = arith.cmpi sge, %21, %232 : vector<1x128xi32>
      %234 = vector.broadcast %cst_31 : f32 to vector<1x128xf32>
      %235 = arith.select %233, %230, %234 : vector<1x128xi1>, vector<1x128xf32>
      %cst_77 = arith.constant 0.000000e+00 : f32
      %236 = vector.broadcast %cst_77 : f32 to vector<1x128xf32>
      %237 = arith.select %233, %231, %236 : vector<1x128xi1>, vector<1x128xf32>
      %238 = arith.minimumf %218, %235 : vector<1x128xf32>
      %239 = arith.maximumf %218, %235 : vector<1x128xf32>
      %240 = arith.subf %238, %239 : vector<1x128xf32>
      %241 = vector.broadcast %cst_32 : f32 to vector<1x128xf32>
      %242 = arith.mulf %240, %241 : vector<1x128xf32>
      %243 = math.exp %242 : vector<1x128xf32>
      %244 = arith.cmpf ole, %218, %235 : vector<1x128xf32>
      %245 = arith.mulf %237, %243 : vector<1x128xf32>
      %246 = arith.addf %229, %245 : vector<1x128xf32>
      %247 = arith.mulf %229, %243 : vector<1x128xf32>
      %248 = arith.addf %247, %237 : vector<1x128xf32>
      %249 = arith.select %244, %246, %248 : vector<1x128xi1>, vector<1x128xf32>
      %c8_i32_78 = arith.constant 8 : i32
      %250 = tpu.dynamic_rotate %238 by %c8_i32_78 dim 1 : vector<1x128xf32>, i32 -> vector<1x128xf32>
      %c8_i32_79 = arith.constant 8 : i32
      %251 = tpu.dynamic_rotate %249 by %c8_i32_79 dim 1 : vector<1x128xf32>, i32 -> vector<1x128xf32>
      %c8_i32_80 = arith.constant 8 : i32
      %252 = vector.broadcast %c8_i32_80 : i32 to vector<1x128xi32>
      %253 = arith.cmpi sge, %21, %252 : vector<1x128xi32>
      %254 = vector.broadcast %cst_31 : f32 to vector<1x128xf32>
      %255 = arith.select %253, %250, %254 : vector<1x128xi1>, vector<1x128xf32>
      %cst_81 = arith.constant 0.000000e+00 : f32
      %256 = vector.broadcast %cst_81 : f32 to vector<1x128xf32>
      %257 = arith.select %253, %251, %256 : vector<1x128xi1>, vector<1x128xf32>
      %258 = arith.minimumf %238, %255 : vector<1x128xf32>
      %259 = arith.maximumf %238, %255 : vector<1x128xf32>
      %260 = arith.subf %258, %259 : vector<1x128xf32>
      %261 = vector.broadcast %cst_32 : f32 to vector<1x128xf32>
      %262 = arith.mulf %260, %261 : vector<1x128xf32>
      %263 = math.exp %262 : vector<1x128xf32>
      %264 = arith.cmpf ole, %238, %255 : vector<1x128xf32>
      %265 = arith.mulf %257, %263 : vector<1x128xf32>
      %266 = arith.addf %249, %265 : vector<1x128xf32>
      %267 = arith.mulf %249, %263 : vector<1x128xf32>
      %268 = arith.addf %267, %257 : vector<1x128xf32>
      %269 = arith.select %264, %266, %268 : vector<1x128xi1>, vector<1x128xf32>
      %c16_i32_82 = arith.constant 16 : i32
      %270 = tpu.dynamic_rotate %258 by %c16_i32_82 dim 1 : vector<1x128xf32>, i32 -> vector<1x128xf32>
      %c16_i32_83 = arith.constant 16 : i32
      %271 = tpu.dynamic_rotate %269 by %c16_i32_83 dim 1 : vector<1x128xf32>, i32 -> vector<1x128xf32>
      %c16_i32_84 = arith.constant 16 : i32
      %272 = vector.broadcast %c16_i32_84 : i32 to vector<1x128xi32>
      %273 = arith.cmpi sge, %21, %272 : vector<1x128xi32>
      %274 = vector.broadcast %cst_31 : f32 to vector<1x128xf32>
      %275 = arith.select %273, %270, %274 : vector<1x128xi1>, vector<1x128xf32>
      %cst_85 = arith.constant 0.000000e+00 : f32
      %276 = vector.broadcast %cst_85 : f32 to vector<1x128xf32>
      %277 = arith.select %273, %271, %276 : vector<1x128xi1>, vector<1x128xf32>
      %278 = arith.minimumf %258, %275 : vector<1x128xf32>
      %279 = arith.maximumf %258, %275 : vector<1x128xf32>
      %280 = arith.subf %278, %279 : vector<1x128xf32>
      %281 = vector.broadcast %cst_32 : f32 to vector<1x128xf32>
      %282 = arith.mulf %280, %281 : vector<1x128xf32>
      %283 = math.exp %282 : vector<1x128xf32>
      %284 = arith.cmpf ole, %258, %275 : vector<1x128xf32>
      %285 = arith.mulf %277, %283 : vector<1x128xf32>
      %286 = arith.addf %269, %285 : vector<1x128xf32>
      %287 = arith.mulf %269, %283 : vector<1x128xf32>
      %288 = arith.addf %287, %277 : vector<1x128xf32>
      %289 = arith.select %284, %286, %288 : vector<1x128xi1>, vector<1x128xf32>
      %c1_i32_86 = arith.constant 1 : i32
      %290 = tpu.dynamic_rotate %278 by %c1_i32_86 dim 1 : vector<1x128xf32>, i32 -> vector<1x128xf32>
      %c1_i32_87 = arith.constant 1 : i32
      %291 = tpu.dynamic_rotate %289 by %c1_i32_87 dim 1 : vector<1x128xf32>, i32 -> vector<1x128xf32>
      %292 = arith.select %39, %278, %290 : vector<1x128xi1>, vector<1x128xf32>
      %293 = arith.select %39, %289, %291 : vector<1x128xi1>, vector<1x128xf32>
      %294 = math.log %293 : vector<1x128xf32>
      %295 = vector.broadcast %cst_33 : f32 to vector<1x128xf32>
      %296 = arith.mulf %295, %294 : vector<1x128xf32>
      %297 = arith.subf %292, %296 : vector<1x128xf32>
      %c0_88 = arith.constant 0 : index
      %298 = arith.index_cast %c1_i32_64 : i32 to index
      %c0_89 = arith.constant 0 : index
      %299 = vector.load %arg5[%c0_88, %298, %c0_89] : memref<1x8x128xf32, #tpu.memory_space<vmem>>, vector<1x1x128xf32>
      %300 = vector.shape_cast %299 : vector<1x1x128xf32> to vector<1x128xf32>
      %301 = arith.addf %297, %300 : vector<1x128xf32>
      %c2_i32_90 = arith.constant 2 : i32
      %cst_91 = arith.constant 1.000000e+00 : f32
      %302 = vector.broadcast %cst_91 : f32 to vector<1x128xf32>
      %c1_i32_92 = arith.constant 1 : i32
      %303 = tpu.dynamic_rotate %301 by %c1_i32_92 dim 1 : vector<1x128xf32>, i32 -> vector<1x128xf32>
      %c1_i32_93 = arith.constant 1 : i32
      %304 = tpu.dynamic_rotate %302 by %c1_i32_93 dim 1 : vector<1x128xf32>, i32 -> vector<1x128xf32>
      %c1_i32_94 = arith.constant 1 : i32
      %305 = vector.broadcast %c1_i32_94 : i32 to vector<1x128xi32>
      %306 = arith.cmpi sge, %21, %305 : vector<1x128xi32>
      %307 = vector.broadcast %cst_31 : f32 to vector<1x128xf32>
      %308 = arith.select %306, %303, %307 : vector<1x128xi1>, vector<1x128xf32>
      %cst_95 = arith.constant 0.000000e+00 : f32
      %309 = vector.broadcast %cst_95 : f32 to vector<1x128xf32>
      %310 = arith.select %306, %304, %309 : vector<1x128xi1>, vector<1x128xf32>
      %311 = arith.minimumf %301, %308 : vector<1x128xf32>
      %312 = arith.maximumf %301, %308 : vector<1x128xf32>
      %313 = arith.subf %311, %312 : vector<1x128xf32>
      %314 = vector.broadcast %cst_32 : f32 to vector<1x128xf32>
      %315 = arith.mulf %313, %314 : vector<1x128xf32>
      %316 = math.exp %315 : vector<1x128xf32>
      %317 = arith.cmpf ole, %301, %308 : vector<1x128xf32>
      %318 = arith.mulf %310, %316 : vector<1x128xf32>
      %319 = arith.addf %302, %318 : vector<1x128xf32>
      %320 = arith.mulf %302, %316 : vector<1x128xf32>
      %321 = arith.addf %320, %310 : vector<1x128xf32>
      %322 = arith.select %317, %319, %321 : vector<1x128xi1>, vector<1x128xf32>
      %c2_i32_96 = arith.constant 2 : i32
      %323 = tpu.dynamic_rotate %311 by %c2_i32_96 dim 1 : vector<1x128xf32>, i32 -> vector<1x128xf32>
      %c2_i32_97 = arith.constant 2 : i32
      %324 = tpu.dynamic_rotate %322 by %c2_i32_97 dim 1 : vector<1x128xf32>, i32 -> vector<1x128xf32>
      %c2_i32_98 = arith.constant 2 : i32
      %325 = vector.broadcast %c2_i32_98 : i32 to vector<1x128xi32>
      %326 = arith.cmpi sge, %21, %325 : vector<1x128xi32>
      %327 = vector.broadcast %cst_31 : f32 to vector<1x128xf32>
      %328 = arith.select %326, %323, %327 : vector<1x128xi1>, vector<1x128xf32>
      %cst_99 = arith.constant 0.000000e+00 : f32
      %329 = vector.broadcast %cst_99 : f32 to vector<1x128xf32>
      %330 = arith.select %326, %324, %329 : vector<1x128xi1>, vector<1x128xf32>
      %331 = arith.minimumf %311, %328 : vector<1x128xf32>
      %332 = arith.maximumf %311, %328 : vector<1x128xf32>
      %333 = arith.subf %331, %332 : vector<1x128xf32>
      %334 = vector.broadcast %cst_32 : f32 to vector<1x128xf32>
      %335 = arith.mulf %333, %334 : vector<1x128xf32>
      %336 = math.exp %335 : vector<1x128xf32>
      %337 = arith.cmpf ole, %311, %328 : vector<1x128xf32>
      %338 = arith.mulf %330, %336 : vector<1x128xf32>
      %339 = arith.addf %322, %338 : vector<1x128xf32>
      %340 = arith.mulf %322, %336 : vector<1x128xf32>
      %341 = arith.addf %340, %330 : vector<1x128xf32>
      %342 = arith.select %337, %339, %341 : vector<1x128xi1>, vector<1x128xf32>
      %c4_i32_100 = arith.constant 4 : i32
      %343 = tpu.dynamic_rotate %331 by %c4_i32_100 dim 1 : vector<1x128xf32>, i32 -> vector<1x128xf32>
      %c4_i32_101 = arith.constant 4 : i32
      %344 = tpu.dynamic_rotate %342 by %c4_i32_101 dim 1 : vector<1x128xf32>, i32 -> vector<1x128xf32>
      %c4_i32_102 = arith.constant 4 : i32
      %345 = vector.broadcast %c4_i32_102 : i32 to vector<1x128xi32>
      %346 = arith.cmpi sge, %21, %345 : vector<1x128xi32>
      %347 = vector.broadcast %cst_31 : f32 to vector<1x128xf32>
      %348 = arith.select %346, %343, %347 : vector<1x128xi1>, vector<1x128xf32>
      %cst_103 = arith.constant 0.000000e+00 : f32
      %349 = vector.broadcast %cst_103 : f32 to vector<1x128xf32>
      %350 = arith.select %346, %344, %349 : vector<1x128xi1>, vector<1x128xf32>
      %351 = arith.minimumf %331, %348 : vector<1x128xf32>
      %352 = arith.maximumf %331, %348 : vector<1x128xf32>
      %353 = arith.subf %351, %352 : vector<1x128xf32>
      %354 = vector.broadcast %cst_32 : f32 to vector<1x128xf32>
      %355 = arith.mulf %353, %354 : vector<1x128xf32>
      %356 = math.exp %355 : vector<1x128xf32>
      %357 = arith.cmpf ole, %331, %348 : vector<1x128xf32>
      %358 = arith.mulf %350, %356 : vector<1x128xf32>
      %359 = arith.addf %342, %358 : vector<1x128xf32>
      %360 = arith.mulf %342, %356 : vector<1x128xf32>
      %361 = arith.addf %360, %350 : vector<1x128xf32>
      %362 = arith.select %357, %359, %361 : vector<1x128xi1>, vector<1x128xf32>
      %c8_i32_104 = arith.constant 8 : i32
      %363 = tpu.dynamic_rotate %351 by %c8_i32_104 dim 1 : vector<1x128xf32>, i32 -> vector<1x128xf32>
      %c8_i32_105 = arith.constant 8 : i32
      %364 = tpu.dynamic_rotate %362 by %c8_i32_105 dim 1 : vector<1x128xf32>, i32 -> vector<1x128xf32>
      %c8_i32_106 = arith.constant 8 : i32
      %365 = vector.broadcast %c8_i32_106 : i32 to vector<1x128xi32>
      %366 = arith.cmpi sge, %21, %365 : vector<1x128xi32>
      %367 = vector.broadcast %cst_31 : f32 to vector<1x128xf32>
      %368 = arith.select %366, %363, %367 : vector<1x128xi1>, vector<1x128xf32>
      %cst_107 = arith.constant 0.000000e+00 : f32
      %369 = vector.broadcast %cst_107 : f32 to vector<1x128xf32>
      %370 = arith.select %366, %364, %369 : vector<1x128xi1>, vector<1x128xf32>
      %371 = arith.minimumf %351, %368 : vector<1x128xf32>
      %372 = arith.maximumf %351, %368 : vector<1x128xf32>
      %373 = arith.subf %371, %372 : vector<1x128xf32>
      %374 = vector.broadcast %cst_32 : f32 to vector<1x128xf32>
      %375 = arith.mulf %373, %374 : vector<1x128xf32>
      %376 = math.exp %375 : vector<1x128xf32>
      %377 = arith.cmpf ole, %351, %368 : vector<1x128xf32>
      %378 = arith.mulf %370, %376 : vector<1x128xf32>
      %379 = arith.addf %362, %378 : vector<1x128xf32>
      %380 = arith.mulf %362, %376 : vector<1x128xf32>
      %381 = arith.addf %380, %370 : vector<1x128xf32>
      %382 = arith.select %377, %379, %381 : vector<1x128xi1>, vector<1x128xf32>
      %c16_i32_108 = arith.constant 16 : i32
      %383 = tpu.dynamic_rotate %371 by %c16_i32_108 dim 1 : vector<1x128xf32>, i32 -> vector<1x128xf32>
      %c16_i32_109 = arith.constant 16 : i32
      %384 = tpu.dynamic_rotate %382 by %c16_i32_109 dim 1 : vector<1x128xf32>, i32 -> vector<1x128xf32>
      %c16_i32_110 = arith.constant 16 : i32
      %385 = vector.broadcast %c16_i32_110 : i32 to vector<1x128xi32>
      %386 = arith.cmpi sge, %21, %385 : vector<1x128xi32>
      %387 = vector.broadcast %cst_31 : f32 to vector<1x128xf32>
      %388 = arith.select %386, %383, %387 : vector<1x128xi1>, vector<1x128xf32>
      %cst_111 = arith.constant 0.000000e+00 : f32
      %389 = vector.broadcast %cst_111 : f32 to vector<1x128xf32>
      %390 = arith.select %386, %384, %389 : vector<1x128xi1>, vector<1x128xf32>
      %391 = arith.minimumf %371, %388 : vector<1x128xf32>
      %392 = arith.maximumf %371, %388 : vector<1x128xf32>
      %393 = arith.subf %391, %392 : vector<1x128xf32>
      %394 = vector.broadcast %cst_32 : f32 to vector<1x128xf32>
      %395 = arith.mulf %393, %394 : vector<1x128xf32>
      %396 = math.exp %395 : vector<1x128xf32>
      %397 = arith.cmpf ole, %371, %388 : vector<1x128xf32>
      %398 = arith.mulf %390, %396 : vector<1x128xf32>
      %399 = arith.addf %382, %398 : vector<1x128xf32>
      %400 = arith.mulf %382, %396 : vector<1x128xf32>
      %401 = arith.addf %400, %390 : vector<1x128xf32>
      %402 = arith.select %397, %399, %401 : vector<1x128xi1>, vector<1x128xf32>
      %c1_i32_112 = arith.constant 1 : i32
      %403 = tpu.dynamic_rotate %391 by %c1_i32_112 dim 1 : vector<1x128xf32>, i32 -> vector<1x128xf32>
      %c1_i32_113 = arith.constant 1 : i32
      %404 = tpu.dynamic_rotate %402 by %c1_i32_113 dim 1 : vector<1x128xf32>, i32 -> vector<1x128xf32>
      %405 = arith.select %39, %391, %403 : vector<1x128xi1>, vector<1x128xf32>
      %406 = arith.select %39, %402, %404 : vector<1x128xi1>, vector<1x128xf32>
      %407 = math.log %406 : vector<1x128xf32>
      %408 = vector.broadcast %cst_33 : f32 to vector<1x128xf32>
      %409 = arith.mulf %408, %407 : vector<1x128xf32>
      %410 = arith.subf %405, %409 : vector<1x128xf32>
      %c0_114 = arith.constant 0 : index
      %411 = arith.index_cast %c2_i32_90 : i32 to index
      %c0_115 = arith.constant 0 : index
      %412 = vector.load %arg5[%c0_114, %411, %c0_115] : memref<1x8x128xf32, #tpu.memory_space<vmem>>, vector<1x1x128xf32>
      %413 = vector.shape_cast %412 : vector<1x1x128xf32> to vector<1x128xf32>
      %414 = arith.addf %410, %413 : vector<1x128xf32>
      %c3_i32 = arith.constant 3 : i32
      %cst_116 = arith.constant 1.000000e+00 : f32
      %415 = vector.broadcast %cst_116 : f32 to vector<1x128xf32>
      %c1_i32_117 = arith.constant 1 : i32
      %416 = tpu.dynamic_rotate %414 by %c1_i32_117 dim 1 : vector<1x128xf32>, i32 -> vector<1x128xf32>
      %c1_i32_118 = arith.constant 1 : i32
      %417 = tpu.dynamic_rotate %415 by %c1_i32_118 dim 1 : vector<1x128xf32>, i32 -> vector<1x128xf32>
      %c1_i32_119 = arith.constant 1 : i32
      %418 = vector.broadcast %c1_i32_119 : i32 to vector<1x128xi32>
      %419 = arith.cmpi sge, %21, %418 : vector<1x128xi32>
      %420 = vector.broadcast %cst_31 : f32 to vector<1x128xf32>
      %421 = arith.select %419, %416, %420 : vector<1x128xi1>, vector<1x128xf32>
      %cst_120 = arith.constant 0.000000e+00 : f32
      %422 = vector.broadcast %cst_120 : f32 to vector<1x128xf32>
      %423 = arith.select %419, %417, %422 : vector<1x128xi1>, vector<1x128xf32>
      %424 = arith.minimumf %414, %421 : vector<1x128xf32>
      %425 = arith.maximumf %414, %421 : vector<1x128xf32>
      %426 = arith.subf %424, %425 : vector<1x128xf32>
      %427 = vector.broadcast %cst_32 : f32 to vector<1x128xf32>
      %428 = arith.mulf %426, %427 : vector<1x128xf32>
      %429 = math.exp %428 : vector<1x128xf32>
      %430 = arith.cmpf ole, %414, %421 : vector<1x128xf32>
      %431 = arith.mulf %423, %429 : vector<1x128xf32>
      %432 = arith.addf %415, %431 : vector<1x128xf32>
      %433 = arith.mulf %415, %429 : vector<1x128xf32>
      %434 = arith.addf %433, %423 : vector<1x128xf32>
      %435 = arith.select %430, %432, %434 : vector<1x128xi1>, vector<1x128xf32>
      %c2_i32_121 = arith.constant 2 : i32
      %436 = tpu.dynamic_rotate %424 by %c2_i32_121 dim 1 : vector<1x128xf32>, i32 -> vector<1x128xf32>
      %c2_i32_122 = arith.constant 2 : i32
      %437 = tpu.dynamic_rotate %435 by %c2_i32_122 dim 1 : vector<1x128xf32>, i32 -> vector<1x128xf32>
      %c2_i32_123 = arith.constant 2 : i32
      %438 = vector.broadcast %c2_i32_123 : i32 to vector<1x128xi32>
      %439 = arith.cmpi sge, %21, %438 : vector<1x128xi32>
      %440 = vector.broadcast %cst_31 : f32 to vector<1x128xf32>
      %441 = arith.select %439, %436, %440 : vector<1x128xi1>, vector<1x128xf32>
      %cst_124 = arith.constant 0.000000e+00 : f32
      %442 = vector.broadcast %cst_124 : f32 to vector<1x128xf32>
      %443 = arith.select %439, %437, %442 : vector<1x128xi1>, vector<1x128xf32>
      %444 = arith.minimumf %424, %441 : vector<1x128xf32>
      %445 = arith.maximumf %424, %441 : vector<1x128xf32>
      %446 = arith.subf %444, %445 : vector<1x128xf32>
      %447 = vector.broadcast %cst_32 : f32 to vector<1x128xf32>
      %448 = arith.mulf %446, %447 : vector<1x128xf32>
      %449 = math.exp %448 : vector<1x128xf32>
      %450 = arith.cmpf ole, %424, %441 : vector<1x128xf32>
      %451 = arith.mulf %443, %449 : vector<1x128xf32>
      %452 = arith.addf %435, %451 : vector<1x128xf32>
      %453 = arith.mulf %435, %449 : vector<1x128xf32>
      %454 = arith.addf %453, %443 : vector<1x128xf32>
      %455 = arith.select %450, %452, %454 : vector<1x128xi1>, vector<1x128xf32>
      %c4_i32_125 = arith.constant 4 : i32
      %456 = tpu.dynamic_rotate %444 by %c4_i32_125 dim 1 : vector<1x128xf32>, i32 -> vector<1x128xf32>
      %c4_i32_126 = arith.constant 4 : i32
      %457 = tpu.dynamic_rotate %455 by %c4_i32_126 dim 1 : vector<1x128xf32>, i32 -> vector<1x128xf32>
      %c4_i32_127 = arith.constant 4 : i32
      %458 = vector.broadcast %c4_i32_127 : i32 to vector<1x128xi32>
      %459 = arith.cmpi sge, %21, %458 : vector<1x128xi32>
      %460 = vector.broadcast %cst_31 : f32 to vector<1x128xf32>
      %461 = arith.select %459, %456, %460 : vector<1x128xi1>, vector<1x128xf32>
      %cst_128 = arith.constant 0.000000e+00 : f32
      %462 = vector.broadcast %cst_128 : f32 to vector<1x128xf32>
      %463 = arith.select %459, %457, %462 : vector<1x128xi1>, vector<1x128xf32>
      %464 = arith.minimumf %444, %461 : vector<1x128xf32>
      %465 = arith.maximumf %444, %461 : vector<1x128xf32>
      %466 = arith.subf %464, %465 : vector<1x128xf32>
      %467 = vector.broadcast %cst_32 : f32 to vector<1x128xf32>
      %468 = arith.mulf %466, %467 : vector<1x128xf32>
      %469 = math.exp %468 : vector<1x128xf32>
      %470 = arith.cmpf ole, %444, %461 : vector<1x128xf32>
      %471 = arith.mulf %463, %469 : vector<1x128xf32>
      %472 = arith.addf %455, %471 : vector<1x128xf32>
      %473 = arith.mulf %455, %469 : vector<1x128xf32>
      %474 = arith.addf %473, %463 : vector<1x128xf32>
      %475 = arith.select %470, %472, %474 : vector<1x128xi1>, vector<1x128xf32>
      %c8_i32_129 = arith.constant 8 : i32
      %476 = tpu.dynamic_rotate %464 by %c8_i32_129 dim 1 : vector<1x128xf32>, i32 -> vector<1x128xf32>
      %c8_i32_130 = arith.constant 8 : i32
      %477 = tpu.dynamic_rotate %475 by %c8_i32_130 dim 1 : vector<1x128xf32>, i32 -> vector<1x128xf32>
      %c8_i32_131 = arith.constant 8 : i32
      %478 = vector.broadcast %c8_i32_131 : i32 to vector<1x128xi32>
      %479 = arith.cmpi sge, %21, %478 : vector<1x128xi32>
      %480 = vector.broadcast %cst_31 : f32 to vector<1x128xf32>
      %481 = arith.select %479, %476, %480 : vector<1x128xi1>, vector<1x128xf32>
      %cst_132 = arith.constant 0.000000e+00 : f32
      %482 = vector.broadcast %cst_132 : f32 to vector<1x128xf32>
      %483 = arith.select %479, %477, %482 : vector<1x128xi1>, vector<1x128xf32>
      %484 = arith.minimumf %464, %481 : vector<1x128xf32>
      %485 = arith.maximumf %464, %481 : vector<1x128xf32>
      %486 = arith.subf %484, %485 : vector<1x128xf32>
      %487 = vector.broadcast %cst_32 : f32 to vector<1x128xf32>
      %488 = arith.mulf %486, %487 : vector<1x128xf32>
      %489 = math.exp %488 : vector<1x128xf32>
      %490 = arith.cmpf ole, %464, %481 : vector<1x128xf32>
      %491 = arith.mulf %483, %489 : vector<1x128xf32>
      %492 = arith.addf %475, %491 : vector<1x128xf32>
      %493 = arith.mulf %475, %489 : vector<1x128xf32>
      %494 = arith.addf %493, %483 : vector<1x128xf32>
      %495 = arith.select %490, %492, %494 : vector<1x128xi1>, vector<1x128xf32>
      %c16_i32_133 = arith.constant 16 : i32
      %496 = tpu.dynamic_rotate %484 by %c16_i32_133 dim 1 : vector<1x128xf32>, i32 -> vector<1x128xf32>
      %c16_i32_134 = arith.constant 16 : i32
      %497 = tpu.dynamic_rotate %495 by %c16_i32_134 dim 1 : vector<1x128xf32>, i32 -> vector<1x128xf32>
      %c16_i32_135 = arith.constant 16 : i32
      %498 = vector.broadcast %c16_i32_135 : i32 to vector<1x128xi32>
      %499 = arith.cmpi sge, %21, %498 : vector<1x128xi32>
      %500 = vector.broadcast %cst_31 : f32 to vector<1x128xf32>
      %501 = arith.select %499, %496, %500 : vector<1x128xi1>, vector<1x128xf32>
      %cst_136 = arith.constant 0.000000e+00 : f32
      %502 = vector.broadcast %cst_136 : f32 to vector<1x128xf32>
      %503 = arith.select %499, %497, %502 : vector<1x128xi1>, vector<1x128xf32>
      %504 = arith.minimumf %484, %501 : vector<1x128xf32>
      %505 = arith.maximumf %484, %501 : vector<1x128xf32>
      %506 = arith.subf %504, %505 : vector<1x128xf32>
      %507 = vector.broadcast %cst_32 : f32 to vector<1x128xf32>
      %508 = arith.mulf %506, %507 : vector<1x128xf32>
      %509 = math.exp %508 : vector<1x128xf32>
      %510 = arith.cmpf ole, %484, %501 : vector<1x128xf32>
      %511 = arith.mulf %503, %509 : vector<1x128xf32>
      %512 = arith.addf %495, %511 : vector<1x128xf32>
      %513 = arith.mulf %495, %509 : vector<1x128xf32>
      %514 = arith.addf %513, %503 : vector<1x128xf32>
      %515 = arith.select %510, %512, %514 : vector<1x128xi1>, vector<1x128xf32>
      %c1_i32_137 = arith.constant 1 : i32
      %516 = tpu.dynamic_rotate %504 by %c1_i32_137 dim 1 : vector<1x128xf32>, i32 -> vector<1x128xf32>
      %c1_i32_138 = arith.constant 1 : i32
      %517 = tpu.dynamic_rotate %515 by %c1_i32_138 dim 1 : vector<1x128xf32>, i32 -> vector<1x128xf32>
      %518 = arith.select %39, %504, %516 : vector<1x128xi1>, vector<1x128xf32>
      %519 = arith.select %39, %515, %517 : vector<1x128xi1>, vector<1x128xf32>
      %520 = math.log %519 : vector<1x128xf32>
      %521 = vector.broadcast %cst_33 : f32 to vector<1x128xf32>
      %522 = arith.mulf %521, %520 : vector<1x128xf32>
      %523 = arith.subf %518, %522 : vector<1x128xf32>
      %c0_139 = arith.constant 0 : index
      %524 = arith.index_cast %c3_i32 : i32 to index
      %c0_140 = arith.constant 0 : index
      %525 = vector.load %arg5[%c0_139, %524, %c0_140] : memref<1x8x128xf32, #tpu.memory_space<vmem>>, vector<1x1x128xf32>
      %526 = vector.shape_cast %525 : vector<1x1x128xf32> to vector<1x128xf32>
      %527 = arith.addf %523, %526 : vector<1x128xf32>
      %c4_i32_141 = arith.constant 4 : i32
      %cst_142 = arith.constant 1.000000e+00 : f32
      %528 = vector.broadcast %cst_142 : f32 to vector<1x128xf32>
      %c1_i32_143 = arith.constant 1 : i32
      %529 = tpu.dynamic_rotate %527 by %c1_i32_143 dim 1 : vector<1x128xf32>, i32 -> vector<1x128xf32>
      %c1_i32_144 = arith.constant 1 : i32
      %530 = tpu.dynamic_rotate %528 by %c1_i32_144 dim 1 : vector<1x128xf32>, i32 -> vector<1x128xf32>
      %c1_i32_145 = arith.constant 1 : i32
      %531 = vector.broadcast %c1_i32_145 : i32 to vector<1x128xi32>
      %532 = arith.cmpi sge, %21, %531 : vector<1x128xi32>
      %533 = vector.broadcast %cst_31 : f32 to vector<1x128xf32>
      %534 = arith.select %532, %529, %533 : vector<1x128xi1>, vector<1x128xf32>
      %cst_146 = arith.constant 0.000000e+00 : f32
      %535 = vector.broadcast %cst_146 : f32 to vector<1x128xf32>
      %536 = arith.select %532, %530, %535 : vector<1x128xi1>, vector<1x128xf32>
      %537 = arith.minimumf %527, %534 : vector<1x128xf32>
      %538 = arith.maximumf %527, %534 : vector<1x128xf32>
      %539 = arith.subf %537, %538 : vector<1x128xf32>
      %540 = vector.broadcast %cst_32 : f32 to vector<1x128xf32>
      %541 = arith.mulf %539, %540 : vector<1x128xf32>
      %542 = math.exp %541 : vector<1x128xf32>
      %543 = arith.cmpf ole, %527, %534 : vector<1x128xf32>
      %544 = arith.mulf %536, %542 : vector<1x128xf32>
      %545 = arith.addf %528, %544 : vector<1x128xf32>
      %546 = arith.mulf %528, %542 : vector<1x128xf32>
      %547 = arith.addf %546, %536 : vector<1x128xf32>
      %548 = arith.select %543, %545, %547 : vector<1x128xi1>, vector<1x128xf32>
      %c2_i32_147 = arith.constant 2 : i32
      %549 = tpu.dynamic_rotate %537 by %c2_i32_147 dim 1 : vector<1x128xf32>, i32 -> vector<1x128xf32>
      %c2_i32_148 = arith.constant 2 : i32
      %550 = tpu.dynamic_rotate %548 by %c2_i32_148 dim 1 : vector<1x128xf32>, i32 -> vector<1x128xf32>
      %c2_i32_149 = arith.constant 2 : i32
      %551 = vector.broadcast %c2_i32_149 : i32 to vector<1x128xi32>
      %552 = arith.cmpi sge, %21, %551 : vector<1x128xi32>
      %553 = vector.broadcast %cst_31 : f32 to vector<1x128xf32>
      %554 = arith.select %552, %549, %553 : vector<1x128xi1>, vector<1x128xf32>
      %cst_150 = arith.constant 0.000000e+00 : f32
      %555 = vector.broadcast %cst_150 : f32 to vector<1x128xf32>
      %556 = arith.select %552, %550, %555 : vector<1x128xi1>, vector<1x128xf32>
      %557 = arith.minimumf %537, %554 : vector<1x128xf32>
      %558 = arith.maximumf %537, %554 : vector<1x128xf32>
      %559 = arith.subf %557, %558 : vector<1x128xf32>
      %560 = vector.broadcast %cst_32 : f32 to vector<1x128xf32>
      %561 = arith.mulf %559, %560 : vector<1x128xf32>
      %562 = math.exp %561 : vector<1x128xf32>
      %563 = arith.cmpf ole, %537, %554 : vector<1x128xf32>
      %564 = arith.mulf %556, %562 : vector<1x128xf32>
      %565 = arith.addf %548, %564 : vector<1x128xf32>
      %566 = arith.mulf %548, %562 : vector<1x128xf32>
      %567 = arith.addf %566, %556 : vector<1x128xf32>
      %568 = arith.select %563, %565, %567 : vector<1x128xi1>, vector<1x128xf32>
      %c4_i32_151 = arith.constant 4 : i32
      %569 = tpu.dynamic_rotate %557 by %c4_i32_151 dim 1 : vector<1x128xf32>, i32 -> vector<1x128xf32>
      %c4_i32_152 = arith.constant 4 : i32
      %570 = tpu.dynamic_rotate %568 by %c4_i32_152 dim 1 : vector<1x128xf32>, i32 -> vector<1x128xf32>
      %c4_i32_153 = arith.constant 4 : i32
      %571 = vector.broadcast %c4_i32_153 : i32 to vector<1x128xi32>
      %572 = arith.cmpi sge, %21, %571 : vector<1x128xi32>
      %573 = vector.broadcast %cst_31 : f32 to vector<1x128xf32>
      %574 = arith.select %572, %569, %573 : vector<1x128xi1>, vector<1x128xf32>
      %cst_154 = arith.constant 0.000000e+00 : f32
      %575 = vector.broadcast %cst_154 : f32 to vector<1x128xf32>
      %576 = arith.select %572, %570, %575 : vector<1x128xi1>, vector<1x128xf32>
      %577 = arith.minimumf %557, %574 : vector<1x128xf32>
      %578 = arith.maximumf %557, %574 : vector<1x128xf32>
      %579 = arith.subf %577, %578 : vector<1x128xf32>
      %580 = vector.broadcast %cst_32 : f32 to vector<1x128xf32>
      %581 = arith.mulf %579, %580 : vector<1x128xf32>
      %582 = math.exp %581 : vector<1x128xf32>
      %583 = arith.cmpf ole, %557, %574 : vector<1x128xf32>
      %584 = arith.mulf %576, %582 : vector<1x128xf32>
      %585 = arith.addf %568, %584 : vector<1x128xf32>
      %586 = arith.mulf %568, %582 : vector<1x128xf32>
      %587 = arith.addf %586, %576 : vector<1x128xf32>
      %588 = arith.select %583, %585, %587 : vector<1x128xi1>, vector<1x128xf32>
      %c8_i32_155 = arith.constant 8 : i32
      %589 = tpu.dynamic_rotate %577 by %c8_i32_155 dim 1 : vector<1x128xf32>, i32 -> vector<1x128xf32>
      %c8_i32_156 = arith.constant 8 : i32
      %590 = tpu.dynamic_rotate %588 by %c8_i32_156 dim 1 : vector<1x128xf32>, i32 -> vector<1x128xf32>
      %c8_i32_157 = arith.constant 8 : i32
      %591 = vector.broadcast %c8_i32_157 : i32 to vector<1x128xi32>
      %592 = arith.cmpi sge, %21, %591 : vector<1x128xi32>
      %593 = vector.broadcast %cst_31 : f32 to vector<1x128xf32>
      %594 = arith.select %592, %589, %593 : vector<1x128xi1>, vector<1x128xf32>
      %cst_158 = arith.constant 0.000000e+00 : f32
      %595 = vector.broadcast %cst_158 : f32 to vector<1x128xf32>
      %596 = arith.select %592, %590, %595 : vector<1x128xi1>, vector<1x128xf32>
      %597 = arith.minimumf %577, %594 : vector<1x128xf32>
      %598 = arith.maximumf %577, %594 : vector<1x128xf32>
      %599 = arith.subf %597, %598 : vector<1x128xf32>
      %600 = vector.broadcast %cst_32 : f32 to vector<1x128xf32>
      %601 = arith.mulf %599, %600 : vector<1x128xf32>
      %602 = math.exp %601 : vector<1x128xf32>
      %603 = arith.cmpf ole, %577, %594 : vector<1x128xf32>
      %604 = arith.mulf %596, %602 : vector<1x128xf32>
      %605 = arith.addf %588, %604 : vector<1x128xf32>
      %606 = arith.mulf %588, %602 : vector<1x128xf32>
      %607 = arith.addf %606, %596 : vector<1x128xf32>
      %608 = arith.select %603, %605, %607 : vector<1x128xi1>, vector<1x128xf32>
      %c16_i32_159 = arith.constant 16 : i32
      %609 = tpu.dynamic_rotate %597 by %c16_i32_159 dim 1 : vector<1x128xf32>, i32 -> vector<1x128xf32>
      %c16_i32_160 = arith.constant 16 : i32
      %610 = tpu.dynamic_rotate %608 by %c16_i32_160 dim 1 : vector<1x128xf32>, i32 -> vector<1x128xf32>
      %c16_i32_161 = arith.constant 16 : i32
      %611 = vector.broadcast %c16_i32_161 : i32 to vector<1x128xi32>
      %612 = arith.cmpi sge, %21, %611 : vector<1x128xi32>
      %613 = vector.broadcast %cst_31 : f32 to vector<1x128xf32>
      %614 = arith.select %612, %609, %613 : vector<1x128xi1>, vector<1x128xf32>
      %cst_162 = arith.constant 0.000000e+00 : f32
      %615 = vector.broadcast %cst_162 : f32 to vector<1x128xf32>
      %616 = arith.select %612, %610, %615 : vector<1x128xi1>, vector<1x128xf32>
      %617 = arith.minimumf %597, %614 : vector<1x128xf32>
      %618 = arith.maximumf %597, %614 : vector<1x128xf32>
      %619 = arith.subf %617, %618 : vector<1x128xf32>
      %620 = vector.broadcast %cst_32 : f32 to vector<1x128xf32>
      %621 = arith.mulf %619, %620 : vector<1x128xf32>
      %622 = math.exp %621 : vector<1x128xf32>
      %623 = arith.cmpf ole, %597, %614 : vector<1x128xf32>
      %624 = arith.mulf %616, %622 : vector<1x128xf32>
      %625 = arith.addf %608, %624 : vector<1x128xf32>
      %626 = arith.mulf %608, %622 : vector<1x128xf32>
      %627 = arith.addf %626, %616 : vector<1x128xf32>
      %628 = arith.select %623, %625, %627 : vector<1x128xi1>, vector<1x128xf32>
      %c1_i32_163 = arith.constant 1 : i32
      %629 = tpu.dynamic_rotate %617 by %c1_i32_163 dim 1 : vector<1x128xf32>, i32 -> vector<1x128xf32>
      %c1_i32_164 = arith.constant 1 : i32
      %630 = tpu.dynamic_rotate %628 by %c1_i32_164 dim 1 : vector<1x128xf32>, i32 -> vector<1x128xf32>
      %631 = arith.select %39, %617, %629 : vector<1x128xi1>, vector<1x128xf32>
      %632 = arith.select %39, %628, %630 : vector<1x128xi1>, vector<1x128xf32>
      %633 = math.log %632 : vector<1x128xf32>
      %634 = vector.broadcast %cst_33 : f32 to vector<1x128xf32>
      %635 = arith.mulf %634, %633 : vector<1x128xf32>
      %636 = arith.subf %631, %635 : vector<1x128xf32>
      %c0_165 = arith.constant 0 : index
      %637 = arith.index_cast %c4_i32_141 : i32 to index
      %c0_166 = arith.constant 0 : index
      %638 = vector.load %arg5[%c0_165, %637, %c0_166] : memref<1x8x128xf32, #tpu.memory_space<vmem>>, vector<1x1x128xf32>
      %639 = vector.shape_cast %638 : vector<1x1x128xf32> to vector<1x128xf32>
      %640 = arith.addf %636, %639 : vector<1x128xf32>
      %c5_i32 = arith.constant 5 : i32
      %cst_167 = arith.constant 1.000000e+00 : f32
      %641 = vector.broadcast %cst_167 : f32 to vector<1x128xf32>
      %c1_i32_168 = arith.constant 1 : i32
      %642 = tpu.dynamic_rotate %640 by %c1_i32_168 dim 1 : vector<1x128xf32>, i32 -> vector<1x128xf32>
      %c1_i32_169 = arith.constant 1 : i32
      %643 = tpu.dynamic_rotate %641 by %c1_i32_169 dim 1 : vector<1x128xf32>, i32 -> vector<1x128xf32>
      %c1_i32_170 = arith.constant 1 : i32
      %644 = vector.broadcast %c1_i32_170 : i32 to vector<1x128xi32>
      %645 = arith.cmpi sge, %21, %644 : vector<1x128xi32>
      %646 = vector.broadcast %cst_31 : f32 to vector<1x128xf32>
      %647 = arith.select %645, %642, %646 : vector<1x128xi1>, vector<1x128xf32>
      %cst_171 = arith.constant 0.000000e+00 : f32
      %648 = vector.broadcast %cst_171 : f32 to vector<1x128xf32>
      %649 = arith.select %645, %643, %648 : vector<1x128xi1>, vector<1x128xf32>
      %650 = arith.minimumf %640, %647 : vector<1x128xf32>
      %651 = arith.maximumf %640, %647 : vector<1x128xf32>
      %652 = arith.subf %650, %651 : vector<1x128xf32>
      %653 = vector.broadcast %cst_32 : f32 to vector<1x128xf32>
      %654 = arith.mulf %652, %653 : vector<1x128xf32>
      %655 = math.exp %654 : vector<1x128xf32>
      %656 = arith.cmpf ole, %640, %647 : vector<1x128xf32>
      %657 = arith.mulf %649, %655 : vector<1x128xf32>
      %658 = arith.addf %641, %657 : vector<1x128xf32>
      %659 = arith.mulf %641, %655 : vector<1x128xf32>
      %660 = arith.addf %659, %649 : vector<1x128xf32>
      %661 = arith.select %656, %658, %660 : vector<1x128xi1>, vector<1x128xf32>
      %c2_i32_172 = arith.constant 2 : i32
      %662 = tpu.dynamic_rotate %650 by %c2_i32_172 dim 1 : vector<1x128xf32>, i32 -> vector<1x128xf32>
      %c2_i32_173 = arith.constant 2 : i32
      %663 = tpu.dynamic_rotate %661 by %c2_i32_173 dim 1 : vector<1x128xf32>, i32 -> vector<1x128xf32>
      %c2_i32_174 = arith.constant 2 : i32
      %664 = vector.broadcast %c2_i32_174 : i32 to vector<1x128xi32>
      %665 = arith.cmpi sge, %21, %664 : vector<1x128xi32>
      %666 = vector.broadcast %cst_31 : f32 to vector<1x128xf32>
      %667 = arith.select %665, %662, %666 : vector<1x128xi1>, vector<1x128xf32>
      %cst_175 = arith.constant 0.000000e+00 : f32
      %668 = vector.broadcast %cst_175 : f32 to vector<1x128xf32>
      %669 = arith.select %665, %663, %668 : vector<1x128xi1>, vector<1x128xf32>
      %670 = arith.minimumf %650, %667 : vector<1x128xf32>
      %671 = arith.maximumf %650, %667 : vector<1x128xf32>
      %672 = arith.subf %670, %671 : vector<1x128xf32>
      %673 = vector.broadcast %cst_32 : f32 to vector<1x128xf32>
      %674 = arith.mulf %672, %673 : vector<1x128xf32>
      %675 = math.exp %674 : vector<1x128xf32>
      %676 = arith.cmpf ole, %650, %667 : vector<1x128xf32>
      %677 = arith.mulf %669, %675 : vector<1x128xf32>
      %678 = arith.addf %661, %677 : vector<1x128xf32>
      %679 = arith.mulf %661, %675 : vector<1x128xf32>
      %680 = arith.addf %679, %669 : vector<1x128xf32>
      %681 = arith.select %676, %678, %680 : vector<1x128xi1>, vector<1x128xf32>
      %c4_i32_176 = arith.constant 4 : i32
      %682 = tpu.dynamic_rotate %670 by %c4_i32_176 dim 1 : vector<1x128xf32>, i32 -> vector<1x128xf32>
      %c4_i32_177 = arith.constant 4 : i32
      %683 = tpu.dynamic_rotate %681 by %c4_i32_177 dim 1 : vector<1x128xf32>, i32 -> vector<1x128xf32>
      %c4_i32_178 = arith.constant 4 : i32
      %684 = vector.broadcast %c4_i32_178 : i32 to vector<1x128xi32>
      %685 = arith.cmpi sge, %21, %684 : vector<1x128xi32>
      %686 = vector.broadcast %cst_31 : f32 to vector<1x128xf32>
      %687 = arith.select %685, %682, %686 : vector<1x128xi1>, vector<1x128xf32>
      %cst_179 = arith.constant 0.000000e+00 : f32
      %688 = vector.broadcast %cst_179 : f32 to vector<1x128xf32>
      %689 = arith.select %685, %683, %688 : vector<1x128xi1>, vector<1x128xf32>
      %690 = arith.minimumf %670, %687 : vector<1x128xf32>
      %691 = arith.maximumf %670, %687 : vector<1x128xf32>
      %692 = arith.subf %690, %691 : vector<1x128xf32>
      %693 = vector.broadcast %cst_32 : f32 to vector<1x128xf32>
      %694 = arith.mulf %692, %693 : vector<1x128xf32>
      %695 = math.exp %694 : vector<1x128xf32>
      %696 = arith.cmpf ole, %670, %687 : vector<1x128xf32>
      %697 = arith.mulf %689, %695 : vector<1x128xf32>
      %698 = arith.addf %681, %697 : vector<1x128xf32>
      %699 = arith.mulf %681, %695 : vector<1x128xf32>
      %700 = arith.addf %699, %689 : vector<1x128xf32>
      %701 = arith.select %696, %698, %700 : vector<1x128xi1>, vector<1x128xf32>
      %c8_i32_180 = arith.constant 8 : i32
      %702 = tpu.dynamic_rotate %690 by %c8_i32_180 dim 1 : vector<1x128xf32>, i32 -> vector<1x128xf32>
      %c8_i32_181 = arith.constant 8 : i32
      %703 = tpu.dynamic_rotate %701 by %c8_i32_181 dim 1 : vector<1x128xf32>, i32 -> vector<1x128xf32>
      %c8_i32_182 = arith.constant 8 : i32
      %704 = vector.broadcast %c8_i32_182 : i32 to vector<1x128xi32>
      %705 = arith.cmpi sge, %21, %704 : vector<1x128xi32>
      %706 = vector.broadcast %cst_31 : f32 to vector<1x128xf32>
      %707 = arith.select %705, %702, %706 : vector<1x128xi1>, vector<1x128xf32>
      %cst_183 = arith.constant 0.000000e+00 : f32
      %708 = vector.broadcast %cst_183 : f32 to vector<1x128xf32>
      %709 = arith.select %705, %703, %708 : vector<1x128xi1>, vector<1x128xf32>
      %710 = arith.minimumf %690, %707 : vector<1x128xf32>
      %711 = arith.maximumf %690, %707 : vector<1x128xf32>
      %712 = arith.subf %710, %711 : vector<1x128xf32>
      %713 = vector.broadcast %cst_32 : f32 to vector<1x128xf32>
      %714 = arith.mulf %712, %713 : vector<1x128xf32>
      %715 = math.exp %714 : vector<1x128xf32>
      %716 = arith.cmpf ole, %690, %707 : vector<1x128xf32>
      %717 = arith.mulf %709, %715 : vector<1x128xf32>
      %718 = arith.addf %701, %717 : vector<1x128xf32>
      %719 = arith.mulf %701, %715 : vector<1x128xf32>
      %720 = arith.addf %719, %709 : vector<1x128xf32>
      %721 = arith.select %716, %718, %720 : vector<1x128xi1>, vector<1x128xf32>
      %c16_i32_184 = arith.constant 16 : i32
      %722 = tpu.dynamic_rotate %710 by %c16_i32_184 dim 1 : vector<1x128xf32>, i32 -> vector<1x128xf32>
      %c16_i32_185 = arith.constant 16 : i32
      %723 = tpu.dynamic_rotate %721 by %c16_i32_185 dim 1 : vector<1x128xf32>, i32 -> vector<1x128xf32>
      %c16_i32_186 = arith.constant 16 : i32
      %724 = vector.broadcast %c16_i32_186 : i32 to vector<1x128xi32>
      %725 = arith.cmpi sge, %21, %724 : vector<1x128xi32>
      %726 = vector.broadcast %cst_31 : f32 to vector<1x128xf32>
      %727 = arith.select %725, %722, %726 : vector<1x128xi1>, vector<1x128xf32>
      %cst_187 = arith.constant 0.000000e+00 : f32
      %728 = vector.broadcast %cst_187 : f32 to vector<1x128xf32>
      %729 = arith.select %725, %723, %728 : vector<1x128xi1>, vector<1x128xf32>
      %730 = arith.minimumf %710, %727 : vector<1x128xf32>
      %731 = arith.maximumf %710, %727 : vector<1x128xf32>
      %732 = arith.subf %730, %731 : vector<1x128xf32>
      %733 = vector.broadcast %cst_32 : f32 to vector<1x128xf32>
      %734 = arith.mulf %732, %733 : vector<1x128xf32>
      %735 = math.exp %734 : vector<1x128xf32>
      %736 = arith.cmpf ole, %710, %727 : vector<1x128xf32>
      %737 = arith.mulf %729, %735 : vector<1x128xf32>
      %738 = arith.addf %721, %737 : vector<1x128xf32>
      %739 = arith.mulf %721, %735 : vector<1x128xf32>
      %740 = arith.addf %739, %729 : vector<1x128xf32>
      %741 = arith.select %736, %738, %740 : vector<1x128xi1>, vector<1x128xf32>
      %c1_i32_188 = arith.constant 1 : i32
      %742 = tpu.dynamic_rotate %730 by %c1_i32_188 dim 1 : vector<1x128xf32>, i32 -> vector<1x128xf32>
      %c1_i32_189 = arith.constant 1 : i32
      %743 = tpu.dynamic_rotate %741 by %c1_i32_189 dim 1 : vector<1x128xf32>, i32 -> vector<1x128xf32>
      %744 = arith.select %39, %730, %742 : vector<1x128xi1>, vector<1x128xf32>
      %745 = arith.select %39, %741, %743 : vector<1x128xi1>, vector<1x128xf32>
      %746 = math.log %745 : vector<1x128xf32>
      %747 = vector.broadcast %cst_33 : f32 to vector<1x128xf32>
      %748 = arith.mulf %747, %746 : vector<1x128xf32>
      %749 = arith.subf %744, %748 : vector<1x128xf32>
      %c0_190 = arith.constant 0 : index
      %750 = arith.index_cast %c5_i32 : i32 to index
      %c0_191 = arith.constant 0 : index
      %751 = vector.load %arg5[%c0_190, %750, %c0_191] : memref<1x8x128xf32, #tpu.memory_space<vmem>>, vector<1x1x128xf32>
      %752 = vector.shape_cast %751 : vector<1x1x128xf32> to vector<1x128xf32>
      %753 = arith.addf %749, %752 : vector<1x128xf32>
      %c6_i32 = arith.constant 6 : i32
      %cst_192 = arith.constant 1.000000e+00 : f32
      %754 = vector.broadcast %cst_192 : f32 to vector<1x128xf32>
      %c1_i32_193 = arith.constant 1 : i32
      %755 = tpu.dynamic_rotate %753 by %c1_i32_193 dim 1 : vector<1x128xf32>, i32 -> vector<1x128xf32>
      %c1_i32_194 = arith.constant 1 : i32
      %756 = tpu.dynamic_rotate %754 by %c1_i32_194 dim 1 : vector<1x128xf32>, i32 -> vector<1x128xf32>
      %c1_i32_195 = arith.constant 1 : i32
      %757 = vector.broadcast %c1_i32_195 : i32 to vector<1x128xi32>
      %758 = arith.cmpi sge, %21, %757 : vector<1x128xi32>
      %759 = vector.broadcast %cst_31 : f32 to vector<1x128xf32>
      %760 = arith.select %758, %755, %759 : vector<1x128xi1>, vector<1x128xf32>
      %cst_196 = arith.constant 0.000000e+00 : f32
      %761 = vector.broadcast %cst_196 : f32 to vector<1x128xf32>
      %762 = arith.select %758, %756, %761 : vector<1x128xi1>, vector<1x128xf32>
      %763 = arith.minimumf %753, %760 : vector<1x128xf32>
      %764 = arith.maximumf %753, %760 : vector<1x128xf32>
      %765 = arith.subf %763, %764 : vector<1x128xf32>
      %766 = vector.broadcast %cst_32 : f32 to vector<1x128xf32>
      %767 = arith.mulf %765, %766 : vector<1x128xf32>
      %768 = math.exp %767 : vector<1x128xf32>
      %769 = arith.cmpf ole, %753, %760 : vector<1x128xf32>
      %770 = arith.mulf %762, %768 : vector<1x128xf32>
      %771 = arith.addf %754, %770 : vector<1x128xf32>
      %772 = arith.mulf %754, %768 : vector<1x128xf32>
      %773 = arith.addf %772, %762 : vector<1x128xf32>
      %774 = arith.select %769, %771, %773 : vector<1x128xi1>, vector<1x128xf32>
      %c2_i32_197 = arith.constant 2 : i32
      %775 = tpu.dynamic_rotate %763 by %c2_i32_197 dim 1 : vector<1x128xf32>, i32 -> vector<1x128xf32>
      %c2_i32_198 = arith.constant 2 : i32
      %776 = tpu.dynamic_rotate %774 by %c2_i32_198 dim 1 : vector<1x128xf32>, i32 -> vector<1x128xf32>
      %c2_i32_199 = arith.constant 2 : i32
      %777 = vector.broadcast %c2_i32_199 : i32 to vector<1x128xi32>
      %778 = arith.cmpi sge, %21, %777 : vector<1x128xi32>
      %779 = vector.broadcast %cst_31 : f32 to vector<1x128xf32>
      %780 = arith.select %778, %775, %779 : vector<1x128xi1>, vector<1x128xf32>
      %cst_200 = arith.constant 0.000000e+00 : f32
      %781 = vector.broadcast %cst_200 : f32 to vector<1x128xf32>
      %782 = arith.select %778, %776, %781 : vector<1x128xi1>, vector<1x128xf32>
      %783 = arith.minimumf %763, %780 : vector<1x128xf32>
      %784 = arith.maximumf %763, %780 : vector<1x128xf32>
      %785 = arith.subf %783, %784 : vector<1x128xf32>
      %786 = vector.broadcast %cst_32 : f32 to vector<1x128xf32>
      %787 = arith.mulf %785, %786 : vector<1x128xf32>
      %788 = math.exp %787 : vector<1x128xf32>
      %789 = arith.cmpf ole, %763, %780 : vector<1x128xf32>
      %790 = arith.mulf %782, %788 : vector<1x128xf32>
      %791 = arith.addf %774, %790 : vector<1x128xf32>
      %792 = arith.mulf %774, %788 : vector<1x128xf32>
      %793 = arith.addf %792, %782 : vector<1x128xf32>
      %794 = arith.select %789, %791, %793 : vector<1x128xi1>, vector<1x128xf32>
      %c4_i32_201 = arith.constant 4 : i32
      %795 = tpu.dynamic_rotate %783 by %c4_i32_201 dim 1 : vector<1x128xf32>, i32 -> vector<1x128xf32>
      %c4_i32_202 = arith.constant 4 : i32
      %796 = tpu.dynamic_rotate %794 by %c4_i32_202 dim 1 : vector<1x128xf32>, i32 -> vector<1x128xf32>
      %c4_i32_203 = arith.constant 4 : i32
      %797 = vector.broadcast %c4_i32_203 : i32 to vector<1x128xi32>
      %798 = arith.cmpi sge, %21, %797 : vector<1x128xi32>
      %799 = vector.broadcast %cst_31 : f32 to vector<1x128xf32>
      %800 = arith.select %798, %795, %799 : vector<1x128xi1>, vector<1x128xf32>
      %cst_204 = arith.constant 0.000000e+00 : f32
      %801 = vector.broadcast %cst_204 : f32 to vector<1x128xf32>
      %802 = arith.select %798, %796, %801 : vector<1x128xi1>, vector<1x128xf32>
      %803 = arith.minimumf %783, %800 : vector<1x128xf32>
      %804 = arith.maximumf %783, %800 : vector<1x128xf32>
      %805 = arith.subf %803, %804 : vector<1x128xf32>
      %806 = vector.broadcast %cst_32 : f32 to vector<1x128xf32>
      %807 = arith.mulf %805, %806 : vector<1x128xf32>
      %808 = math.exp %807 : vector<1x128xf32>
      %809 = arith.cmpf ole, %783, %800 : vector<1x128xf32>
      %810 = arith.mulf %802, %808 : vector<1x128xf32>
      %811 = arith.addf %794, %810 : vector<1x128xf32>
      %812 = arith.mulf %794, %808 : vector<1x128xf32>
      %813 = arith.addf %812, %802 : vector<1x128xf32>
      %814 = arith.select %809, %811, %813 : vector<1x128xi1>, vector<1x128xf32>
      %c8_i32_205 = arith.constant 8 : i32
      %815 = tpu.dynamic_rotate %803 by %c8_i32_205 dim 1 : vector<1x128xf32>, i32 -> vector<1x128xf32>
      %c8_i32_206 = arith.constant 8 : i32
      %816 = tpu.dynamic_rotate %814 by %c8_i32_206 dim 1 : vector<1x128xf32>, i32 -> vector<1x128xf32>
      %c8_i32_207 = arith.constant 8 : i32
      %817 = vector.broadcast %c8_i32_207 : i32 to vector<1x128xi32>
      %818 = arith.cmpi sge, %21, %817 : vector<1x128xi32>
      %819 = vector.broadcast %cst_31 : f32 to vector<1x128xf32>
      %820 = arith.select %818, %815, %819 : vector<1x128xi1>, vector<1x128xf32>
      %cst_208 = arith.constant 0.000000e+00 : f32
      %821 = vector.broadcast %cst_208 : f32 to vector<1x128xf32>
      %822 = arith.select %818, %816, %821 : vector<1x128xi1>, vector<1x128xf32>
      %823 = arith.minimumf %803, %820 : vector<1x128xf32>
      %824 = arith.maximumf %803, %820 : vector<1x128xf32>
      %825 = arith.subf %823, %824 : vector<1x128xf32>
      %826 = vector.broadcast %cst_32 : f32 to vector<1x128xf32>
      %827 = arith.mulf %825, %826 : vector<1x128xf32>
      %828 = math.exp %827 : vector<1x128xf32>
      %829 = arith.cmpf ole, %803, %820 : vector<1x128xf32>
      %830 = arith.mulf %822, %828 : vector<1x128xf32>
      %831 = arith.addf %814, %830 : vector<1x128xf32>
      %832 = arith.mulf %814, %828 : vector<1x128xf32>
      %833 = arith.addf %832, %822 : vector<1x128xf32>
      %834 = arith.select %829, %831, %833 : vector<1x128xi1>, vector<1x128xf32>
      %c16_i32_209 = arith.constant 16 : i32
      %835 = tpu.dynamic_rotate %823 by %c16_i32_209 dim 1 : vector<1x128xf32>, i32 -> vector<1x128xf32>
      %c16_i32_210 = arith.constant 16 : i32
      %836 = tpu.dynamic_rotate %834 by %c16_i32_210 dim 1 : vector<1x128xf32>, i32 -> vector<1x128xf32>
      %c16_i32_211 = arith.constant 16 : i32
      %837 = vector.broadcast %c16_i32_211 : i32 to vector<1x128xi32>
      %838 = arith.cmpi sge, %21, %837 : vector<1x128xi32>
      %839 = vector.broadcast %cst_31 : f32 to vector<1x128xf32>
      %840 = arith.select %838, %835, %839 : vector<1x128xi1>, vector<1x128xf32>
      %cst_212 = arith.constant 0.000000e+00 : f32
      %841 = vector.broadcast %cst_212 : f32 to vector<1x128xf32>
      %842 = arith.select %838, %836, %841 : vector<1x128xi1>, vector<1x128xf32>
      %843 = arith.minimumf %823, %840 : vector<1x128xf32>
      %844 = arith.maximumf %823, %840 : vector<1x128xf32>
      %845 = arith.subf %843, %844 : vector<1x128xf32>
      %846 = vector.broadcast %cst_32 : f32 to vector<1x128xf32>
      %847 = arith.mulf %845, %846 : vector<1x128xf32>
      %848 = math.exp %847 : vector<1x128xf32>
      %849 = arith.cmpf ole, %823, %840 : vector<1x128xf32>
      %850 = arith.mulf %842, %848 : vector<1x128xf32>
      %851 = arith.addf %834, %850 : vector<1x128xf32>
      %852 = arith.mulf %834, %848 : vector<1x128xf32>
      %853 = arith.addf %852, %842 : vector<1x128xf32>
      %854 = arith.select %849, %851, %853 : vector<1x128xi1>, vector<1x128xf32>
      %c1_i32_213 = arith.constant 1 : i32
      %855 = tpu.dynamic_rotate %843 by %c1_i32_213 dim 1 : vector<1x128xf32>, i32 -> vector<1x128xf32>
      %c1_i32_214 = arith.constant 1 : i32
      %856 = tpu.dynamic_rotate %854 by %c1_i32_214 dim 1 : vector<1x128xf32>, i32 -> vector<1x128xf32>
      %857 = arith.select %39, %843, %855 : vector<1x128xi1>, vector<1x128xf32>
      %858 = arith.select %39, %854, %856 : vector<1x128xi1>, vector<1x128xf32>
      %859 = math.log %858 : vector<1x128xf32>
      %860 = vector.broadcast %cst_33 : f32 to vector<1x128xf32>
      %861 = arith.mulf %860, %859 : vector<1x128xf32>
      %862 = arith.subf %857, %861 : vector<1x128xf32>
      %c0_215 = arith.constant 0 : index
      %863 = arith.index_cast %c6_i32 : i32 to index
      %c0_216 = arith.constant 0 : index
      %864 = vector.load %arg5[%c0_215, %863, %c0_216] : memref<1x8x128xf32, #tpu.memory_space<vmem>>, vector<1x1x128xf32>
      %865 = vector.shape_cast %864 : vector<1x1x128xf32> to vector<1x128xf32>
      %866 = arith.addf %862, %865 : vector<1x128xf32>
      %c7_i32 = arith.constant 7 : i32
      %cst_217 = arith.constant 1.000000e+00 : f32
      %867 = vector.broadcast %cst_217 : f32 to vector<1x128xf32>
      %c1_i32_218 = arith.constant 1 : i32
      %868 = tpu.dynamic_rotate %866 by %c1_i32_218 dim 1 : vector<1x128xf32>, i32 -> vector<1x128xf32>
      %c1_i32_219 = arith.constant 1 : i32
      %869 = tpu.dynamic_rotate %867 by %c1_i32_219 dim 1 : vector<1x128xf32>, i32 -> vector<1x128xf32>
      %c1_i32_220 = arith.constant 1 : i32
      %870 = vector.broadcast %c1_i32_220 : i32 to vector<1x128xi32>
      %871 = arith.cmpi sge, %21, %870 : vector<1x128xi32>
      %872 = vector.broadcast %cst_31 : f32 to vector<1x128xf32>
      %873 = arith.select %871, %868, %872 : vector<1x128xi1>, vector<1x128xf32>
      %cst_221 = arith.constant 0.000000e+00 : f32
      %874 = vector.broadcast %cst_221 : f32 to vector<1x128xf32>
      %875 = arith.select %871, %869, %874 : vector<1x128xi1>, vector<1x128xf32>
      %876 = arith.minimumf %866, %873 : vector<1x128xf32>
      %877 = arith.maximumf %866, %873 : vector<1x128xf32>
      %878 = arith.subf %876, %877 : vector<1x128xf32>
      %879 = vector.broadcast %cst_32 : f32 to vector<1x128xf32>
      %880 = arith.mulf %878, %879 : vector<1x128xf32>
      %881 = math.exp %880 : vector<1x128xf32>
      %882 = arith.cmpf ole, %866, %873 : vector<1x128xf32>
      %883 = arith.mulf %875, %881 : vector<1x128xf32>
      %884 = arith.addf %867, %883 : vector<1x128xf32>
      %885 = arith.mulf %867, %881 : vector<1x128xf32>
      %886 = arith.addf %885, %875 : vector<1x128xf32>
      %887 = arith.select %882, %884, %886 : vector<1x128xi1>, vector<1x128xf32>
      %c2_i32_222 = arith.constant 2 : i32
      %888 = tpu.dynamic_rotate %876 by %c2_i32_222 dim 1 : vector<1x128xf32>, i32 -> vector<1x128xf32>
      %c2_i32_223 = arith.constant 2 : i32
      %889 = tpu.dynamic_rotate %887 by %c2_i32_223 dim 1 : vector<1x128xf32>, i32 -> vector<1x128xf32>
      %c2_i32_224 = arith.constant 2 : i32
      %890 = vector.broadcast %c2_i32_224 : i32 to vector<1x128xi32>
      %891 = arith.cmpi sge, %21, %890 : vector<1x128xi32>
      %892 = vector.broadcast %cst_31 : f32 to vector<1x128xf32>
      %893 = arith.select %891, %888, %892 : vector<1x128xi1>, vector<1x128xf32>
      %cst_225 = arith.constant 0.000000e+00 : f32
      %894 = vector.broadcast %cst_225 : f32 to vector<1x128xf32>
      %895 = arith.select %891, %889, %894 : vector<1x128xi1>, vector<1x128xf32>
      %896 = arith.minimumf %876, %893 : vector<1x128xf32>
      %897 = arith.maximumf %876, %893 : vector<1x128xf32>
      %898 = arith.subf %896, %897 : vector<1x128xf32>
      %899 = vector.broadcast %cst_32 : f32 to vector<1x128xf32>
      %900 = arith.mulf %898, %899 : vector<1x128xf32>
      %901 = math.exp %900 : vector<1x128xf32>
      %902 = arith.cmpf ole, %876, %893 : vector<1x128xf32>
      %903 = arith.mulf %895, %901 : vector<1x128xf32>
      %904 = arith.addf %887, %903 : vector<1x128xf32>
      %905 = arith.mulf %887, %901 : vector<1x128xf32>
      %906 = arith.addf %905, %895 : vector<1x128xf32>
      %907 = arith.select %902, %904, %906 : vector<1x128xi1>, vector<1x128xf32>
      %c4_i32_226 = arith.constant 4 : i32
      %908 = tpu.dynamic_rotate %896 by %c4_i32_226 dim 1 : vector<1x128xf32>, i32 -> vector<1x128xf32>
      %c4_i32_227 = arith.constant 4 : i32
      %909 = tpu.dynamic_rotate %907 by %c4_i32_227 dim 1 : vector<1x128xf32>, i32 -> vector<1x128xf32>
      %c4_i32_228 = arith.constant 4 : i32
      %910 = vector.broadcast %c4_i32_228 : i32 to vector<1x128xi32>
      %911 = arith.cmpi sge, %21, %910 : vector<1x128xi32>
      %912 = vector.broadcast %cst_31 : f32 to vector<1x128xf32>
      %913 = arith.select %911, %908, %912 : vector<1x128xi1>, vector<1x128xf32>
      %cst_229 = arith.constant 0.000000e+00 : f32
      %914 = vector.broadcast %cst_229 : f32 to vector<1x128xf32>
      %915 = arith.select %911, %909, %914 : vector<1x128xi1>, vector<1x128xf32>
      %916 = arith.minimumf %896, %913 : vector<1x128xf32>
      %917 = arith.maximumf %896, %913 : vector<1x128xf32>
      %918 = arith.subf %916, %917 : vector<1x128xf32>
      %919 = vector.broadcast %cst_32 : f32 to vector<1x128xf32>
      %920 = arith.mulf %918, %919 : vector<1x128xf32>
      %921 = math.exp %920 : vector<1x128xf32>
      %922 = arith.cmpf ole, %896, %913 : vector<1x128xf32>
      %923 = arith.mulf %915, %921 : vector<1x128xf32>
      %924 = arith.addf %907, %923 : vector<1x128xf32>
      %925 = arith.mulf %907, %921 : vector<1x128xf32>
      %926 = arith.addf %925, %915 : vector<1x128xf32>
      %927 = arith.select %922, %924, %926 : vector<1x128xi1>, vector<1x128xf32>
      %c8_i32_230 = arith.constant 8 : i32
      %928 = tpu.dynamic_rotate %916 by %c8_i32_230 dim 1 : vector<1x128xf32>, i32 -> vector<1x128xf32>
      %c8_i32_231 = arith.constant 8 : i32
      %929 = tpu.dynamic_rotate %927 by %c8_i32_231 dim 1 : vector<1x128xf32>, i32 -> vector<1x128xf32>
      %c8_i32_232 = arith.constant 8 : i32
      %930 = vector.broadcast %c8_i32_232 : i32 to vector<1x128xi32>
      %931 = arith.cmpi sge, %21, %930 : vector<1x128xi32>
      %932 = vector.broadcast %cst_31 : f32 to vector<1x128xf32>
      %933 = arith.select %931, %928, %932 : vector<1x128xi1>, vector<1x128xf32>
      %cst_233 = arith.constant 0.000000e+00 : f32
      %934 = vector.broadcast %cst_233 : f32 to vector<1x128xf32>
      %935 = arith.select %931, %929, %934 : vector<1x128xi1>, vector<1x128xf32>
      %936 = arith.minimumf %916, %933 : vector<1x128xf32>
      %937 = arith.maximumf %916, %933 : vector<1x128xf32>
      %938 = arith.subf %936, %937 : vector<1x128xf32>
      %939 = vector.broadcast %cst_32 : f32 to vector<1x128xf32>
      %940 = arith.mulf %938, %939 : vector<1x128xf32>
      %941 = math.exp %940 : vector<1x128xf32>
      %942 = arith.cmpf ole, %916, %933 : vector<1x128xf32>
      %943 = arith.mulf %935, %941 : vector<1x128xf32>
      %944 = arith.addf %927, %943 : vector<1x128xf32>
      %945 = arith.mulf %927, %941 : vector<1x128xf32>
      %946 = arith.addf %945, %935 : vector<1x128xf32>
      %947 = arith.select %942, %944, %946 : vector<1x128xi1>, vector<1x128xf32>
      %c16_i32_234 = arith.constant 16 : i32
      %948 = tpu.dynamic_rotate %936 by %c16_i32_234 dim 1 : vector<1x128xf32>, i32 -> vector<1x128xf32>
      %c16_i32_235 = arith.constant 16 : i32
      %949 = tpu.dynamic_rotate %947 by %c16_i32_235 dim 1 : vector<1x128xf32>, i32 -> vector<1x128xf32>
      %c16_i32_236 = arith.constant 16 : i32
      %950 = vector.broadcast %c16_i32_236 : i32 to vector<1x128xi32>
      %951 = arith.cmpi sge, %21, %950 : vector<1x128xi32>
      %952 = vector.broadcast %cst_31 : f32 to vector<1x128xf32>
      %953 = arith.select %951, %948, %952 : vector<1x128xi1>, vector<1x128xf32>
      %cst_237 = arith.constant 0.000000e+00 : f32
      %954 = vector.broadcast %cst_237 : f32 to vector<1x128xf32>
      %955 = arith.select %951, %949, %954 : vector<1x128xi1>, vector<1x128xf32>
      %956 = arith.minimumf %936, %953 : vector<1x128xf32>
      %957 = arith.maximumf %936, %953 : vector<1x128xf32>
      %958 = arith.subf %956, %957 : vector<1x128xf32>
      %959 = vector.broadcast %cst_32 : f32 to vector<1x128xf32>
      %960 = arith.mulf %958, %959 : vector<1x128xf32>
      %961 = math.exp %960 : vector<1x128xf32>
      %962 = arith.cmpf ole, %936, %953 : vector<1x128xf32>
      %963 = arith.mulf %955, %961 : vector<1x128xf32>
      %964 = arith.addf %947, %963 : vector<1x128xf32>
      %965 = arith.mulf %947, %961 : vector<1x128xf32>
      %966 = arith.addf %965, %955 : vector<1x128xf32>
      %967 = arith.select %962, %964, %966 : vector<1x128xi1>, vector<1x128xf32>
      %c1_i32_238 = arith.constant 1 : i32
      %968 = tpu.dynamic_rotate %956 by %c1_i32_238 dim 1 : vector<1x128xf32>, i32 -> vector<1x128xf32>
      %c1_i32_239 = arith.constant 1 : i32
      %969 = tpu.dynamic_rotate %967 by %c1_i32_239 dim 1 : vector<1x128xf32>, i32 -> vector<1x128xf32>
      %970 = arith.select %39, %956, %968 : vector<1x128xi1>, vector<1x128xf32>
      %971 = arith.select %39, %967, %969 : vector<1x128xi1>, vector<1x128xf32>
      %972 = math.log %971 : vector<1x128xf32>
      %973 = vector.broadcast %cst_33 : f32 to vector<1x128xf32>
      %974 = arith.mulf %973, %972 : vector<1x128xf32>
      %975 = arith.subf %970, %974 : vector<1x128xf32>
      %c0_240 = arith.constant 0 : index
      %976 = arith.index_cast %c7_i32 : i32 to index
      %c0_241 = arith.constant 0 : index
      %977 = vector.load %arg5[%c0_240, %976, %c0_241] : memref<1x8x128xf32, #tpu.memory_space<vmem>>, vector<1x1x128xf32>
      %978 = vector.shape_cast %977 : vector<1x1x128xf32> to vector<1x128xf32>
      %979 = arith.addf %975, %978 : vector<1x128xf32>
      %c8_i32_242 = arith.constant 8 : i32
      %c0_243 = arith.constant 0 : index
      %c0_244 = arith.constant 0 : index
      %980 = vector.load %arg6[%c0_243, %c0_244] : memref<1x128xf32, #tpu.memory_space<vmem>>, vector<1x128xf32>
      tpu.vector_store %arg6[%c0_243, %c0_244], %979 {strides = array<i32>} : memref<1x128xf32, #tpu.memory_space<vmem>>, vector<1x128xf32>,
    } else {
    }
    %c0_i32_35 = arith.constant 0 : i32
    %72 = arith.cmpi eq, %arg1, %c0_i32_35 : i32
    %73 = arith.extui %72 : i1 to i32
    %cst_36 = arith.constant 1.000000e+02 : f32
    %cst_37 = arith.constant 0.00999999977 : f32
    %c0_i32_38 = arith.constant 0 : i32
    %74 = arith.cmpi ne, %73, %c0_i32_38 : i32
    scf.if %74 {
      %c0_39 = arith.constant 0 : index
      %c0_40 = arith.constant 0 : index
      %75 = vector.load %arg6[%c0_39, %c0_40] : memref<1x128xf32, #tpu.memory_space<vmem>>, vector<1x128xf32>
      %cst_41 = arith.constant dense<0x7F800000> : vector<1xf32>
      %76 = vector.multi_reduction <minimumf>, %75, %cst_41 [1] : vector<1x128xf32> to vector<1xf32>
      %77 = vector.shape_cast %76 : vector<1xf32> to vector<1x1xf32>
      %78 = vector.broadcast %77 : vector<1x1xf32> to vector<1x128xf32>
      %79 = arith.subf %78, %75 : vector<1x128xf32>
      %80 = vector.broadcast %cst_36 : f32 to vector<1x128xf32>
      %81 = arith.mulf %79, %80 : vector<1x128xf32>
      %82 = math.exp %81 : vector<1x128xf32>
      %cst_42 = arith.constant dense<0.000000e+00> : vector<1xf32>
      %83 = vector.multi_reduction <add>, %82, %cst_42 [1] : vector<1x128xf32> to vector<1xf32>
      %84 = vector.shape_cast %83 : vector<1xf32> to vector<1x1xf32>
      %85 = math.log %84 : vector<1x1xf32>
      %86 = vector.broadcast %cst_37 : f32 to vector<1x1xf32>
      %87 = arith.mulf %86, %85 : vector<1x1xf32>
      %88 = arith.subf %77, %87 : vector<1x1xf32>
      %cst_43 = arith.constant 1.250000e-01 : f32
      %89 = vector.broadcast %cst_43 : f32 to vector<1x1xf32>
      %90 = arith.mulf %88, %89 : vector<1x1xf32>
      %c0_44 = arith.constant 0 : index
      %c0_45 = arith.constant 0 : index
      %c0_46 = arith.constant 0 : index
      %91 = vector.load %arg4[%c0_44, %c0_45, %c0_46] : memref<1x1x1xf32, #tpu.memory_space<vmem>>, vector<1x1x1xf32>
      %92 = vector.shape_cast %91 : vector<1x1x1xf32> to vector<1x1xf32>
      %93 = vector.shape_cast %90 : vector<1x1xf32> to vector<1x1x1xf32>
      tpu.vector_store %arg4[%c0_44, %c0_45, %c0_46], %93 {strides = array<i32>} : memref<1x1x1xf32, #tpu.memory_space<vmem>>, vector<1x1x1xf32>,
    } else {
    }
    return
  }
  func.func @transform_0(%arg0: i32, %arg1: i32) -> (i32, i32, i32) {
    %c0_i32 = arith.constant 0 : i32
    %c0_i32_0 = arith.constant 0 : i32
    return %arg0, %arg1, %c0_i32 : i32, i32, i32
  }
  func.func @transform_1(%arg0: i32, %arg1: i32) -> (i32, i32, i32) {
    %c0_i32 = arith.constant 0 : i32
    %c0_i32_0 = arith.constant 0 : i32
    %c0_i32_1 = arith.constant 0 : i32
    return %arg0, %c0_i32, %c0_i32_0 : i32, i32, i32
  }
  func.func @transform_2(%arg0: i32, %arg1: i32) -> (i32, i32, i32) {
    %c0_i32 = arith.constant 0 : i32
    %c0_i32_0 = arith.constant 0 : i32
    %c0_i32_1 = arith.constant 0 : i32
    return %arg0, %c0_i32, %c0_i32_0 : i32, i32, i32
  }
}

</mosaic_0001>

<llo_original>
// kernel: tpu_custom_call.1
$region0: #{tpu_custom_call.1}
  #allocation0 [shape = 'u32[]', space=smem, size = 0x4, offset = 0x4, fixed_abs, tag = 'smem constant byte address 0x4 - core index']
  #allocation1 [shape = 'u32[144,128]{1,0:T(1,128)}', space=vmem, size = 0x12000, scoped, tag = 'internal scratch']
  #allocation2 [shape = 'f32[1,8,128]{2,1,0:T(8,128)}', space=vmem, size = 0x1000, scoped, tag = 'scratch operand']
  #allocation3 [shape = 'f32[1,128]{1,0:T(1,128)}', space=vmem, size = 0x200, scoped, tag = 'scratch operand']
  %s0 = inlined_call_operand.hbm [shape: f32[2,8,32], index: 0, kind: input, shape index: {}]
  %s1 = inlined_call_operand.hbm [shape: f32[2,32,128], index: 1, kind: input, shape index: {}]
  %s2 = inlined_call_operand.vmem [shape: f32[2,1,1], index: 2, kind: output, shape index: {}]
  %s3 = sld [smem:[#allocation0]]
  $region61: #{tpu_custom_call.1} parent=0
    _
  %s5 = ssub.s32 1, %s3
  %s6 = scalar_select 0, %s5, %s3
  $region1: #{tpu_custom_call.1} parent=0
    #allocation4 [shape = 'u8[8192]{0}', space=vmem, size = 0x2000, scoped, tag = 'input window, operand 0']
    #allocation5 [shape = 's32[2]{0}', space=sflag, size = 0x8, scoped, tag = 'scoped memory for tpu_custom_call.1']
    #allocation6 [shape = 'u8[32768]{0}', space=vmem, size = 0x8000, scoped, tag = 'input window, operand 1']
    #allocation7 [shape = 's32[2]{0}', space=sflag, size = 0x8, scoped, tag = 'scoped memory for tpu_custom_call.1']
    %7 = vsyncpa [#allocation5], 0
    %s8 = scalar_lea.sflag [#allocation5], 1
    %9 = vsyncpa %s8, 0
    %10 = vsyncpa [#allocation7], 0
    %s11 = scalar_lea.sflag [#allocation7], 1
    %12 = vsyncpa %s11, 0
    loop: start=0, step=1, limit=4
    $region2: #{tpu_custom_call.1} parent=1 // loop_pre_header
      _
    $region3: #{tpu_custom_call.1} parent=1 // loop_header
      %s14 = sphi 0, %s18
      %p15 = scmp.ge.s32.totalorder %s14, 4
      %s21 = sphi 0, %s33
      %s22 = sphi 0, %s29
      %s23 = sphi 0, %s21
      %s24 = sphi 0, %s22
      %s25 = sphi 0, %s23
      %s26 = sphi 0, %s24
      %s38 = sphi 0, %s40
      %s41 = sphi 0, %s38
      %s42 = sphi 0, %s41
      %s58 = sphi 0, %s42
      %s64 = sphi 0, %s66
      %s67 = sphi 0, %s64
      %s68 = sphi 0, %s67
      %s84 = sphi 0, %s68
      %s90 = sphi 0, %s92
      %s93 = sphi 0, %s90
      %s94 = sphi 0, %s93
      %s110 = sphi 0, %s94
    $region4: #{tpu_custom_call.1} parent=1 // loop_header_branch
      %17 = sbr.rel (%p15) target = $region8
    $region5: #{tpu_custom_call.1} parent=1 // loop_body
      %s19 = ssub.s32 %s14, 1
      %s20 = ssub.s32 %s14, 2
      %s27 = sadd.s32 1, %s22
      %p28 = scmp.ge.s32.totalorder %s27, 1
      %s29 = scalar_select %p28, 0, %s27
      %s30 = sadd.s32 1, %s21
      %s31 = scalar_select %p28, %s30, %s21
      %p32 = scmp.ge.s32.totalorder %s31, 2
      %s33 = scalar_select %p32, 0, %s31
      %s34 = ssub.s32 %s21, %s33
      %s35 = ssub.s32 %s22, %s29
      %s36 = sor.u32 %s34, %s35
      %p37 = scmp.eq.s32.totalorder %s36, 0
      %s39 = sadd.s32 %s38, 1
      %s40 = scalar_select %p37, %s38, %s39
      %p43 = pneg %p37
      %p44 = scmp.eq.s32.totalorder %s14, 1
      %p45 = por %p43, %p44
      %p46 = scmp.ne.s32.totalorder %s38, %s41
      %p47 = scmp.eq.s32.totalorder %s14, 0
      %p48 = por %p46, %p47
      %p49 = scmp.ne.s32.totalorder %s38, %s41
      %p50 = scmp.eq.s32.totalorder %s19, 1
      %p51 = por %p49, %p50
      %p52 = scmp.ne.s32.totalorder %s41, %s42
      %p53 = scmp.eq.s32.totalorder %s19, 0
      %p54 = por %p52, %p53
      %p55 = scmp.ne.s32.totalorder %s41, %s42
      %p56 = scmp.eq.s32.totalorder %s20, 1
      %p57 = por %p55, %p56
      %p59 = scmp.ne.s32.totalorder %s42, %s58
      %p60 = scmp.eq.s32.totalorder %s20, 0
      %p61 = por %p59, %p60
      %s62 = ssub.s32 %s21, %s33
      %p63 = scmp.eq.s32.totalorder %s62, 0
      %s65 = sadd.s32 %s64, 1
      %s66 = scalar_select %p63, %s64, %s65
      %p69 = pneg %p63
      %p70 = scmp.eq.s32.totalorder %s14, 1
      %p71 = por %p69, %p70
      %p72 = scmp.ne.s32.totalorder %s64, %s67
      %p73 = scmp.eq.s32.totalorder %s14, 0
      %p74 = por %p72, %p73
      %p75 = scmp.ne.s32.totalorder %s64, %s67
      %p76 = scmp.eq.s32.totalorder %s19, 1
      %p77 = por %p75, %p76
      %p78 = scmp.ne.s32.totalorder %s67, %s68
      %p79 = scmp.eq.s32.totalorder %s19, 0
      %p80 = por %p78, %p79
      %p81 = scmp.ne.s32.totalorder %s67, %s68
      %p82 = scmp.eq.s32.totalorder %s20, 1
      %p83 = por %p81, %p82
      %p85 = scmp.ne.s32.totalorder %s68, %s84
      %p86 = scmp.eq.s32.totalorder %s20, 0
      %p87 = por %p85, %p86
      %s88 = ssub.s32 %s21, %s33
      %p89 = scmp.eq.s32.totalorder %s88, 0
      %s91 = sadd.s32 %s90, 1
      %s92 = scalar_select %p89, %s90, %s91
      %p95 = pneg %p89
      %p96 = scmp.eq.s32.totalorder %s14, 1
      %p97 = por %p95, %p96
      %p98 = scmp.ne.s32.totalorder %s90, %s93
      %p99 = scmp.eq.s32.totalorder %s14, 0
      %p100 = por %p98, %p99
      %p101 = scmp.ne.s32.totalorder %s90, %s93
      %p102 = scmp.eq.s32.totalorder %s19, 1
      %p103 = por %p101, %p102
      %p104 = scmp.ne.s32.totalorder %s93, %s94
      %p105 = scmp.eq.s32.totalorder %s19, 0
      %p106 = por %p104, %p105
      %p107 = scmp.ne.s32.totalorder %s93, %s94
      %p108 = scmp.eq.s32.totalorder %s20, 1
      %p109 = por %p107, %p108
      %p111 = scmp.ne.s32.totalorder %s94, %s110
      %p112 = scmp.eq.s32.totalorder %s20, 0
      %p113 = por %p111, %p112
      %p114 = scmp.le.s32.totalorder 1, %s14
      %p115 = scmp.lt.s32.totalorder %s14, 3
      %p116 = pnand %p114, %p115
      %p117 = pneg %p116
      // Predicated region
      $region9: #{tpu_custom_call.1} parent=5 // pred_check
        _
      $region10: #{tpu_custom_call.1} parent=5 // pred_check_branch
        %119 = sbr.rel (%p116) target = $region12
      $region11: #{tpu_custom_call.1} parent=5 // pred_region
        %s120 = ssub.s32 %s14, 1
      $region12: #{tpu_custom_call.1} parent=5 // pred_fallthru
        _
      %p121 = scmp.lt.s32.totalorder %s14, 2
      // Predicated region
      $region13: #{tpu_custom_call.1} parent=5 // pred_check
        %p122 = pneg %p121
      $region14: #{tpu_custom_call.1} parent=5 // pred_check_branch
        %124 = sbr.rel (%p122) target = $region16
      $region15: #{tpu_custom_call.1} parent=5 // pred_region
        // Predicated region
        $region17: #{tpu_custom_call.1} parent=15 // pred_check
          %p125 = pneg %p48
        $region18: #{tpu_custom_call.1} parent=15 // pred_check_branch
          %127 = sbr.rel (%p125) target = $region20
        $region19: #{tpu_custom_call.1} parent=15 // pred_region
          %s128 = sand.u32 %s38, 1
          %s129 = scalar_lea.sflag [#allocation5], %s128
          %s130 = sand.u32 %s38, 1
          %s131 = smul.addr %s130, 8
          %s132 = scalar_lea.vmem [#allocation4], %s131
          %s134 = ssub.s32 128, 128
          %135 = vsyncadd %s129, %s134
          %s136 = sadd.s32 %s22, %s21
          %s137 = smul.addr %s136, 128
          %s138 = scalar_lea.hbm %s0, %s137
          %s140 = sshll.u32 %s132, 4
          %s141 = int_to_ptr.vmem [resolvable:$true] %s140
          %143 = dma.hbm_to_vmem [thread:$0]  %s138, 128, %s141, %s129
        $region20: #{tpu_custom_call.1} parent=15 // pred_fallthru
          _
        // Predicated region
        $region21: #{tpu_custom_call.1} parent=15 // pred_check
          %p144 = pneg %p74
        $region22: #{tpu_custom_call.1} parent=15 // pred_check_branch
          %146 = sbr.rel (%p144) target = $region24
        $region23: #{tpu_custom_call.1} parent=15 // pred_region
          %s147 = sand.u32 %s64, 1
          %s148 = scalar_lea.sflag [#allocation7], %s147
          %s149 = sand.u32 %s64, 1
          %s150 = smul.addr %s149, 32
          %s151 = scalar_lea.vmem [#allocation6], %s150
          %s153 = ssub.s32 512, 512
          %154 = vsyncadd %s148, %s153
          %s155 = smul.addr %s21, 4
          %s156 = smul.addr %s155, 128
          %s157 = scalar_lea.hbm %s1, %s156
          %s158 = sshll.u32 %s151, 4
          %s159 = int_to_ptr.vmem [resolvable:$true] %s158
          %164 = dma.hbm_to_vmem [thread:$0]  %s157, 512, %s159, %s148, 128, 128, 8
        $region24: #{tpu_custom_call.1} parent=15 // pred_fallthru
          _
      $region16: #{tpu_custom_call.1} parent=5 // pred_fallthru
        _
      %p165 = scmp.le.s32.totalorder 1, %s14
      %p166 = scmp.lt.s32.totalorder %s14, 3
      %p167 = pnand %p165, %p166
      %p168 = pneg %p167
      // Predicated region
      $region25: #{tpu_custom_call.1} parent=5 // pred_check
        _
      $region26: #{tpu_custom_call.1} parent=5 // pred_check_branch
        %170 = sbr.rel (%p167) target = $region28
      $region27: #{tpu_custom_call.1} parent=5 // pred_region
        %s171 = ssub.s32 %s14, 1
        %s172 = sand.u32 %s41, 1
        %s173 = scalar_lea.sflag [#allocation5], %s172
        %s174 = sand.u32 %s41, 1
        %s175 = smul.addr %s174, 8
        %s176 = scalar_lea.vmem [#allocation4], %s175
        // Predicated region
        $region29: #{tpu_custom_call.1} parent=27 // pred_check
          %p177 = pneg %p54
        $region30: #{tpu_custom_call.1} parent=27 // pred_check_branch
          %179 = sbr.rel (%p177) target = $region32
        $region31: #{tpu_custom_call.1} parent=27 // pred_region
          %180 = dma.done %s173, 128
        $region32: #{tpu_custom_call.1} parent=27 // pred_fallthru
          _
        %s181 = sand.u32 %s67, 1
        %s182 = scalar_lea.sflag [#allocation7], %s181
        %s183 = sand.u32 %s67, 1
        %s184 = smul.addr %s183, 32
        %s185 = scalar_lea.vmem [#allocation6], %s184
        // Predicated region
        $region33: #{tpu_custom_call.1} parent=27 // pred_check
          %p186 = pneg %p80
        $region34: #{tpu_custom_call.1} parent=27 // pred_check_branch
          %188 = sbr.rel (%p186) target = $region36
        $region35: #{tpu_custom_call.1} parent=27 // pred_region
          %189 = dma.done %s182, 512
        $region36: #{tpu_custom_call.1} parent=27 // pred_fallthru
          _
        %s190 = sand.u32 %s41, 1
        %s191 = scalar_lea.sflag [#allocation5], %s190
        %s192 = sand.u32 %s41, 1
        %s193 = smul.addr %s192, 8
        %s194 = scalar_lea.vmem [#allocation4], %s193
        %p195 = pneg %p54
        %p196 = pneg %p51
        %s197 = sand.u32 %s67, 1
        %s198 = scalar_lea.sflag [#allocation7], %s197
        %s199 = sand.u32 %s67, 1
        %s200 = smul.addr %s199, 32
        %s201 = scalar_lea.vmem [#allocation6], %s200
        %p202 = pneg %p80
        %p203 = pneg %p77
        %p204 = pneg %p106
        %p205 = pneg %p103
        %p206 = scmp.lt.s32.totalorder %s23, 1
        %s207 = scalar_select %p206, %s23, 1
        %s208 = scalar_lea.vmem %s2, %s207
        %p209 = scmp.lt.s32.totalorder %s23, 1
        %s210 = scalar_select %p209, %s23, 1
        %s211 = scalar_lea.vmem %s2, %s210
        %v212 = vlaneseq
        %v213 = vand.u32 %v212, 127
        %vm214 = vcmp.lt.s32.totalorder %v213, 17
        %vm215 = vcmp.lt.s32.totalorder %v213, 0
        %v216 = vsub.s32 0, %v213
        %v217 = vsel %vm215, %v216, %v213
        %v218 = vshrl.u32 %v217, 1
        %v219 = vand.u32 %v217, 1
        %v220 = vsub.s32 0, %v219
        %v221 = vsel %vm215, %v220, %v219
        %vm222 = vcmp.ne.s32.totalorder %v221, 0
        %vm223 = vcmp.lt.s32.totalorder %v221, 0
        %vm224 = vmand %vm223, %vm222
        %v225 = vadd.s32 %v221, 2
        %v226 = vsel %vm224, %v225, %v221
        %vm227 = vcmp.eq.s32.totalorder %v226, 0
        %v228 = vld [vmem:[%s176] sm:$0xff]
        %v229 = vld [vmem:[%s185] sm:$0xff]
        %v230 = vld [vmem:[%s185 + $0x8] sm:$0xff]
        %v231 = vld [vmem:[%s185 + $0x10] sm:$0xff]
        %v232 = vld [vmem:[%s185 + $0x18] sm:$0xff]
        %vm233 = vcmask 261120
        %v235 = vsel %vm233, %v228, 0
        %237 = vmatprep.subr.mxu0 0.0
        %238 = vmatpush1.msra.mxu0 %v229
        %239 = vmatprep.subr.mxu0 0.0
        %240 = vmatpush1.msra.mxu0 %v230
        %241 = vmatprep.subr.mxu0 0.0
        %242 = vmatpush1.msra.mxu0 %v231
        %243 = vmatprep.subr.mxu0 0.0
        %244 = vmatpush1.msra.mxu0 %v232
        %245 = vmatprep.subr.mxu0 0.0
        %246 = vmatpush1.msra.mxu0 0.0
        %247 = vmatprep.subr.mxu0 0.0
        %248 = vmatpush1.msra.mxu0 0.0
        %249 = vmatprep.subr.mxu0 0.0
        %250 = vmatpush1.msra.mxu0 0.0
        %251 = vmatprep.subr.mxu0 0.0
        %252 = vmatpush1.msra.mxu0 0.0
        %253 = vmatprep.subr.mxu0 0.0
        %254 = vmatpush1.msra.mxu0 0.0
        %255 = vmatprep.subr.mxu0 0.0
        %256 = vmatpush1.msra.mxu0 0.0
        %257 = vmatprep.subr.mxu0 0.0
        %258 = vmatpush1.msra.mxu0 0.0
        %259 = vmatprep.subr.mxu0 0.0
        %260 = vmatpush1.msra.mxu0 0.0
        %261 = vmatprep.subr.mxu0 0.0
        %262 = vmatpush1.msra.mxu0 0.0
        %263 = vmatprep.subr.mxu0 0.0
        %264 = vmatpush1.msra.mxu0 0.0
        %265 = vmatprep.subr.mxu0 0.0
        %266 = vmatpush1.msra.mxu0 0.0
        %267 = vmatprep.subr.mxu0 0.0
        %268 = vmatpush1.msra.mxu0 0.0
        %269 = vmatprep.subr.mxu0 0.0
        %270 = vmatpush1.msra.mxu0 0.0
        %271 = vmatprep.subr.mxu0 0.0
        %272 = vmatpush1.msra.mxu0 0.0
        %273 = vmatprep.subr.mxu0 0.0
        %274 = vmatpush1.msra.mxu0 0.0
        %275 = vmatprep.subr.mxu0 0.0
        %276 = vmatpush1.msra.mxu0 0.0
        %277 = vmatprep.subr.mxu0 0.0
        %278 = vmatpush1.msra.mxu0 0.0
        %279 = vmatprep.subr.mxu0 0.0
        %280 = vmatpush1.msra.mxu0 0.0
        %281 = vmatprep.subr.mxu0 0.0
        %282 = vmatpush1.msra.mxu0 0.0
        %283 = vmatprep.subr.mxu0 0.0
        %284 = vmatpush1.msra.mxu0 0.0
        %285 = vmatprep.subr.mxu0 0.0
        %286 = vmatpush1.msra.mxu0 0.0
        %287 = vmatprep.subr.mxu0 0.0
        %288 = vmatpush1.msra.mxu0 0.0
        %289 = vmatprep.subr.mxu0 0.0
        %290 = vmatpush1.msra.mxu0 0.0
        %291 = vmatprep.subr.mxu0 0.0
        %292 = vmatpush1.msra.mxu0 0.0
        %293 = vmatprep.subr.mxu0 0.0
        %294 = vmatpush1.msra.mxu0 0.0
        %295 = vmatprep.subr.mxu0 0.0
        %296 = vmatpush1.msra.mxu0 0.0
        %297 = vmatprep.subr.mxu0 0.0
        %298 = vmatpush1.msra.mxu0 0.0
        %299 = vmatprep.subr.mxu0 0.0
        %300 = vmatpush1.msra.mxu0 0.0
        %301 = vmatprep.mubr.f32.mxu0 0.0
        %302 = vmatmul.mubr.f32.gmra.mrb[0].mxu0 %v235
        %v303 = vpop.f32.mrb[0].mxu0
        %v304 = vadd.f32 0.0, %v303
        %v305 = vpop.f32.mrb[0].mxu0
        %306 = vdwg.mxu0
        %v307 = vsub.f32 1.0, %v304
        %v308 = vsel %vm227, 2.0, %v307
        %v309 = vsel %vm214, %v308, -1e+30
        %310 = vmax.xlane.f32.xlu0 %v309
        %v311 = vpop.xlane.xlu0 %310
        %v312 = vsub.f32 %v309, %v311
        %v313 = vmul.f32 %v312, 1.442695
        %v314 = vpow.pop %v313
        %315 = vadd.xlane.f32.xlu0 %v314
        %v316 = vpop.xlane.xlu0 %315
        %v317 = vrcp.pop %v316
        %v318 = vmul.f32 %v314, %v317
        %v319 = vsel %vm214, %v318, 1e+30
        %320 = vst [vmem:[#allocation2] sm:$0xff] %v319
        %p321 = scmp.eq.s32.totalorder %s24, 0
        // Predicated region
        $region37: #{tpu_custom_call.1} parent=27 // pred_check
          %p322 = pneg %p321
        $region38: #{tpu_custom_call.1} parent=27 // pred_check_branch
          %324 = sbr.rel (%p322) target = $region40
        $region39: #{tpu_custom_call.1} parent=27 // pred_region
          %v325 = vld [vmem:[#allocation2] sm:$0x1]
          %326 = vrot.lane.b32.xlu0 %v325, 1
          %v327 = vpop.permute.xlu0 %326
          %328 = vrot.lane.b32.xlu0 1.0, 1
          %v329 = vpop.permute.xlu0 %328
          %vm330 = vcmp.ge.s32.totalorder %v213, 1
          %v331 = vsel %vm330, %v327, 1e+30
          %v332 = vsel %vm330, %v329, 0.0
          %v333 = vmin.f32 %v325, %v331
          %v334 = vmax.f32 %v325, %v331
          %v335 = vsub.f32 %v333, %v334
          %v336 = vmul.f32 %v335, 100.0
          %v337 = vmul.f32 %v336, 1.442695
          %v338 = vpow.pop %v337
          %vm339 = vcmp.le.f32.partialorder %v325, %v331
          %v340 = vmul.f32 %v332, %v338
          %v341 = vadd.f32 %v340, 1.0
          %v342 = vadd.f32 %v338, %v332
          %v343 = vsel %vm339, %v341, %v342
          %344 = vrot.lane.b32.xlu0 %v333, 2
          %v345 = vpop.permute.xlu0 %344
          %346 = vrot.lane.b32.xlu0 %v343, 2
          %v347 = vpop.permute.xlu0 %346
          %vm348 = vcmp.ge.s32.totalorder %v213, 2
          %v349 = vsel %vm348, %v345, 1e+30
          %v350 = vsel %vm348, %v347, 0.0
          %v351 = vmin.f32 %v333, %v349
          %v352 = vmax.f32 %v333, %v349
          %v353 = vsub.f32 %v351, %v352
          %v354 = vmul.f32 %v353, 100.0
          %v355 = vmul.f32 %v354, 1.442695
          %v356 = vpow.pop %v355
          %vm357 = vcmp.le.f32.partialorder %v333, %v349
          %v358 = vmul.f32 %v350, %v356
          %v359 = vadd.f32 %v343, %v358
          %v360 = vmul.f32 %v343, %v356
          %v361 = vadd.f32 %v360, %v350
          %v362 = vsel %vm357, %v359, %v361
          %363 = vrot.lane.b32.xlu0 %v351, 4
          %v364 = vpop.permute.xlu0 %363
          %365 = vrot.lane.b32.xlu0 %v362, 4
          %v366 = vpop.permute.xlu0 %365
          %vm367 = vcmp.ge.s32.totalorder %v213, 4
          %v368 = vsel %vm367, %v364, 1e+30
          %v369 = vsel %vm367, %v366, 0.0
          %v370 = vmin.f32 %v351, %v368
          %v371 = vmax.f32 %v351, %v368
          %v372 = vsub.f32 %v370, %v371
          %v373 = vmul.f32 %v372, 100.0
          %v374 = vmul.f32 %v373, 1.442695
          %v375 = vpow.pop %v374
          %vm376 = vcmp.le.f32.partialorder %v351, %v368
          %v377 = vmul.f32 %v369, %v375
          %v378 = vadd.f32 %v362, %v377
          %v379 = vmul.f32 %v362, %v375
          %v380 = vadd.f32 %v379, %v369
          %v381 = vsel %vm376, %v378, %v380
          %382 = vrot.lane.b32.xlu0 %v370, 8
          %v383 = vpop.permute.xlu0 %382
          %384 = vrot.lane.b32.xlu0 %v381, 8
          %v385 = vpop.permute.xlu0 %384
          %vm386 = vcmp.ge.s32.totalorder %v213, 8
          %v387 = vsel %vm386, %v383, 1e+30
          %v388 = vsel %vm386, %v385, 0.0
          %v389 = vmin.f32 %v370, %v387
          %v390 = vmax.f32 %v370, %v387
          %v391 = vsub.f32 %v389, %v390
          %v392 = vmul.f32 %v391, 100.0
          %v393 = vmul.f32 %v392, 1.442695
          %v394 = vpow.pop %v393
          %vm395 = vcmp.le.f32.partialorder %v370, %v387
          %v396 = vmul.f32 %v388, %v394
          %v397 = vadd.f32 %v381, %v396
          %v398 = vmul.f32 %v381, %v394
          %v399 = vadd.f32 %v398, %v388
          %v400 = vsel %vm395, %v397, %v399
          %401 = vrot.lane.b32.xlu0 %v389, 16
          %v402 = vpop.permute.xlu0 %401
          %403 = vrot.lane.b32.xlu0 %v400, 16
          %v404 = vpop.permute.xlu0 %403
          %vm405 = vcmp.ge.s32.totalorder %v213, 16
          %v406 = vsel %vm405, %v402, 1e+30
          %v407 = vsel %vm405, %v404, 0.0
          %v408 = vmin.f32 %v389, %v406
          %v409 = vmax.f32 %v389, %v406
          %v410 = vsub.f32 %v408, %v409
          %v411 = vmul.f32 %v410, 100.0
          %v412 = vmul.f32 %v411, 1.442695
          %v413 = vpow.pop %v412
          %vm414 = vcmp.le.f32.partialorder %v389, %v406
          %v415 = vmul.f32 %v407, %v413
          %v416 = vadd.f32 %v400, %v415
          %v417 = vmul.f32 %v400, %v413
          %v418 = vadd.f32 %v417, %v407
          %v419 = vsel %vm414, %v416, %v418
          %420 = vrot.lane.b32.xlu0 %v408, 1
          %v421 = vpop.permute.xlu0 %420
          %422 = vrot.lane.b32.xlu0 %v419, 1
          %v423 = vpop.permute.xlu0 %422
          %v424 = vsel %vm227, %v408, %v421
          %v425 = vsel %vm227, %v419, %v423
          %v426 = vlog2.pop %v425
          %v427 = vmul.f32 %v426, 0.6931472
          %v428 = vmul.f32 %v427, 0.01
          %v429 = vsub.f32 %v424, %v428
          %v430 = vld [vmem:[#allocation2 + $0x1] sm:$0x1]
          %v431 = vadd.f32 %v429, %v430
          %432 = vrot.lane.b32.xlu0 %v431, 1
          %v433 = vpop.permute.xlu0 %432
          %v434 = vsel %vm330, %v433, 1e+30
          %v435 = vmin.f32 %v431, %v434
          %v436 = vmax.f32 %v431, %v434
          %v437 = vsub.f32 %v435, %v436
          %v438 = vmul.f32 %v437, 100.0
          %v439 = vmul.f32 %v438, 1.442695
          %v440 = vpow.pop %v439
          %vm441 = vcmp.le.f32.partialorder %v431, %v434
          %v442 = vmul.f32 %v332, %v440
          %v443 = vadd.f32 %v442, 1.0
          %v444 = vadd.f32 %v440, %v332
          %v445 = vsel %vm441, %v443, %v444
          %446 = vrot.lane.b32.xlu0 %v435, 2
          %v447 = vpop.permute.xlu0 %446
          %448 = vrot.lane.b32.xlu0 %v445, 2
          %v449 = vpop.permute.xlu0 %448
          %v450 = vsel %vm348, %v447, 1e+30
          %v451 = vsel %vm348, %v449, 0.0
          %v452 = vmin.f32 %v435, %v450
          %v453 = vmax.f32 %v435, %v450
          %v454 = vsub.f32 %v452, %v453
          %v455 = vmul.f32 %v454, 100.0
          %v456 = vmul.f32 %v455, 1.442695
          %v457 = vpow.pop %v456
          %vm458 = vcmp.le.f32.partialorder %v435, %v450
          %v459 = vmul.f32 %v451, %v457
          %v460 = vadd.f32 %v445, %v459
          %v461 = vmul.f32 %v445, %v457
          %v462 = vadd.f32 %v461, %v451
          %v463 = vsel %vm458, %v460, %v462
          %464 = vrot.lane.b32.xlu0 %v452, 4
          %v465 = vpop.permute.xlu0 %464
          %466 = vrot.lane.b32.xlu0 %v463, 4
          %v467 = vpop.permute.xlu0 %466
          %v468 = vsel %vm367, %v465, 1e+30
          %v469 = vsel %vm367, %v467, 0.0
          %v470 = vmin.f32 %v452, %v468
          %v471 = vmax.f32 %v452, %v468
          %v472 = vsub.f32 %v470, %v471
          %v473 = vmul.f32 %v472, 100.0
          %v474 = vmul.f32 %v473, 1.442695
          %v475 = vpow.pop %v474
          %vm476 = vcmp.le.f32.partialorder %v452, %v468
          %v477 = vmul.f32 %v469, %v475
          %v478 = vadd.f32 %v463, %v477
          %v479 = vmul.f32 %v463, %v475
          %v480 = vadd.f32 %v479, %v469
          %v481 = vsel %vm476, %v478, %v480
          %482 = vrot.lane.b32.xlu0 %v470, 8
          %v483 = vpop.permute.xlu0 %482
          %484 = vrot.lane.b32.xlu0 %v481, 8
          %v485 = vpop.permute.xlu0 %484
          %v486 = vsel %vm386, %v483, 1e+30
          %v487 = vsel %vm386, %v485, 0.0
          %v488 = vmin.f32 %v470, %v486
          %v489 = vmax.f32 %v470, %v486
          %v490 = vsub.f32 %v488, %v489
          %v491 = vmul.f32 %v490, 100.0
          %v492 = vmul.f32 %v491, 1.442695
          %v493 = vpow.pop %v492
          %vm494 = vcmp.le.f32.partialorder %v470, %v486
          %v495 = vmul.f32 %v487, %v493
          %v496 = vadd.f32 %v481, %v495
          %v497 = vmul.f32 %v481, %v493
          %v498 = vadd.f32 %v497, %v487
          %v499 = vsel %vm494, %v496, %v498
          %500 = vrot.lane.b32.xlu0 %v488, 16
          %v501 = vpop.permute.xlu0 %500
          %502 = vrot.lane.b32.xlu0 %v499, 16
          %v503 = vpop.permute.xlu0 %502
          %v504 = vsel %vm405, %v501, 1e+30
          %v505 = vsel %vm405, %v503, 0.0
          %v506 = vmin.f32 %v488, %v504
          %v507 = vmax.f32 %v488, %v504
          %v508 = vsub.f32 %v506, %v507
          %v509 = vmul.f32 %v508, 100.0
          %v510 = vmul.f32 %v509, 1.442695
          %v511 = vpow.pop %v510
          %vm512 = vcmp.le.f32.partialorder %v488, %v504
          %v513 = vmul.f32 %v505, %v511
          %v514 = vadd.f32 %v499, %v513
          %v515 = vmul.f32 %v499, %v511
          %v516 = vadd.f32 %v515, %v505
          %v517 = vsel %vm512, %v514, %v516
          %518 = vrot.lane.b32.xlu0 %v506, 1
          %v519 = vpop.permute.xlu0 %518
          %520 = vrot.lane.b32.xlu0 %v517, 1
          %v521 = vpop.permute.xlu0 %520
          %v522 = vsel %vm227, %v506, %v519
          %v523 = vsel %vm227, %v517, %v521
          %v524 = vlog2.pop %v523
          %v525 = vmul.f32 %v524, 0.6931472
          %v526 = vmul.f32 %v525, 0.01
          %v527 = vsub.f32 %v522, %v526
          %v528 = vld [vmem:[#allocation2 + $0x2] sm:$0x1]
          %v529 = vadd.f32 %v527, %v528
          %530 = vrot.lane.b32.xlu0 %v529, 1
          %v531 = vpop.permute.xlu0 %530
          %v532 = vsel %vm330, %v531, 1e+30
          %v533 = vmin.f32 %v529, %v532
          %v534 = vmax.f32 %v529, %v532
          %v535 = vsub.f32 %v533, %v534
          %v536 = vmul.f32 %v535, 100.0
          %v537 = vmul.f32 %v536, 1.442695
          %v538 = vpow.pop %v537
          %vm539 = vcmp.le.f32.partialorder %v529, %v532
          %v540 = vmul.f32 %v332, %v538
          %v541 = vadd.f32 %v540, 1.0
          %v542 = vadd.f32 %v538, %v332
          %v543 = vsel %vm539, %v541, %v542
          %544 = vrot.lane.b32.xlu0 %v533, 2
          %v545 = vpop.permute.xlu0 %544
          %546 = vrot.lane.b32.xlu0 %v543, 2
          %v547 = vpop.permute.xlu0 %546
          %v548 = vsel %vm348, %v545, 1e+30
          %v549 = vsel %vm348, %v547, 0.0
          %v550 = vmin.f32 %v533, %v548
          %v551 = vmax.f32 %v533, %v548
          %v552 = vsub.f32 %v550, %v551
          %v553 = vmul.f32 %v552, 100.0
          %v554 = vmul.f32 %v553, 1.442695
          %v555 = vpow.pop %v554
          %vm556 = vcmp.le.f32.partialorder %v533, %v548
          %v557 = vmul.f32 %v549, %v555
          %v558 = vadd.f32 %v543, %v557
          %v559 = vmul.f32 %v543, %v555
          %v560 = vadd.f32 %v559, %v549
          %v561 = vsel %vm556, %v558, %v560
          %562 = vrot.lane.b32.xlu0 %v550, 4
          %v563 = vpop.permute.xlu0 %562
          %564 = vrot.lane.b32.xlu0 %v561, 4
          %v565 = vpop.permute.xlu0 %564
          %v566 = vsel %vm367, %v563, 1e+30
          %v567 = vsel %vm367, %v565, 0.0
          %v568 = vmin.f32 %v550, %v566
          %v569 = vmax.f32 %v550, %v566
          %v570 = vsub.f32 %v568, %v569
          %v571 = vmul.f32 %v570, 100.0
          %v572 = vmul.f32 %v571, 1.442695
          %v573 = vpow.pop %v572
          %vm574 = vcmp.le.f32.partialorder %v550, %v566
          %v575 = vmul.f32 %v567, %v573
          %v576 = vadd.f32 %v561, %v575
          %v577 = vmul.f32 %v561, %v573
          %v578 = vadd.f32 %v577, %v567
          %v579 = vsel %vm574, %v576, %v578
          %580 = vrot.lane.b32.xlu0 %v568, 8
          %v581 = vpop.permute.xlu0 %580
          %582 = vrot.lane.b32.xlu0 %v579, 8
          %v583 = vpop.permute.xlu0 %582
          %v584 = vsel %vm386, %v581, 1e+30
          %v585 = vsel %vm386, %v583, 0.0
          %v586 = vmin.f32 %v568, %v584
          %v587 = vmax.f32 %v568, %v584
          %v588 = vsub.f32 %v586, %v587
          %v589 = vmul.f32 %v588, 100.0
          %v590 = vmul.f32 %v589, 1.442695
          %v591 = vpow.pop %v590
          %vm592 = vcmp.le.f32.partialorder %v568, %v584
          %v593 = vmul.f32 %v585, %v591
          %v594 = vadd.f32 %v579, %v593
          %v595 = vmul.f32 %v579, %v591
          %v596 = vadd.f32 %v595, %v585
          %v597 = vsel %vm592, %v594, %v596
          %598 = vrot.lane.b32.xlu0 %v586, 16
          %v599 = vpop.permute.xlu0 %598
          %600 = vrot.lane.b32.xlu0 %v597, 16
          %v601 = vpop.permute.xlu0 %600
          %v602 = vsel %vm405, %v599, 1e+30
          %v603 = vsel %vm405, %v601, 0.0
          %v604 = vmin.f32 %v586, %v602
          %v605 = vmax.f32 %v586, %v602
          %v606 = vsub.f32 %v604, %v605
          %v607 = vmul.f32 %v606, 100.0
          %v608 = vmul.f32 %v607, 1.442695
          %v609 = vpow.pop %v608
          %vm610 = vcmp.le.f32.partialorder %v586, %v602
          %v611 = vmul.f32 %v603, %v609
          %v612 = vadd.f32 %v597, %v611
          %v613 = vmul.f32 %v597, %v609
          %v614 = vadd.f32 %v613, %v603
          %v615 = vsel %vm610, %v612, %v614
          %616 = vrot.lane.b32.xlu0 %v604, 1
          %v617 = vpop.permute.xlu0 %616
          %618 = vrot.lane.b32.xlu0 %v615, 1
          %v619 = vpop.permute.xlu0 %618
          %v620 = vsel %vm227, %v604, %v617
          %v621 = vsel %vm227, %v615, %v619
          %v622 = vlog2.pop %v621
          %v623 = vmul.f32 %v622, 0.6931472
          %v624 = vmul.f32 %v623, 0.01
          %v625 = vsub.f32 %v620, %v624
          %v626 = vld [vmem:[#allocation2 + $0x3] sm:$0x1]
          %v627 = vadd.f32 %v625, %v626
          %628 = vrot.lane.b32.xlu0 %v627, 1
          %v629 = vpop.permute.xlu0 %628
          %v630 = vsel %vm330, %v629, 1e+30
          %v631 = vmin.f32 %v627, %v630
          %v632 = vmax.f32 %v627, %v630
          %v633 = vsub.f32 %v631, %v632
          %v634 = vmul.f32 %v633, 100.0
          %v635 = vmul.f32 %v634, 1.442695
          %v636 = vpow.pop %v635
          %vm637 = vcmp.le.f32.partialorder %v627, %v630
          %v638 = vmul.f32 %v332, %v636
          %v639 = vadd.f32 %v638, 1.0
          %v640 = vadd.f32 %v636, %v332
          %v641 = vsel %vm637, %v639, %v640
          %642 = vrot.lane.b32.xlu0 %v631, 2
          %v643 = vpop.permute.xlu0 %642
          %644 = vrot.lane.b32.xlu0 %v641, 2
          %v645 = vpop.permute.xlu0 %644
          %v646 = vsel %vm348, %v643, 1e+30
          %v647 = vsel %vm348, %v645, 0.0
          %v648 = vmin.f32 %v631, %v646
          %v649 = vmax.f32 %v631, %v646
          %v650 = vsub.f32 %v648, %v649
          %v651 = vmul.f32 %v650, 100.0
          %v652 = vmul.f32 %v651, 1.442695
          %v653 = vpow.pop %v652
          %vm654 = vcmp.le.f32.partialorder %v631, %v646
          %v655 = vmul.f32 %v647, %v653
          %v656 = vadd.f32 %v641, %v655
          %v657 = vmul.f32 %v641, %v653
          %v658 = vadd.f32 %v657, %v647
          %v659 = vsel %vm654, %v656, %v658
          %660 = vrot.lane.b32.xlu0 %v648, 4
          %v661 = vpop.permute.xlu0 %660
          %662 = vrot.lane.b32.xlu0 %v659, 4
          %v663 = vpop.permute.xlu0 %662
          %v664 = vsel %vm367, %v661, 1e+30
          %v665 = vsel %vm367, %v663, 0.0
          %v666 = vmin.f32 %v648, %v664
          %v667 = vmax.f32 %v648, %v664
          %v668 = vsub.f32 %v666, %v667
          %v669 = vmul.f32 %v668, 100.0
          %v670 = vmul.f32 %v669, 1.442695
          %v671 = vpow.pop %v670
          %vm672 = vcmp.le.f32.partialorder %v648, %v664
          %v673 = vmul.f32 %v665, %v671
          %v674 = vadd.f32 %v659, %v673
          %v675 = vmul.f32 %v659, %v671
          %v676 = vadd.f32 %v675, %v665
          %v677 = vsel %vm672, %v674, %v676
          %678 = vrot.lane.b32.xlu0 %v666, 8
          %v679 = vpop.permute.xlu0 %678
          %680 = vrot.lane.b32.xlu0 %v677, 8
          %v681 = vpop.permute.xlu0 %680
          %v682 = vsel %vm386, %v679, 1e+30
          %v683 = vsel %vm386, %v681, 0.0
          %v684 = vmin.f32 %v666, %v682
          %v685 = vmax.f32 %v666, %v682
          %v686 = vsub.f32 %v684, %v685
          %v687 = vmul.f32 %v686, 100.0
          %v688 = vmul.f32 %v687, 1.442695
          %v689 = vpow.pop %v688
          %vm690 = vcmp.le.f32.partialorder %v666, %v682
          %v691 = vmul.f32 %v683, %v689
          %v692 = vadd.f32 %v677, %v691
          %v693 = vmul.f32 %v677, %v689
          %v694 = vadd.f32 %v693, %v683
          %v695 = vsel %vm690, %v692, %v694
          %696 = vrot.lane.b32.xlu0 %v684, 16
          %v697 = vpop.permute.xlu0 %696
          %698 = vrot.lane.b32.xlu0 %v695, 16
          %v699 = vpop.permute.xlu0 %698
          %v700 = vsel %vm405, %v697, 1e+30
          %v701 = vsel %vm405, %v699, 0.0
          %v702 = vmin.f32 %v684, %v700
          %v703 = vmax.f32 %v684, %v700
          %v704 = vsub.f32 %v702, %v703
          %v705 = vmul.f32 %v704, 100.0
          %v706 = vmul.f32 %v705, 1.442695
          %v707 = vpow.pop %v706
          %vm708 = vcmp.le.f32.partialorder %v684, %v700
          %v709 = vmul.f32 %v701, %v707
          %v710 = vadd.f32 %v695, %v709
          %v711 = vmul.f32 %v695, %v707
          %v712 = vadd.f32 %v711, %v701
          %v713 = vsel %vm708, %v710, %v712
          %714 = vrot.lane.b32.xlu0 %v702, 1
          %v715 = vpop.permute.xlu0 %714
          %716 = vrot.lane.b32.xlu0 %v713, 1
          %v717 = vpop.permute.xlu0 %716
          %v718 = vsel %vm227, %v702, %v715
          %v719 = vsel %vm227, %v713, %v717
          %v720 = vlog2.pop %v719
          %v721 = vmul.f32 %v720, 0.6931472
          %v722 = vmul.f32 %v721, 0.01
          %v723 = vsub.f32 %v718, %v722
          %v724 = vld [vmem:[#allocation2 + $0x4] sm:$0x1]
          %v725 = vadd.f32 %v723, %v724
          %726 = vrot.lane.b32.xlu0 %v725, 1
          %v727 = vpop.permute.xlu0 %726
          %v728 = vsel %vm330, %v727, 1e+30
          %v729 = vmin.f32 %v725, %v728
          %v730 = vmax.f32 %v725, %v728
          %v731 = vsub.f32 %v729, %v730
          %v732 = vmul.f32 %v731, 100.0
          %v733 = vmul.f32 %v732, 1.442695
          %v734 = vpow.pop %v733
          %vm735 = vcmp.le.f32.partialorder %v725, %v728
          %v736 = vmul.f32 %v332, %v734
          %v737 = vadd.f32 %v736, 1.0
          %v738 = vadd.f32 %v734, %v332
          %v739 = vsel %vm735, %v737, %v738
          %740 = vrot.lane.b32.xlu0 %v729, 2
          %v741 = vpop.permute.xlu0 %740
          %742 = vrot.lane.b32.xlu0 %v739, 2
          %v743 = vpop.permute.xlu0 %742
          %v744 = vsel %vm348, %v741, 1e+30
          %v745 = vsel %vm348, %v743, 0.0
          %v746 = vmin.f32 %v729, %v744
          %v747 = vmax.f32 %v729, %v744
          %v748 = vsub.f32 %v746, %v747
          %v749 = vmul.f32 %v748, 100.0
          %v750 = vmul.f32 %v749, 1.442695
          %v751 = vpow.pop %v750
          %vm752 = vcmp.le.f32.partialorder %v729, %v744
          %v753 = vmul.f32 %v745, %v751
          %v754 = vadd.f32 %v739, %v753
          %v755 = vmul.f32 %v739, %v751
          %v756 = vadd.f32 %v755, %v745
          %v757 = vsel %vm752, %v754, %v756
          %758 = vrot.lane.b32.xlu0 %v746, 4
          %v759 = vpop.permute.xlu0 %758
          %760 = vrot.lane.b32.xlu0 %v757, 4
          %v761 = vpop.permute.xlu0 %760
          %v762 = vsel %vm367, %v759, 1e+30
          %v763 = vsel %vm367, %v761, 0.0
          %v764 = vmin.f32 %v746, %v762
          %v765 = vmax.f32 %v746, %v762
          %v766 = vsub.f32 %v764, %v765
          %v767 = vmul.f32 %v766, 100.0
          %v768 = vmul.f32 %v767, 1.442695
          %v769 = vpow.pop %v768
          %vm770 = vcmp.le.f32.partialorder %v746, %v762
          %v771 = vmul.f32 %v763, %v769
          %v772 = vadd.f32 %v757, %v771
          %v773 = vmul.f32 %v757, %v769
          %v774 = vadd.f32 %v773, %v763
          %v775 = vsel %vm770, %v772, %v774
          %776 = vrot.lane.b32.xlu0 %v764, 8
          %v777 = vpop.permute.xlu0 %776
          %778 = vrot.lane.b32.xlu0 %v775, 8
          %v779 = vpop.permute.xlu0 %778
          %v780 = vsel %vm386, %v777, 1e+30
          %v781 = vsel %vm386, %v779, 0.0
          %v782 = vmin.f32 %v764, %v780
          %v783 = vmax.f32 %v764, %v780
          %v784 = vsub.f32 %v782, %v783
          %v785 = vmul.f32 %v784, 100.0
          %v786 = vmul.f32 %v785, 1.442695
          %v787 = vpow.pop %v786
          %vm788 = vcmp.le.f32.partialorder %v764, %v780
          %v789 = vmul.f32 %v781, %v787
          %v790 = vadd.f32 %v775, %v789
          %v791 = vmul.f32 %v775, %v787
          %v792 = vadd.f32 %v791, %v781
          %v793 = vsel %vm788, %v790, %v792
          %794 = vrot.lane.b32.xlu0 %v782, 16
          %v795 = vpop.permute.xlu0 %794
          %796 = vrot.lane.b32.xlu0 %v793, 16
          %v797 = vpop.permute.xlu0 %796
          %v798 = vsel %vm405, %v795, 1e+30
          %v799 = vsel %vm405, %v797, 0.0
          %v800 = vmin.f32 %v782, %v798
          %v801 = vmax.f32 %v782, %v798
          %v802 = vsub.f32 %v800, %v801
          %v803 = vmul.f32 %v802, 100.0
          %v804 = vmul.f32 %v803, 1.442695
          %v805 = vpow.pop %v804
          %vm806 = vcmp.le.f32.partialorder %v782, %v798
          %v807 = vmul.f32 %v799, %v805
          %v808 = vadd.f32 %v793, %v807
          %v809 = vmul.f32 %v793, %v805
          %v810 = vadd.f32 %v809, %v799
          %v811 = vsel %vm806, %v808, %v810
          %812 = vrot.lane.b32.xlu0 %v800, 1
          %v813 = vpop.permute.xlu0 %812
          %814 = vrot.lane.b32.xlu0 %v811, 1
          %v815 = vpop.permute.xlu0 %814
          %v816 = vsel %vm227, %v800, %v813
          %v817 = vsel %vm227, %v811, %v815
          %v818 = vlog2.pop %v817
          %v819 = vmul.f32 %v818, 0.6931472
          %v820 = vmul.f32 %v819, 0.01
          %v821 = vsub.f32 %v816, %v820
          %v822 = vld [vmem:[#allocation2 + $0x5] sm:$0x1]
          %v823 = vadd.f32 %v821, %v822
          %824 = vrot.lane.b32.xlu0 %v823, 1
          %v825 = vpop.permute.xlu0 %824
          %v826 = vsel %vm330, %v825, 1e+30
          %v827 = vmin.f32 %v823, %v826
          %v828 = vmax.f32 %v823, %v826
          %v829 = vsub.f32 %v827, %v828
          %v830 = vmul.f32 %v829, 100.0
          %v831 = vmul.f32 %v830, 1.442695
          %v832 = vpow.pop %v831
          %vm833 = vcmp.le.f32.partialorder %v823, %v826
          %v834 = vmul.f32 %v332, %v832
          %v835 = vadd.f32 %v834, 1.0
          %v836 = vadd.f32 %v832, %v332
          %v837 = vsel %vm833, %v835, %v836
          %838 = vrot.lane.b32.xlu0 %v827, 2
          %v839 = vpop.permute.xlu0 %838
          %840 = vrot.lane.b32.xlu0 %v837, 2
          %v841 = vpop.permute.xlu0 %840
          %v842 = vsel %vm348, %v839, 1e+30
          %v843 = vsel %vm348, %v841, 0.0
          %v844 = vmin.f32 %v827, %v842
          %v845 = vmax.f32 %v827, %v842
          %v846 = vsub.f32 %v844, %v845
          %v847 = vmul.f32 %v846, 100.0
          %v848 = vmul.f32 %v847, 1.442695
          %v849 = vpow.pop %v848
          %vm850 = vcmp.le.f32.partialorder %v827, %v842
          %v851 = vmul.f32 %v843, %v849
          %v852 = vadd.f32 %v837, %v851
          %v853 = vmul.f32 %v837, %v849
          %v854 = vadd.f32 %v853, %v843
          %v855 = vsel %vm850, %v852, %v854
          %856 = vrot.lane.b32.xlu0 %v844, 4
          %v857 = vpop.permute.xlu0 %856
          %858 = vrot.lane.b32.xlu0 %v855, 4
          %v859 = vpop.permute.xlu0 %858
          %v860 = vsel %vm367, %v857, 1e+30
          %v861 = vsel %vm367, %v859, 0.0
          %v862 = vmin.f32 %v844, %v860
          %v863 = vmax.f32 %v844, %v860
          %v864 = vsub.f32 %v862, %v863
          %v865 = vmul.f32 %v864, 100.0
          %v866 = vmul.f32 %v865, 1.442695
          %v867 = vpow.pop %v866
          %vm868 = vcmp.le.f32.partialorder %v844, %v860
          %v869 = vmul.f32 %v861, %v867
          %v870 = vadd.f32 %v855, %v869
          %v871 = vmul.f32 %v855, %v867
          %v872 = vadd.f32 %v871, %v861
          %v873 = vsel %vm868, %v870, %v872
          %874 = vrot.lane.b32.xlu0 %v862, 8
          %v875 = vpop.permute.xlu0 %874
          %876 = vrot.lane.b32.xlu0 %v873, 8
          %v877 = vpop.permute.xlu0 %876
          %v878 = vsel %vm386, %v875, 1e+30
          %v879 = vsel %vm386, %v877, 0.0
          %v880 = vmin.f32 %v862, %v878
          %v881 = vmax.f32 %v862, %v878
          %v882 = vsub.f32 %v880, %v881
          %v883 = vmul.f32 %v882, 100.0
          %v884 = vmul.f32 %v883, 1.442695
          %v885 = vpow.pop %v884
          %vm886 = vcmp.le.f32.partialorder %v862, %v878
          %v887 = vmul.f32 %v879, %v885
          %v888 = vadd.f32 %v873, %v887
          %v889 = vmul.f32 %v873, %v885
          %v890 = vadd.f32 %v889, %v879
          %v891 = vsel %vm886, %v888, %v890
          %892 = vrot.lane.b32.xlu0 %v880, 16
          %v893 = vpop.permute.xlu0 %892
          %894 = vrot.lane.b32.xlu0 %v891, 16
          %v895 = vpop.permute.xlu0 %894
          %v896 = vsel %vm405, %v893, 1e+30
          %v897 = vsel %vm405, %v895, 0.0
          %v898 = vmin.f32 %v880, %v896
          %v899 = vmax.f32 %v880, %v896
          %v900 = vsub.f32 %v898, %v899
          %v901 = vmul.f32 %v900, 100.0
          %v902 = vmul.f32 %v901, 1.442695
          %v903 = vpow.pop %v902
          %vm904 = vcmp.le.f32.partialorder %v880, %v896
          %v905 = vmul.f32 %v897, %v903
          %v906 = vadd.f32 %v891, %v905
          %v907 = vmul.f32 %v891, %v903
          %v908 = vadd.f32 %v907, %v897
          %v909 = vsel %vm904, %v906, %v908
          %910 = vrot.lane.b32.xlu0 %v898, 1
          %v911 = vpop.permute.xlu0 %910
          %912 = vrot.lane.b32.xlu0 %v909, 1
          %v913 = vpop.permute.xlu0 %912
          %v914 = vsel %vm227, %v898, %v911
          %v915 = vsel %vm227, %v909, %v913
          %v916 = vlog2.pop %v915
          %v917 = vmul.f32 %v916, 0.6931472
          %v918 = vmul.f32 %v917, 0.01
          %v919 = vsub.f32 %v914, %v918
          %v920 = vld [vmem:[#allocation2 + $0x6] sm:$0x1]
          %v921 = vadd.f32 %v919, %v920
          %922 = vrot.lane.b32.xlu0 %v921, 1
          %v923 = vpop.permute.xlu0 %922
          %v924 = vsel %vm330, %v923, 1e+30
          %v925 = vmin.f32 %v921, %v924
          %v926 = vmax.f32 %v921, %v924
          %v927 = vsub.f32 %v925, %v926
          %v928 = vmul.f32 %v927, 100.0
          %v929 = vmul.f32 %v928, 1.442695
          %v930 = vpow.pop %v929
          %vm931 = vcmp.le.f32.partialorder %v921, %v924
          %v932 = vmul.f32 %v332, %v930
          %v933 = vadd.f32 %v932, 1.0
          %v934 = vadd.f32 %v930, %v332
          %v935 = vsel %vm931, %v933, %v934
          %936 = vrot.lane.b32.xlu0 %v925, 2
          %v937 = vpop.permute.xlu0 %936
          %938 = vrot.lane.b32.xlu0 %v935, 2
          %v939 = vpop.permute.xlu0 %938
          %v940 = vsel %vm348, %v937, 1e+30
          %v941 = vsel %vm348, %v939, 0.0
          %v942 = vmin.f32 %v925, %v940
          %v943 = vmax.f32 %v925, %v940
          %v944 = vsub.f32 %v942, %v943
          %v945 = vmul.f32 %v944, 100.0
          %v946 = vmul.f32 %v945, 1.442695
          %v947 = vpow.pop %v946
          %vm948 = vcmp.le.f32.partialorder %v925, %v940
          %v949 = vmul.f32 %v941, %v947
          %v950 = vadd.f32 %v935, %v949
          %v951 = vmul.f32 %v935, %v947
          %v952 = vadd.f32 %v951, %v941
          %v953 = vsel %vm948, %v950, %v952
          %954 = vrot.lane.b32.xlu0 %v942, 4
          %v955 = vpop.permute.xlu0 %954
          %956 = vrot.lane.b32.xlu0 %v953, 4
          %v957 = vpop.permute.xlu0 %956
          %v958 = vsel %vm367, %v955, 1e+30
          %v959 = vsel %vm367, %v957, 0.0
          %v960 = vmin.f32 %v942, %v958
          %v961 = vmax.f32 %v942, %v958
          %v962 = vsub.f32 %v960, %v961
          %v963 = vmul.f32 %v962, 100.0
          %v964 = vmul.f32 %v963, 1.442695
          %v965 = vpow.pop %v964
          %vm966 = vcmp.le.f32.partialorder %v942, %v958
          %v967 = vmul.f32 %v959, %v965
          %v968 = vadd.f32 %v953, %v967
          %v969 = vmul.f32 %v953, %v965
          %v970 = vadd.f32 %v969, %v959
          %v971 = vsel %vm966, %v968, %v970
          %972 = vrot.lane.b32.xlu0 %v960, 8
          %v973 = vpop.permute.xlu0 %972
          %974 = vrot.lane.b32.xlu0 %v971, 8
          %v975 = vpop.permute.xlu0 %974
          %v976 = vsel %vm386, %v973, 1e+30
          %v977 = vsel %vm386, %v975, 0.0
          %v978 = vmin.f32 %v960, %v976
          %v979 = vmax.f32 %v960, %v976
          %v980 = vsub.f32 %v978, %v979
          %v981 = vmul.f32 %v980, 100.0
          %v982 = vmul.f32 %v981, 1.442695
          %v983 = vpow.pop %v982
          %vm984 = vcmp.le.f32.partialorder %v960, %v976
          %v985 = vmul.f32 %v977, %v983
          %v986 = vadd.f32 %v971, %v985
          %v987 = vmul.f32 %v971, %v983
          %v988 = vadd.f32 %v987, %v977
          %v989 = vsel %vm984, %v986, %v988
          %990 = vrot.lane.b32.xlu0 %v978, 16
          %v991 = vpop.permute.xlu0 %990
          %992 = vrot.lane.b32.xlu0 %v989, 16
          %v993 = vpop.permute.xlu0 %992
          %v994 = vsel %vm405, %v991, 1e+30
          %v995 = vsel %vm405, %v993, 0.0
          %v996 = vmin.f32 %v978, %v994
          %v997 = vmax.f32 %v978, %v994
          %v998 = vsub.f32 %v996, %v997
          %v999 = vmul.f32 %v998, 100.0
          %v1000 = vmul.f32 %v999, 1.442695
          %v1001 = vpow.pop %v1000
          %vm1002 = vcmp.le.f32.partialorder %v978, %v994
          %v1003 = vmul.f32 %v995, %v1001
          %v1004 = vadd.f32 %v989, %v1003
          %v1005 = vmul.f32 %v989, %v1001
          %v1006 = vadd.f32 %v1005, %v995
          %v1007 = vsel %vm1002, %v1004, %v1006
          %1008 = vrot.lane.b32.xlu0 %v996, 1
          %v1009 = vpop.permute.xlu0 %1008
          %1010 = vrot.lane.b32.xlu0 %v1007, 1
          %v1011 = vpop.permute.xlu0 %1010
          %v1012 = vsel %vm227, %v996, %v1009
          %v1013 = vsel %vm227, %v1007, %v1011
          %v1014 = vlog2.pop %v1013
          %v1015 = vmul.f32 %v1014, 0.6931472
          %v1016 = vmul.f32 %v1015, 0.01
          %v1017 = vsub.f32 %v1012, %v1016
          %v1018 = vld [vmem:[#allocation2 + $0x7] sm:$0x1]
          %v1019 = vadd.f32 %v1017, %v1018
          %1020 = vst [vmem:[#allocation3] sm:$0x1] %v1019
        $region40: #{tpu_custom_call.1} parent=27 // pred_fallthru
          _
        %p1021 = scmp.gt.s32.totalorder %s24, 0
        // Predicated region
        $region41: #{tpu_custom_call.1} parent=27 // pred_check
          %p1022 = pneg %p1021
        $region42: #{tpu_custom_call.1} parent=27 // pred_check_branch
          %1024 = sbr.rel (%p1022) target = $region44
        $region43: #{tpu_custom_call.1} parent=27 // pred_region
          %v1025 = vld [vmem:[#allocation3] sm:$0x1]
          %1026 = vrot.lane.b32.xlu0 %v1025, 1
          %v1027 = vpop.permute.xlu0 %1026
          %1028 = vrot.lane.b32.xlu0 1.0, 1
          %v1029 = vpop.permute.xlu0 %1028
          %vm1030 = vcmp.ge.s32.totalorder %v213, 1
          %v1031 = vsel %vm1030, %v1027, 1e+30
          %v1032 = vsel %vm1030, %v1029, 0.0
          %v1033 = vmin.f32 %v1025, %v1031
          %v1034 = vmax.f32 %v1025, %v1031
          %v1035 = vsub.f32 %v1033, %v1034
          %v1036 = vmul.f32 %v1035, 100.0
          %v1037 = vmul.f32 %v1036, 1.442695
          %v1038 = vpow.pop %v1037
          %vm1039 = vcmp.le.f32.partialorder %v1025, %v1031
          %v1040 = vmul.f32 %v1032, %v1038
          %v1041 = vadd.f32 %v1040, 1.0
          %v1042 = vadd.f32 %v1038, %v1032
          %v1043 = vsel %vm1039, %v1041, %v1042
          %1044 = vrot.lane.b32.xlu0 %v1033, 2
          %v1045 = vpop.permute.xlu0 %1044
          %1046 = vrot.lane.b32.xlu0 %v1043, 2
          %v1047 = vpop.permute.xlu0 %1046
          %vm1048 = vcmp.ge.s32.totalorder %v213, 2
          %v1049 = vsel %vm1048, %v1045, 1e+30
          %v1050 = vsel %vm1048, %v1047, 0.0
          %v1051 = vmin.f32 %v1033, %v1049
          %v1052 = vmax.f32 %v1033, %v1049
          %v1053 = vsub.f32 %v1051, %v1052
          %v1054 = vmul.f32 %v1053, 100.0
          %v1055 = vmul.f32 %v1054, 1.442695
          %v1056 = vpow.pop %v1055
          %vm1057 = vcmp.le.f32.partialorder %v1033, %v1049
          %v1058 = vmul.f32 %v1050, %v1056
          %v1059 = vadd.f32 %v1043, %v1058
          %v1060 = vmul.f32 %v1043, %v1056
          %v1061 = vadd.f32 %v1060, %v1050
          %v1062 = vsel %vm1057, %v1059, %v1061
          %1063 = vrot.lane.b32.xlu0 %v1051, 4
          %v1064 = vpop.permute.xlu0 %1063
          %1065 = vrot.lane.b32.xlu0 %v1062, 4
          %v1066 = vpop.permute.xlu0 %1065
          %vm1067 = vcmp.ge.s32.totalorder %v213, 4
          %v1068 = vsel %vm1067, %v1064, 1e+30
          %v1069 = vsel %vm1067, %v1066, 0.0
          %v1070 = vmin.f32 %v1051, %v1068
          %v1071 = vmax.f32 %v1051, %v1068
          %v1072 = vsub.f32 %v1070, %v1071
          %v1073 = vmul.f32 %v1072, 100.0
          %v1074 = vmul.f32 %v1073, 1.442695
          %v1075 = vpow.pop %v1074
          %vm1076 = vcmp.le.f32.partialorder %v1051, %v1068
          %v1077 = vmul.f32 %v1069, %v1075
          %v1078 = vadd.f32 %v1062, %v1077
          %v1079 = vmul.f32 %v1062, %v1075
          %v1080 = vadd.f32 %v1079, %v1069
          %v1081 = vsel %vm1076, %v1078, %v1080
          %1082 = vrot.lane.b32.xlu0 %v1070, 8
          %v1083 = vpop.permute.xlu0 %1082
          %1084 = vrot.lane.b32.xlu0 %v1081, 8
          %v1085 = vpop.permute.xlu0 %1084
          %vm1086 = vcmp.ge.s32.totalorder %v213, 8
          %v1087 = vsel %vm1086, %v1083, 1e+30
          %v1088 = vsel %vm1086, %v1085, 0.0
          %v1089 = vmin.f32 %v1070, %v1087
          %v1090 = vmax.f32 %v1070, %v1087
          %v1091 = vsub.f32 %v1089, %v1090
          %v1092 = vmul.f32 %v1091, 100.0
          %v1093 = vmul.f32 %v1092, 1.442695
          %v1094 = vpow.pop %v1093
          %vm1095 = vcmp.le.f32.partialorder %v1070, %v1087
          %v1096 = vmul.f32 %v1088, %v1094
          %v1097 = vadd.f32 %v1081, %v1096
          %v1098 = vmul.f32 %v1081, %v1094
          %v1099 = vadd.f32 %v1098, %v1088
          %v1100 = vsel %vm1095, %v1097, %v1099
          %1101 = vrot.lane.b32.xlu0 %v1089, 16
          %v1102 = vpop.permute.xlu0 %1101
          %1103 = vrot.lane.b32.xlu0 %v1100, 16
          %v1104 = vpop.permute.xlu0 %1103
          %vm1105 = vcmp.ge.s32.totalorder %v213, 16
          %v1106 = vsel %vm1105, %v1102, 1e+30
          %v1107 = vsel %vm1105, %v1104, 0.0
          %v1108 = vmin.f32 %v1089, %v1106
          %v1109 = vmax.f32 %v1089, %v1106
          %v1110 = vsub.f32 %v1108, %v1109
          %v1111 = vmul.f32 %v1110, 100.0
          %v1112 = vmul.f32 %v1111, 1.442695
          %v1113 = vpow.pop %v1112
          %vm1114 = vcmp.le.f32.partialorder %v1089, %v1106
          %v1115 = vmul.f32 %v1107, %v1113
          %v1116 = vadd.f32 %v1100, %v1115
          %v1117 = vmul.f32 %v1100, %v1113
          %v1118 = vadd.f32 %v1117, %v1107
          %v1119 = vsel %vm1114, %v1116, %v1118
          %1120 = vrot.lane.b32.xlu0 %v1108, 1
          %v1121 = vpop.permute.xlu0 %1120
          %1122 = vrot.lane.b32.xlu0 %v1119, 1
          %v1123 = vpop.permute.xlu0 %1122
          %v1124 = vsel %vm227, %v1108, %v1121
          %v1125 = vsel %vm227, %v1119, %v1123
          %v1126 = vlog2.pop %v1125
          %v1127 = vmul.f32 %v1126, 0.6931472
          %v1128 = vmul.f32 %v1127, 0.01
          %v1129 = vsub.f32 %v1124, %v1128
          %v1130 = vld [vmem:[#allocation2] sm:$0x1]
          %v1131 = vadd.f32 %v1129, %v1130
          %1132 = vrot.lane.b32.xlu0 %v1131, 1
          %v1133 = vpop.permute.xlu0 %1132
          %v1134 = vsel %vm1030, %v1133, 1e+30
          %v1135 = vmin.f32 %v1131, %v1134
          %v1136 = vmax.f32 %v1131, %v1134
          %v1137 = vsub.f32 %v1135, %v1136
          %v1138 = vmul.f32 %v1137, 100.0
          %v1139 = vmul.f32 %v1138, 1.442695
          %v1140 = vpow.pop %v1139
          %vm1141 = vcmp.le.f32.partialorder %v1131, %v1134
          %v1142 = vmul.f32 %v1032, %v1140
          %v1143 = vadd.f32 %v1142, 1.0
          %v1144 = vadd.f32 %v1140, %v1032
          %v1145 = vsel %vm1141, %v1143, %v1144
          %1146 = vrot.lane.b32.xlu0 %v1135, 2
          %v1147 = vpop.permute.xlu0 %1146
          %1148 = vrot.lane.b32.xlu0 %v1145, 2
          %v1149 = vpop.permute.xlu0 %1148
          %v1150 = vsel %vm1048, %v1147, 1e+30
          %v1151 = vsel %vm1048, %v1149, 0.0
          %v1152 = vmin.f32 %v1135, %v1150
          %v1153 = vmax.f32 %v1135, %v1150
          %v1154 = vsub.f32 %v1152, %v1153
          %v1155 = vmul.f32 %v1154, 100.0
          %v1156 = vmul.f32 %v1155, 1.442695
          %v1157 = vpow.pop %v1156
          %vm1158 = vcmp.le.f32.partialorder %v1135, %v1150
          %v1159 = vmul.f32 %v1151, %v1157
          %v1160 = vadd.f32 %v1145, %v1159
          %v1161 = vmul.f32 %v1145, %v1157
          %v1162 = vadd.f32 %v1161, %v1151
          %v1163 = vsel %vm1158, %v1160, %v1162
          %1164 = vrot.lane.b32.xlu0 %v1152, 4
          %v1165 = vpop.permute.xlu0 %1164
          %1166 = vrot.lane.b32.xlu0 %v1163, 4
          %v1167 = vpop.permute.xlu0 %1166
          %v1168 = vsel %vm1067, %v1165, 1e+30
          %v1169 = vsel %vm1067, %v1167, 0.0
          %v1170 = vmin.f32 %v1152, %v1168
          %v1171 = vmax.f32 %v1152, %v1168
          %v1172 = vsub.f32 %v1170, %v1171
          %v1173 = vmul.f32 %v1172, 100.0
          %v1174 = vmul.f32 %v1173, 1.442695
          %v1175 = vpow.pop %v1174
          %vm1176 = vcmp.le.f32.partialorder %v1152, %v1168
          %v1177 = vmul.f32 %v1169, %v1175
          %v1178 = vadd.f32 %v1163, %v1177
          %v1179 = vmul.f32 %v1163, %v1175
          %v1180 = vadd.f32 %v1179, %v1169
          %v1181 = vsel %vm1176, %v1178, %v1180
          %1182 = vrot.lane.b32.xlu0 %v1170, 8
          %v1183 = vpop.permute.xlu0 %1182
          %1184 = vrot.lane.b32.xlu0 %v1181, 8
          %v1185 = vpop.permute.xlu0 %1184
          %v1186 = vsel %vm1086, %v1183, 1e+30
          %v1187 = vsel %vm1086, %v1185, 0.0
          %v1188 = vmin.f32 %v1170, %v1186
          %v1189 = vmax.f32 %v1170, %v1186
          %v1190 = vsub.f32 %v1188, %v1189
          %v1191 = vmul.f32 %v1190, 100.0
          %v1192 = vmul.f32 %v1191, 1.442695
          %v1193 = vpow.pop %v1192
          %vm1194 = vcmp.le.f32.partialorder %v1170, %v1186
          %v1195 = vmul.f32 %v1187, %v1193
          %v1196 = vadd.f32 %v1181, %v1195
          %v1197 = vmul.f32 %v1181, %v1193
          %v1198 = vadd.f32 %v1197, %v1187
          %v1199 = vsel %vm1194, %v1196, %v1198
          %1200 = vrot.lane.b32.xlu0 %v1188, 16
          %v1201 = vpop.permute.xlu0 %1200
          %1202 = vrot.lane.b32.xlu0 %v1199, 16
          %v1203 = vpop.permute.xlu0 %1202
          %v1204 = vsel %vm1105, %v1201, 1e+30
          %v1205 = vsel %vm1105, %v1203, 0.0
          %v1206 = vmin.f32 %v1188, %v1204
          %v1207 = vmax.f32 %v1188, %v1204
          %v1208 = vsub.f32 %v1206, %v1207
          %v1209 = vmul.f32 %v1208, 100.0
          %v1210 = vmul.f32 %v1209, 1.442695
          %v1211 = vpow.pop %v1210
          %vm1212 = vcmp.le.f32.partialorder %v1188, %v1204
          %v1213 = vmul.f32 %v1205, %v1211
          %v1214 = vadd.f32 %v1199, %v1213
          %v1215 = vmul.f32 %v1199, %v1211
          %v1216 = vadd.f32 %v1215, %v1205
          %v1217 = vsel %vm1212, %v1214, %v1216
          %1218 = vrot.lane.b32.xlu0 %v1206, 1
          %v1219 = vpop.permute.xlu0 %1218
          %1220 = vrot.lane.b32.xlu0 %v1217, 1
          %v1221 = vpop.permute.xlu0 %1220
          %v1222 = vsel %vm227, %v1206, %v1219
          %v1223 = vsel %vm227, %v1217, %v1221
          %v1224 = vlog2.pop %v1223
          %v1225 = vmul.f32 %v1224, 0.6931472
          %v1226 = vmul.f32 %v1225, 0.01
          %v1227 = vsub.f32 %v1222, %v1226
          %v1228 = vld [vmem:[#allocation2 + $0x1] sm:$0x1]
          %v1229 = vadd.f32 %v1227, %v1228
          %1230 = vrot.lane.b32.xlu0 %v1229, 1
          %v1231 = vpop.permute.xlu0 %1230
          %v1232 = vsel %vm1030, %v1231, 1e+30
          %v1233 = vmin.f32 %v1229, %v1232
          %v1234 = vmax.f32 %v1229, %v1232
          %v1235 = vsub.f32 %v1233, %v1234
          %v1236 = vmul.f32 %v1235, 100.0
          %v1237 = vmul.f32 %v1236, 1.442695
          %v1238 = vpow.pop %v1237
          %vm1239 = vcmp.le.f32.partialorder %v1229, %v1232
          %v1240 = vmul.f32 %v1032, %v1238
          %v1241 = vadd.f32 %v1240, 1.0
          %v1242 = vadd.f32 %v1238, %v1032
          %v1243 = vsel %vm1239, %v1241, %v1242
          %1244 = vrot.lane.b32.xlu0 %v1233, 2
          %v1245 = vpop.permute.xlu0 %1244
          %1246 = vrot.lane.b32.xlu0 %v1243, 2
          %v1247 = vpop.permute.xlu0 %1246
          %v1248 = vsel %vm1048, %v1245, 1e+30
          %v1249 = vsel %vm1048, %v1247, 0.0
          %v1250 = vmin.f32 %v1233, %v1248
          %v1251 = vmax.f32 %v1233, %v1248
          %v1252 = vsub.f32 %v1250, %v1251
          %v1253 = vmul.f32 %v1252, 100.0
          %v1254 = vmul.f32 %v1253, 1.442695
          %v1255 = vpow.pop %v1254
          %vm1256 = vcmp.le.f32.partialorder %v1233, %v1248
          %v1257 = vmul.f32 %v1249, %v1255
          %v1258 = vadd.f32 %v1243, %v1257
          %v1259 = vmul.f32 %v1243, %v1255
          %v1260 = vadd.f32 %v1259, %v1249
          %v1261 = vsel %vm1256, %v1258, %v1260
          %1262 = vrot.lane.b32.xlu0 %v1250, 4
          %v1263 = vpop.permute.xlu0 %1262
          %1264 = vrot.lane.b32.xlu0 %v1261, 4
          %v1265 = vpop.permute.xlu0 %1264
          %v1266 = vsel %vm1067, %v1263, 1e+30
          %v1267 = vsel %vm1067, %v1265, 0.0
          %v1268 = vmin.f32 %v1250, %v1266
          %v1269 = vmax.f32 %v1250, %v1266
          %v1270 = vsub.f32 %v1268, %v1269
          %v1271 = vmul.f32 %v1270, 100.0
          %v1272 = vmul.f32 %v1271, 1.442695
          %v1273 = vpow.pop %v1272
          %vm1274 = vcmp.le.f32.partialorder %v1250, %v1266
          %v1275 = vmul.f32 %v1267, %v1273
          %v1276 = vadd.f32 %v1261, %v1275
          %v1277 = vmul.f32 %v1261, %v1273
          %v1278 = vadd.f32 %v1277, %v1267
          %v1279 = vsel %vm1274, %v1276, %v1278
          %1280 = vrot.lane.b32.xlu0 %v1268, 8
          %v1281 = vpop.permute.xlu0 %1280
          %1282 = vrot.lane.b32.xlu0 %v1279, 8
          %v1283 = vpop.permute.xlu0 %1282
          %v1284 = vsel %vm1086, %v1281, 1e+30
          %v1285 = vsel %vm1086, %v1283, 0.0
          %v1286 = vmin.f32 %v1268, %v1284
          %v1287 = vmax.f32 %v1268, %v1284
          %v1288 = vsub.f32 %v1286, %v1287
          %v1289 = vmul.f32 %v1288, 100.0
          %v1290 = vmul.f32 %v1289, 1.442695
          %v1291 = vpow.pop %v1290
          %vm1292 = vcmp.le.f32.partialorder %v1268, %v1284
          %v1293 = vmul.f32 %v1285, %v1291
          %v1294 = vadd.f32 %v1279, %v1293
          %v1295 = vmul.f32 %v1279, %v1291
          %v1296 = vadd.f32 %v1295, %v1285
          %v1297 = vsel %vm1292, %v1294, %v1296
          %1298 = vrot.lane.b32.xlu0 %v1286, 16
          %v1299 = vpop.permute.xlu0 %1298
          %1300 = vrot.lane.b32.xlu0 %v1297, 16
          %v1301 = vpop.permute.xlu0 %1300
          %v1302 = vsel %vm1105, %v1299, 1e+30
          %v1303 = vsel %vm1105, %v1301, 0.0
          %v1304 = vmin.f32 %v1286, %v1302
          %v1305 = vmax.f32 %v1286, %v1302
          %v1306 = vsub.f32 %v1304, %v1305
          %v1307 = vmul.f32 %v1306, 100.0
          %v1308 = vmul.f32 %v1307, 1.442695
          %v1309 = vpow.pop %v1308
          %vm1310 = vcmp.le.f32.partialorder %v1286, %v1302
          %v1311 = vmul.f32 %v1303, %v1309
          %v1312 = vadd.f32 %v1297, %v1311
          %v1313 = vmul.f32 %v1297, %v1309
          %v1314 = vadd.f32 %v1313, %v1303
          %v1315 = vsel %vm1310, %v1312, %v1314
          %1316 = vrot.lane.b32.xlu0 %v1304, 1
          %v1317 = vpop.permute.xlu0 %1316
          %1318 = vrot.lane.b32.xlu0 %v1315, 1
          %v1319 = vpop.permute.xlu0 %1318
          %v1320 = vsel %vm227, %v1304, %v1317
          %v1321 = vsel %vm227, %v1315, %v1319
          %v1322 = vlog2.pop %v1321
          %v1323 = vmul.f32 %v1322, 0.6931472
          %v1324 = vmul.f32 %v1323, 0.01
          %v1325 = vsub.f32 %v1320, %v1324
          %v1326 = vld [vmem:[#allocation2 + $0x2] sm:$0x1]
          %v1327 = vadd.f32 %v1325, %v1326
          %1328 = vrot.lane.b32.xlu0 %v1327, 1
          %v1329 = vpop.permute.xlu0 %1328
          %v1330 = vsel %vm1030, %v1329, 1e+30
          %v1331 = vmin.f32 %v1327, %v1330
          %v1332 = vmax.f32 %v1327, %v1330
          %v1333 = vsub.f32 %v1331, %v1332
          %v1334 = vmul.f32 %v1333, 100.0
          %v1335 = vmul.f32 %v1334, 1.442695
          %v1336 = vpow.pop %v1335
          %vm1337 = vcmp.le.f32.partialorder %v1327, %v1330
          %v1338 = vmul.f32 %v1032, %v1336
          %v1339 = vadd.f32 %v1338, 1.0
          %v1340 = vadd.f32 %v1336, %v1032
          %v1341 = vsel %vm1337, %v1339, %v1340
          %1342 = vrot.lane.b32.xlu0 %v1331, 2
          %v1343 = vpop.permute.xlu0 %1342
          %1344 = vrot.lane.b32.xlu0 %v1341, 2
          %v1345 = vpop.permute.xlu0 %1344
          %v1346 = vsel %vm1048, %v1343, 1e+30
          %v1347 = vsel %vm1048, %v1345, 0.0
          %v1348 = vmin.f32 %v1331, %v1346
          %v1349 = vmax.f32 %v1331, %v1346
          %v1350 = vsub.f32 %v1348, %v1349
          %v1351 = vmul.f32 %v1350, 100.0
          %v1352 = vmul.f32 %v1351, 1.442695
          %v1353 = vpow.pop %v1352
          %vm1354 = vcmp.le.f32.partialorder %v1331, %v1346
          %v1355 = vmul.f32 %v1347, %v1353
          %v1356 = vadd.f32 %v1341, %v1355
          %v1357 = vmul.f32 %v1341, %v1353
          %v1358 = vadd.f32 %v1357, %v1347
          %v1359 = vsel %vm1354, %v1356, %v1358
          %1360 = vrot.lane.b32.xlu0 %v1348, 4
          %v1361 = vpop.permute.xlu0 %1360
          %1362 = vrot.lane.b32.xlu0 %v1359, 4
          %v1363 = vpop.permute.xlu0 %1362
          %v1364 = vsel %vm1067, %v1361, 1e+30
          %v1365 = vsel %vm1067, %v1363, 0.0
          %v1366 = vmin.f32 %v1348, %v1364
          %v1367 = vmax.f32 %v1348, %v1364
          %v1368 = vsub.f32 %v1366, %v1367
          %v1369 = vmul.f32 %v1368, 100.0
          %v1370 = vmul.f32 %v1369, 1.442695
          %v1371 = vpow.pop %v1370
          %vm1372 = vcmp.le.f32.partialorder %v1348, %v1364
          %v1373 = vmul.f32 %v1365, %v1371
          %v1374 = vadd.f32 %v1359, %v1373
          %v1375 = vmul.f32 %v1359, %v1371
          %v1376 = vadd.f32 %v1375, %v1365
          %v1377 = vsel %vm1372, %v1374, %v1376
          %1378 = vrot.lane.b32.xlu0 %v1366, 8
          %v1379 = vpop.permute.xlu0 %1378
          %1380 = vrot.lane.b32.xlu0 %v1377, 8
          %v1381 = vpop.permute.xlu0 %1380
          %v1382 = vsel %vm1086, %v1379, 1e+30
          %v1383 = vsel %vm1086, %v1381, 0.0
          %v1384 = vmin.f32 %v1366, %v1382
          %v1385 = vmax.f32 %v1366, %v1382
          %v1386 = vsub.f32 %v1384, %v1385
          %v1387 = vmul.f32 %v1386, 100.0
          %v1388 = vmul.f32 %v1387, 1.442695
          %v1389 = vpow.pop %v1388
          %vm1390 = vcmp.le.f32.partialorder %v1366, %v1382
          %v1391 = vmul.f32 %v1383, %v1389
          %v1392 = vadd.f32 %v1377, %v1391
          %v1393 = vmul.f32 %v1377, %v1389
          %v1394 = vadd.f32 %v1393, %v1383
          %v1395 = vsel %vm1390, %v1392, %v1394
          %1396 = vrot.lane.b32.xlu0 %v1384, 16
          %v1397 = vpop.permute.xlu0 %1396
          %1398 = vrot.lane.b32.xlu0 %v1395, 16
          %v1399 = vpop.permute.xlu0 %1398
          %v1400 = vsel %vm1105, %v1397, 1e+30
          %v1401 = vsel %vm1105, %v1399, 0.0
          %v1402 = vmin.f32 %v1384, %v1400
          %v1403 = vmax.f32 %v1384, %v1400
          %v1404 = vsub.f32 %v1402, %v1403
          %v1405 = vmul.f32 %v1404, 100.0
          %v1406 = vmul.f32 %v1405, 1.442695
          %v1407 = vpow.pop %v1406
          %vm1408 = vcmp.le.f32.partialorder %v1384, %v1400
          %v1409 = vmul.f32 %v1401, %v1407
          %v1410 = vadd.f32 %v1395, %v1409
          %v1411 = vmul.f32 %v1395, %v1407
          %v1412 = vadd.f32 %v1411, %v1401
          %v1413 = vsel %vm1408, %v1410, %v1412
          %1414 = vrot.lane.b32.xlu0 %v1402, 1
          %v1415 = vpop.permute.xlu0 %1414
          %1416 = vrot.lane.b32.xlu0 %v1413, 1
          %v1417 = vpop.permute.xlu0 %1416
          %v1418 = vsel %vm227, %v1402, %v1415
          %v1419 = vsel %vm227, %v1413, %v1417
          %v1420 = vlog2.pop %v1419
          %v1421 = vmul.f32 %v1420, 0.6931472
          %v1422 = vmul.f32 %v1421, 0.01
          %v1423 = vsub.f32 %v1418, %v1422
          %v1424 = vld [vmem:[#allocation2 + $0x3] sm:$0x1]
          %v1425 = vadd.f32 %v1423, %v1424
          %1426 = vrot.lane.b32.xlu0 %v1425, 1
          %v1427 = vpop.permute.xlu0 %1426
          %v1428 = vsel %vm1030, %v1427, 1e+30
          %v1429 = vmin.f32 %v1425, %v1428
          %v1430 = vmax.f32 %v1425, %v1428
          %v1431 = vsub.f32 %v1429, %v1430
          %v1432 = vmul.f32 %v1431, 100.0
          %v1433 = vmul.f32 %v1432, 1.442695
          %v1434 = vpow.pop %v1433
          %vm1435 = vcmp.le.f32.partialorder %v1425, %v1428
          %v1436 = vmul.f32 %v1032, %v1434
          %v1437 = vadd.f32 %v1436, 1.0
          %v1438 = vadd.f32 %v1434, %v1032
          %v1439 = vsel %vm1435, %v1437, %v1438
          %1440 = vrot.lane.b32.xlu0 %v1429, 2
          %v1441 = vpop.permute.xlu0 %1440
          %1442 = vrot.lane.b32.xlu0 %v1439, 2
          %v1443 = vpop.permute.xlu0 %1442
          %v1444 = vsel %vm1048, %v1441, 1e+30
          %v1445 = vsel %vm1048, %v1443, 0.0
          %v1446 = vmin.f32 %v1429, %v1444
          %v1447 = vmax.f32 %v1429, %v1444
          %v1448 = vsub.f32 %v1446, %v1447
          %v1449 = vmul.f32 %v1448, 100.0
          %v1450 = vmul.f32 %v1449, 1.442695
          %v1451 = vpow.pop %v1450
          %vm1452 = vcmp.le.f32.partialorder %v1429, %v1444
          %v1453 = vmul.f32 %v1445, %v1451
          %v1454 = vadd.f32 %v1439, %v1453
          %v1455 = vmul.f32 %v1439, %v1451
          %v1456 = vadd.f32 %v1455, %v1445
          %v1457 = vsel %vm1452, %v1454, %v1456
          %1458 = vrot.lane.b32.xlu0 %v1446, 4
          %v1459 = vpop.permute.xlu0 %1458
          %1460 = vrot.lane.b32.xlu0 %v1457, 4
          %v1461 = vpop.permute.xlu0 %1460
          %v1462 = vsel %vm1067, %v1459, 1e+30
          %v1463 = vsel %vm1067, %v1461, 0.0
          %v1464 = vmin.f32 %v1446, %v1462
          %v1465 = vmax.f32 %v1446, %v1462
          %v1466 = vsub.f32 %v1464, %v1465
          %v1467 = vmul.f32 %v1466, 100.0
          %v1468 = vmul.f32 %v1467, 1.442695
          %v1469 = vpow.pop %v1468
          %vm1470 = vcmp.le.f32.partialorder %v1446, %v1462
          %v1471 = vmul.f32 %v1463, %v1469
          %v1472 = vadd.f32 %v1457, %v1471
          %v1473 = vmul.f32 %v1457, %v1469
          %v1474 = vadd.f32 %v1473, %v1463
          %v1475 = vsel %vm1470, %v1472, %v1474
          %1476 = vrot.lane.b32.xlu0 %v1464, 8
          %v1477 = vpop.permute.xlu0 %1476
          %1478 = vrot.lane.b32.xlu0 %v1475, 8
          %v1479 = vpop.permute.xlu0 %1478
          %v1480 = vsel %vm1086, %v1477, 1e+30
          %v1481 = vsel %vm1086, %v1479, 0.0
          %v1482 = vmin.f32 %v1464, %v1480
          %v1483 = vmax.f32 %v1464, %v1480
          %v1484 = vsub.f32 %v1482, %v1483
          %v1485 = vmul.f32 %v1484, 100.0
          %v1486 = vmul.f32 %v1485, 1.442695
          %v1487 = vpow.pop %v1486
          %vm1488 = vcmp.le.f32.partialorder %v1464, %v1480
          %v1489 = vmul.f32 %v1481, %v1487
          %v1490 = vadd.f32 %v1475, %v1489
          %v1491 = vmul.f32 %v1475, %v1487
          %v1492 = vadd.f32 %v1491, %v1481
          %v1493 = vsel %vm1488, %v1490, %v1492
          %1494 = vrot.lane.b32.xlu0 %v1482, 16
          %v1495 = vpop.permute.xlu0 %1494
          %1496 = vrot.lane.b32.xlu0 %v1493, 16
          %v1497 = vpop.permute.xlu0 %1496
          %v1498 = vsel %vm1105, %v1495, 1e+30
          %v1499 = vsel %vm1105, %v1497, 0.0
          %v1500 = vmin.f32 %v1482, %v1498
          %v1501 = vmax.f32 %v1482, %v1498
          %v1502 = vsub.f32 %v1500, %v1501
          %v1503 = vmul.f32 %v1502, 100.0
          %v1504 = vmul.f32 %v1503, 1.442695
          %v1505 = vpow.pop %v1504
          %vm1506 = vcmp.le.f32.partialorder %v1482, %v1498
          %v1507 = vmul.f32 %v1499, %v1505
          %v1508 = vadd.f32 %v1493, %v1507
          %v1509 = vmul.f32 %v1493, %v1505
          %v1510 = vadd.f32 %v1509, %v1499
          %v1511 = vsel %vm1506, %v1508, %v1510
          %1512 = vrot.lane.b32.xlu0 %v1500, 1
          %v1513 = vpop.permute.xlu0 %1512
          %1514 = vrot.lane.b32.xlu0 %v1511, 1
          %v1515 = vpop.permute.xlu0 %1514
          %v1516 = vsel %vm227, %v1500, %v1513
          %v1517 = vsel %vm227, %v1511, %v1515
          %v1518 = vlog2.pop %v1517
          %v1519 = vmul.f32 %v1518, 0.6931472
          %v1520 = vmul.f32 %v1519, 0.01
          %v1521 = vsub.f32 %v1516, %v1520
          %v1522 = vld [vmem:[#allocation2 + $0x4] sm:$0x1]
          %v1523 = vadd.f32 %v1521, %v1522
          %1524 = vrot.lane.b32.xlu0 %v1523, 1
          %v1525 = vpop.permute.xlu0 %1524
          %v1526 = vsel %vm1030, %v1525, 1e+30
          %v1527 = vmin.f32 %v1523, %v1526
          %v1528 = vmax.f32 %v1523, %v1526
          %v1529 = vsub.f32 %v1527, %v1528
          %v1530 = vmul.f32 %v1529, 100.0
          %v1531 = vmul.f32 %v1530, 1.442695
          %v1532 = vpow.pop %v1531
          %vm1533 = vcmp.le.f32.partialorder %v1523, %v1526
          %v1534 = vmul.f32 %v1032, %v1532
          %v1535 = vadd.f32 %v1534, 1.0
          %v1536 = vadd.f32 %v1532, %v1032
          %v1537 = vsel %vm1533, %v1535, %v1536
          %1538 = vrot.lane.b32.xlu0 %v1527, 2
          %v1539 = vpop.permute.xlu0 %1538
          %1540 = vrot.lane.b32.xlu0 %v1537, 2
          %v1541 = vpop.permute.xlu0 %1540
          %v1542 = vsel %vm1048, %v1539, 1e+30
          %v1543 = vsel %vm1048, %v1541, 0.0
          %v1544 = vmin.f32 %v1527, %v1542
          %v1545 = vmax.f32 %v1527, %v1542
          %v1546 = vsub.f32 %v1544, %v1545
          %v1547 = vmul.f32 %v1546, 100.0
          %v1548 = vmul.f32 %v1547, 1.442695
          %v1549 = vpow.pop %v1548
          %vm1550 = vcmp.le.f32.partialorder %v1527, %v1542
          %v1551 = vmul.f32 %v1543, %v1549
          %v1552 = vadd.f32 %v1537, %v1551
          %v1553 = vmul.f32 %v1537, %v1549
          %v1554 = vadd.f32 %v1553, %v1543
          %v1555 = vsel %vm1550, %v1552, %v1554
          %1556 = vrot.lane.b32.xlu0 %v1544, 4
          %v1557 = vpop.permute.xlu0 %1556
          %1558 = vrot.lane.b32.xlu0 %v1555, 4
          %v1559 = vpop.permute.xlu0 %1558
          %v1560 = vsel %vm1067, %v1557, 1e+30
          %v1561 = vsel %vm1067, %v1559, 0.0
          %v1562 = vmin.f32 %v1544, %v1560
          %v1563 = vmax.f32 %v1544, %v1560
          %v1564 = vsub.f32 %v1562, %v1563
          %v1565 = vmul.f32 %v1564, 100.0
          %v1566 = vmul.f32 %v1565, 1.442695
          %v1567 = vpow.pop %v1566
          %vm1568 = vcmp.le.f32.partialorder %v1544, %v1560
          %v1569 = vmul.f32 %v1561, %v1567
          %v1570 = vadd.f32 %v1555, %v1569
          %v1571 = vmul.f32 %v1555, %v1567
          %v1572 = vadd.f32 %v1571, %v1561
          %v1573 = vsel %vm1568, %v1570, %v1572
          %1574 = vrot.lane.b32.xlu0 %v1562, 8
          %v1575 = vpop.permute.xlu0 %1574
          %1576 = vrot.lane.b32.xlu0 %v1573, 8
          %v1577 = vpop.permute.xlu0 %1576
          %v1578 = vsel %vm1086, %v1575, 1e+30
          %v1579 = vsel %vm1086, %v1577, 0.0
          %v1580 = vmin.f32 %v1562, %v1578
          %v1581 = vmax.f32 %v1562, %v1578
          %v1582 = vsub.f32 %v1580, %v1581
          %v1583 = vmul.f32 %v1582, 100.0
          %v1584 = vmul.f32 %v1583, 1.442695
          %v1585 = vpow.pop %v1584
          %vm1586 = vcmp.le.f32.partialorder %v1562, %v1578
          %v1587 = vmul.f32 %v1579, %v1585
          %v1588 = vadd.f32 %v1573, %v1587
          %v1589 = vmul.f32 %v1573, %v1585
          %v1590 = vadd.f32 %v1589, %v1579
          %v1591 = vsel %vm1586, %v1588, %v1590
          %1592 = vrot.lane.b32.xlu0 %v1580, 16
          %v1593 = vpop.permute.xlu0 %1592
          %1594 = vrot.lane.b32.xlu0 %v1591, 16
          %v1595 = vpop.permute.xlu0 %1594
          %v1596 = vsel %vm1105, %v1593, 1e+30
          %v1597 = vsel %vm1105, %v1595, 0.0
          %v1598 = vmin.f32 %v1580, %v1596
          %v1599 = vmax.f32 %v1580, %v1596
          %v1600 = vsub.f32 %v1598, %v1599
          %v1601 = vmul.f32 %v1600, 100.0
          %v1602 = vmul.f32 %v1601, 1.442695
          %v1603 = vpow.pop %v1602
          %vm1604 = vcmp.le.f32.partialorder %v1580, %v1596
          %v1605 = vmul.f32 %v1597, %v1603
          %v1606 = vadd.f32 %v1591, %v1605
          %v1607 = vmul.f32 %v1591, %v1603
          %v1608 = vadd.f32 %v1607, %v1597
          %v1609 = vsel %vm1604, %v1606, %v1608
          %1610 = vrot.lane.b32.xlu0 %v1598, 1
          %v1611 = vpop.permute.xlu0 %1610
          %1612 = vrot.lane.b32.xlu0 %v1609, 1
          %v1613 = vpop.permute.xlu0 %1612
          %v1614 = vsel %vm227, %v1598, %v1611
          %v1615 = vsel %vm227, %v1609, %v1613
          %v1616 = vlog2.pop %v1615
          %v1617 = vmul.f32 %v1616, 0.6931472
          %v1618 = vmul.f32 %v1617, 0.01
          %v1619 = vsub.f32 %v1614, %v1618
          %v1620 = vld [vmem:[#allocation2 + $0x5] sm:$0x1]
          %v1621 = vadd.f32 %v1619, %v1620
          %1622 = vrot.lane.b32.xlu0 %v1621, 1
          %v1623 = vpop.permute.xlu0 %1622
          %v1624 = vsel %vm1030, %v1623, 1e+30
          %v1625 = vmin.f32 %v1621, %v1624
          %v1626 = vmax.f32 %v1621, %v1624
          %v1627 = vsub.f32 %v1625, %v1626
          %v1628 = vmul.f32 %v1627, 100.0
          %v1629 = vmul.f32 %v1628, 1.442695
          %v1630 = vpow.pop %v1629
          %vm1631 = vcmp.le.f32.partialorder %v1621, %v1624
          %v1632 = vmul.f32 %v1032, %v1630
          %v1633 = vadd.f32 %v1632, 1.0
          %v1634 = vadd.f32 %v1630, %v1032
          %v1635 = vsel %vm1631, %v1633, %v1634
          %1636 = vrot.lane.b32.xlu0 %v1625, 2
          %v1637 = vpop.permute.xlu0 %1636
          %1638 = vrot.lane.b32.xlu0 %v1635, 2
          %v1639 = vpop.permute.xlu0 %1638
          %v1640 = vsel %vm1048, %v1637, 1e+30
          %v1641 = vsel %vm1048, %v1639, 0.0
          %v1642 = vmin.f32 %v1625, %v1640
          %v1643 = vmax.f32 %v1625, %v1640
          %v1644 = vsub.f32 %v1642, %v1643
          %v1645 = vmul.f32 %v1644, 100.0
          %v1646 = vmul.f32 %v1645, 1.442695
          %v1647 = vpow.pop %v1646
          %vm1648 = vcmp.le.f32.partialorder %v1625, %v1640
          %v1649 = vmul.f32 %v1641, %v1647
          %v1650 = vadd.f32 %v1635, %v1649
          %v1651 = vmul.f32 %v1635, %v1647
          %v1652 = vadd.f32 %v1651, %v1641
          %v1653 = vsel %vm1648, %v1650, %v1652
          %1654 = vrot.lane.b32.xlu0 %v1642, 4
          %v1655 = vpop.permute.xlu0 %1654
          %1656 = vrot.lane.b32.xlu0 %v1653, 4
          %v1657 = vpop.permute.xlu0 %1656
          %v1658 = vsel %vm1067, %v1655, 1e+30
          %v1659 = vsel %vm1067, %v1657, 0.0
          %v1660 = vmin.f32 %v1642, %v1658
          %v1661 = vmax.f32 %v1642, %v1658
          %v1662 = vsub.f32 %v1660, %v1661
          %v1663 = vmul.f32 %v1662, 100.0
          %v1664 = vmul.f32 %v1663, 1.442695
          %v1665 = vpow.pop %v1664
          %vm1666 = vcmp.le.f32.partialorder %v1642, %v1658
          %v1667 = vmul.f32 %v1659, %v1665
          %v1668 = vadd.f32 %v1653, %v1667
          %v1669 = vmul.f32 %v1653, %v1665
          %v1670 = vadd.f32 %v1669, %v1659
          %v1671 = vsel %vm1666, %v1668, %v1670
          %1672 = vrot.lane.b32.xlu0 %v1660, 8
          %v1673 = vpop.permute.xlu0 %1672
          %1674 = vrot.lane.b32.xlu0 %v1671, 8
          %v1675 = vpop.permute.xlu0 %1674
          %v1676 = vsel %vm1086, %v1673, 1e+30
          %v1677 = vsel %vm1086, %v1675, 0.0
          %v1678 = vmin.f32 %v1660, %v1676
          %v1679 = vmax.f32 %v1660, %v1676
          %v1680 = vsub.f32 %v1678, %v1679
          %v1681 = vmul.f32 %v1680, 100.0
          %v1682 = vmul.f32 %v1681, 1.442695
          %v1683 = vpow.pop %v1682
          %vm1684 = vcmp.le.f32.partialorder %v1660, %v1676
          %v1685 = vmul.f32 %v1677, %v1683
          %v1686 = vadd.f32 %v1671, %v1685
          %v1687 = vmul.f32 %v1671, %v1683
          %v1688 = vadd.f32 %v1687, %v1677
          %v1689 = vsel %vm1684, %v1686, %v1688
          %1690 = vrot.lane.b32.xlu0 %v1678, 16
          %v1691 = vpop.permute.xlu0 %1690
          %1692 = vrot.lane.b32.xlu0 %v1689, 16
          %v1693 = vpop.permute.xlu0 %1692
          %v1694 = vsel %vm1105, %v1691, 1e+30
          %v1695 = vsel %vm1105, %v1693, 0.0
          %v1696 = vmin.f32 %v1678, %v1694
          %v1697 = vmax.f32 %v1678, %v1694
          %v1698 = vsub.f32 %v1696, %v1697
          %v1699 = vmul.f32 %v1698, 100.0
          %v1700 = vmul.f32 %v1699, 1.442695
          %v1701 = vpow.pop %v1700
          %vm1702 = vcmp.le.f32.partialorder %v1678, %v1694
          %v1703 = vmul.f32 %v1695, %v1701
          %v1704 = vadd.f32 %v1689, %v1703
          %v1705 = vmul.f32 %v1689, %v1701
          %v1706 = vadd.f32 %v1705, %v1695
          %v1707 = vsel %vm1702, %v1704, %v1706
          %1708 = vrot.lane.b32.xlu0 %v1696, 1
          %v1709 = vpop.permute.xlu0 %1708
          %1710 = vrot.lane.b32.xlu0 %v1707, 1
          %v1711 = vpop.permute.xlu0 %1710
          %v1712 = vsel %vm227, %v1696, %v1709
          %v1713 = vsel %vm227, %v1707, %v1711
          %v1714 = vlog2.pop %v1713
          %v1715 = vmul.f32 %v1714, 0.6931472
          %v1716 = vmul.f32 %v1715, 0.01
          %v1717 = vsub.f32 %v1712, %v1716
          %v1718 = vld [vmem:[#allocation2 + $0x6] sm:$0x1]
          %v1719 = vadd.f32 %v1717, %v1718
          %1720 = vrot.lane.b32.xlu0 %v1719, 1
          %v1721 = vpop.permute.xlu0 %1720
          %v1722 = vsel %vm1030, %v1721, 1e+30
          %v1723 = vmin.f32 %v1719, %v1722
          %v1724 = vmax.f32 %v1719, %v1722
          %v1725 = vsub.f32 %v1723, %v1724
          %v1726 = vmul.f32 %v1725, 100.0
          %v1727 = vmul.f32 %v1726, 1.442695
          %v1728 = vpow.pop %v1727
          %vm1729 = vcmp.le.f32.partialorder %v1719, %v1722
          %v1730 = vmul.f32 %v1032, %v1728
          %v1731 = vadd.f32 %v1730, 1.0
          %v1732 = vadd.f32 %v1728, %v1032
          %v1733 = vsel %vm1729, %v1731, %v1732
          %1734 = vrot.lane.b32.xlu0 %v1723, 2
          %v1735 = vpop.permute.xlu0 %1734
          %1736 = vrot.lane.b32.xlu0 %v1733, 2
          %v1737 = vpop.permute.xlu0 %1736
          %v1738 = vsel %vm1048, %v1735, 1e+30
          %v1739 = vsel %vm1048, %v1737, 0.0
          %v1740 = vmin.f32 %v1723, %v1738
          %v1741 = vmax.f32 %v1723, %v1738
          %v1742 = vsub.f32 %v1740, %v1741
          %v1743 = vmul.f32 %v1742, 100.0
          %v1744 = vmul.f32 %v1743, 1.442695
          %v1745 = vpow.pop %v1744
          %vm1746 = vcmp.le.f32.partialorder %v1723, %v1738
          %v1747 = vmul.f32 %v1739, %v1745
          %v1748 = vadd.f32 %v1733, %v1747
          %v1749 = vmul.f32 %v1733, %v1745
          %v1750 = vadd.f32 %v1749, %v1739
          %v1751 = vsel %vm1746, %v1748, %v1750
          %1752 = vrot.lane.b32.xlu0 %v1740, 4
          %v1753 = vpop.permute.xlu0 %1752
          %1754 = vrot.lane.b32.xlu0 %v1751, 4
          %v1755 = vpop.permute.xlu0 %1754
          %v1756 = vsel %vm1067, %v1753, 1e+30
          %v1757 = vsel %vm1067, %v1755, 0.0
          %v1758 = vmin.f32 %v1740, %v1756
          %v1759 = vmax.f32 %v1740, %v1756
          %v1760 = vsub.f32 %v1758, %v1759
          %v1761 = vmul.f32 %v1760, 100.0
          %v1762 = vmul.f32 %v1761, 1.442695
          %v1763 = vpow.pop %v1762
          %vm1764 = vcmp.le.f32.partialorder %v1740, %v1756
          %v1765 = vmul.f32 %v1757, %v1763
          %v1766 = vadd.f32 %v1751, %v1765
          %v1767 = vmul.f32 %v1751, %v1763
          %v1768 = vadd.f32 %v1767, %v1757
          %v1769 = vsel %vm1764, %v1766, %v1768
          %1770 = vrot.lane.b32.xlu0 %v1758, 8
          %v1771 = vpop.permute.xlu0 %1770
          %1772 = vrot.lane.b32.xlu0 %v1769, 8
          %v1773 = vpop.permute.xlu0 %1772
          %v1774 = vsel %vm1086, %v1771, 1e+30
          %v1775 = vsel %vm1086, %v1773, 0.0
          %v1776 = vmin.f32 %v1758, %v1774
          %v1777 = vmax.f32 %v1758, %v1774
          %v1778 = vsub.f32 %v1776, %v1777
          %v1779 = vmul.f32 %v1778, 100.0
          %v1780 = vmul.f32 %v1779, 1.442695
          %v1781 = vpow.pop %v1780
          %vm1782 = vcmp.le.f32.partialorder %v1758, %v1774
          %v1783 = vmul.f32 %v1775, %v1781
          %v1784 = vadd.f32 %v1769, %v1783
          %v1785 = vmul.f32 %v1769, %v1781
          %v1786 = vadd.f32 %v1785, %v1775
          %v1787 = vsel %vm1782, %v1784, %v1786
          %1788 = vrot.lane.b32.xlu0 %v1776, 16
          %v1789 = vpop.permute.xlu0 %1788
          %1790 = vrot.lane.b32.xlu0 %v1787, 16
          %v1791 = vpop.permute.xlu0 %1790
          %v1792 = vsel %vm1105, %v1789, 1e+30
          %v1793 = vsel %vm1105, %v1791, 0.0
          %v1794 = vmin.f32 %v1776, %v1792
          %v1795 = vmax.f32 %v1776, %v1792
          %v1796 = vsub.f32 %v1794, %v1795
          %v1797 = vmul.f32 %v1796, 100.0
          %v1798 = vmul.f32 %v1797, 1.442695
          %v1799 = vpow.pop %v1798
          %vm1800 = vcmp.le.f32.partialorder %v1776, %v1792
          %v1801 = vmul.f32 %v1793, %v1799
          %v1802 = vadd.f32 %v1787, %v1801
          %v1803 = vmul.f32 %v1787, %v1799
          %v1804 = vadd.f32 %v1803, %v1793
          %v1805 = vsel %vm1800, %v1802, %v1804
          %1806 = vrot.lane.b32.xlu0 %v1794, 1
          %v1807 = vpop.permute.xlu0 %1806
          %1808 = vrot.lane.b32.xlu0 %v1805, 1
          %v1809 = vpop.permute.xlu0 %1808
          %v1810 = vsel %vm227, %v1794, %v1807
          %v1811 = vsel %vm227, %v1805, %v1809
          %v1812 = vlog2.pop %v1811
          %v1813 = vmul.f32 %v1812, 0.6931472
          %v1814 = vmul.f32 %v1813, 0.01
          %v1815 = vsub.f32 %v1810, %v1814
          %v1816 = vld [vmem:[#allocation2 + $0x7] sm:$0x1]
          %v1817 = vadd.f32 %v1815, %v1816
          %1818 = vst [vmem:[#allocation3] sm:$0x1] %v1817
        $region44: #{tpu_custom_call.1} parent=27 // pred_fallthru
          _
        // Predicated region
        $region45: #{tpu_custom_call.1} parent=27 // pred_check
          %p1819 = pneg %p321
        $region46: #{tpu_custom_call.1} parent=27 // pred_check_branch
          %1821 = sbr.rel (%p1819) target = $region48
        $region47: #{tpu_custom_call.1} parent=27 // pred_region
          %v1822 = vld [vmem:[#allocation3] sm:$0x1]
          %vm1823 = vcmask 1040384
          %v1824 = vsel %vm1823, %v1822, inf
          %1825 = vmin.xlane.f32.xlu0 %v1824
          %v1826 = vpop.xlane.xlu0 %1825
          %v1827 = vsub.f32 %v1826, %v1822
          %v1828 = vmul.f32 %v1827, 100.0
          %v1829 = vmul.f32 %v1828, 1.442695
          %v1830 = vpow.pop %v1829
          %v1831 = vsel %vm1823, %v1830, 0.0
          %1832 = vadd.xlane.f32.xlu0 %v1831
          %v1833 = vpop.xlane.xlu0 %1832
          %v1834 = vlog2.pop %v1833
          %v1835 = vmul.f32 %v1834, 0.6931472
          %v1836 = vmul.f32 %v1835, 0.01
          %v1837 = vsub.f32 %v1826, %v1836
          %v1838 = vmul.f32 %v1837, 0.125
          %vm1839 = vcmask 0
          %1840 = vst.msk [vmem:[%s211] sm:$0x1] %vm1839, %v1838
        $region48: #{tpu_custom_call.1} parent=27 // pred_fallthru
          _
        %p1841 = scmp.lt.s32.totalorder %s23, 1
        %s1842 = scalar_select %p1841, %s23, 1
        %s1843 = scalar_lea.vmem %s2, %s1842
        // Predicated region
        $region49: #{tpu_custom_call.1} parent=27 // pred_check
          %p1844 = pneg %p103
        $region50: #{tpu_custom_call.1} parent=27 // pred_check_branch
          %1846 = sbr.rel (%p1844) target = $region52
        $region51: #{tpu_custom_call.1} parent=27 // pred_region
          _
        $region52: #{tpu_custom_call.1} parent=27 // pred_fallthru
          _
      $region28: #{tpu_custom_call.1} parent=5 // pred_fallthru
        _
      %p1847 = scmp.le.s32.totalorder 2, %s14
      // Predicated region
      $region53: #{tpu_custom_call.1} parent=5 // pred_check
        %p1848 = pneg %p1847
      $region54: #{tpu_custom_call.1} parent=5 // pred_check_branch
        %1850 = sbr.rel (%p1848) target = $region56
      $region55: #{tpu_custom_call.1} parent=5 // pred_region
        %s1851 = ssub.s32 %s14, 2
        // Predicated region
        $region57: #{tpu_custom_call.1} parent=55 // pred_check
          %p1852 = pneg %p109
        $region58: #{tpu_custom_call.1} parent=55 // pred_check_branch
          %1854 = sbr.rel (%p1852) target = $region60
        $region59: #{tpu_custom_call.1} parent=55 // pred_region
          %p1855 = scmp.lt.s32.totalorder %s25, 1
          %s1856 = scalar_select %p1855, %s25, 1
          %s1857 = scalar_lea.vmem %s2, %s1856
        $region60: #{tpu_custom_call.1} parent=55 // pred_fallthru
          _
      $region56: #{tpu_custom_call.1} parent=5 // pred_fallthru
        _
    $region6: #{tpu_custom_call.1} parent=1 // loop_footer
      %s18 = sadd.s32 1, %s14
    $region7: #{tpu_custom_call.1} parent=1 // loop_footer_branch
      %13 = sbr.rel target = $region3
    $region8: #{tpu_custom_call.1} parent=1 // loop_exit
      _
    %1858 = vsyncpa [#allocation5], 1
    %s1859 = scalar_lea.sflag [#allocation5], 1
    %1860 = vsyncpa %s1859, 1
    %1861 = vsyncpa [#allocation7], 1
    %s1862 = scalar_lea.sflag [#allocation7], 1
    %1863 = vsyncpa %s1862, 1

</llo_original>
